<compile_context>
chip_gen: v5e
topology: v5e:2x2
jax: 0.10.0
libtpu: 0.0.40
codegen_flags: <defaults>
</compile_context>

<pallas_src>
import functools

import jax
import jax.numpy as jnp
from jax import lax
from jax.experimental import pallas as pl
from jax.experimental.pallas import tpu as pltpu


def _round_up(n, m):
    return ((n + m - 1) // m) * m


def gru_layer_kernel(x_ref, wih_ref, whh_ref, bi_ref, bhn_ref,
                     out_ref, gates_scr, *, seq_len, batch):
    """One GRU layer: hoisted input GEMM + in-kernel serial time loop.

    x_ref    : (T*Bp, Din)  bf16   layer input, time-major rows (t*Bp + b)
    wih_ref  : (Din, 3Hp)   bf16   input->hidden weights, gates r|z|n concat
    whh_ref  : (Hp, 3Hp)    bf16   hidden->hidden weights, gates r|z|n concat
    bi_ref   : (1, 3Hp)     f32    b_ih with b_hh_r / b_hh_z folded in
    bhn_ref  : (1, Hp)      f32    b_hh_n (stays inside the r* term)
    out_ref  : (T*Bp, Hp)   f32    hidden state for every timestep
    gates_scr: (T*Bp, 3Hp)  f32    VMEM scratch for the hoisted input gates
    """
    hp = whh_ref.shape[0]

    # --- hoisted input projection: one big MXU GEMM over all timesteps ---
    gates_scr[...] = (
        jnp.dot(x_ref[...], wih_ref[...], preferred_element_type=jnp.float32)
        + bi_ref[...])

    whh = whh_ref[...]          # (Hp, 3Hp) bf16, resident for the whole loop
    bhn = bhn_ref[...]          # (1, Hp) f32

    def step(t, h):
        row = pl.multiple_of(t * batch, batch)
        gi = gates_scr[pl.ds(row, batch), :]                       # (Bp, 3Hp)
        gh = jnp.dot(h.astype(jnp.bfloat16), whh,
                     preferred_element_type=jnp.float32)           # (Bp, 3Hp)
        r = jax.nn.sigmoid(gi[:, :hp] + gh[:, :hp])
        z = jax.nn.sigmoid(gi[:, hp:2 * hp] + gh[:, hp:2 * hp])
        n = jnp.tanh(gi[:, 2 * hp:] + r * (gh[:, 2 * hp:] + bhn))
        h_new = (1.0 - z) * n + z * h
        out_ref[pl.ds(row, batch), :] = h_new
        return h_new

    h0 = jnp.zeros((batch, hp), jnp.float32)
    lax.fori_loop(0, seq_len, step, h0, unroll=True)


def gru_layer(x2d, w_ih, w_hh, b_i, b_hn, *, seq_len, batch_p):
    """Run one GRU layer. x2d: (T*Bp, Din) bf16. Returns (T*Bp, Hp) f32."""
    tb, din = x2d.shape
    hp = w_hh.shape[0]
    kernel = functools.partial(gru_layer_kernel, seq_len=seq_len, batch=batch_p)
    return pl.pallas_call(
        kernel,
        out_shape=jax.ShapeDtypeStruct((tb, hp), jnp.float32),
        grid=(1,),
        in_specs=[
            pl.BlockSpec((tb, din), lambda i: (0, 0)),
            pl.BlockSpec((din, 3 * hp), lambda i: (0, 0)),
            pl.BlockSpec((hp, 3 * hp), lambda i: (0, 0)),
            pl.BlockSpec((1, 3 * hp), lambda i: (0, 0)),
            pl.BlockSpec((1, hp), lambda i: (0, 0)),
        ],
        out_specs=pl.BlockSpec((tb, hp), lambda i: (0, 0)),
        scratch_shapes=[pltpu.VMEM((tb, 3 * hp), jnp.float32)],
        compiler_params=pltpu.CompilerParams(
            dimension_semantics=("arbitrary",)),  # recurrence is serial
    )(x2d, w_ih, w_hh, b_i, b_hn)


def init_params(key, vocab_size, embed_size, hidden_size, num_layers):
    """Synthetic parameters mimicking PyTorch init, stored in kernel layout:
    gate-concatenated (r|z|n), hidden padded to a multiple of 128 lanes,
    weights in bf16, biases (with r/z hidden-biases folded) in f32."""
    lane = 128
    hp = _round_up(hidden_size, lane)
    keys = jax.random.split(key, 1 + 4 * num_layers)
    params = {"hidden_size": hidden_size, "hidden_pad": hp}
    # nn.Embedding default init: N(0, 1)
    params["embedding"] = jax.random.normal(
        keys[0], (vocab_size, embed_size), dtype=jnp.float32)

    k = 1.0 / jnp.sqrt(hidden_size)
    h = hidden_size
    layers = []
    for layer in range(num_layers):
        din = embed_size if layer == 0 else hidden_size
        din_p = embed_size if layer == 0 else hp
        kw = keys[1 + 4 * layer: 1 + 4 * (layer + 1)]
        w_ih = jax.random.uniform(kw[0], (3, din, h), minval=-k, maxval=k,
                                  dtype=jnp.float32)     # gate order (r, z, n)
        w_hh = jax.random.uniform(kw[1], (3, h, h), minval=-k, maxval=k,
                                  dtype=jnp.float32)
        b_ih = jax.random.uniform(kw[2], (3, h), minval=-k, maxval=k,
                                  dtype=jnp.float32)
        b_hh = jax.random.uniform(kw[3], (3, h), minval=-k, maxval=k,
                                  dtype=jnp.float32)

        wih_cat = jnp.zeros((din_p, 3 * hp), jnp.float32)
        whh_cat = jnp.zeros((hp, 3 * hp), jnp.float32)
        for g in range(3):
            wih_cat = wih_cat.at[:din, g * hp:g * hp + h].set(w_ih[g])
            whh_cat = whh_cat.at[:h, g * hp:g * hp + h].set(w_hh[g])
        b_i = jnp.zeros((1, 3 * hp), jnp.float32)
        b_i = b_i.at[0, 0:h].set(b_ih[0] + b_hh[0])                  # r (folded)
        b_i = b_i.at[0, hp:hp + h].set(b_ih[1] + b_hh[1])            # z (folded)
        b_i = b_i.at[0, 2 * hp:2 * hp + h].set(b_ih[2])              # n (ih only)
        b_hn = jnp.zeros((1, hp), jnp.float32).at[0, :h].set(b_hh[2])

        layers.append({"w_ih": wih_cat.astype(jnp.bfloat16),
                       "w_hh": whh_cat.astype(jnp.bfloat16),
                       "b_i": b_i, "b_hn": b_hn})
    params["gru_layers"] = layers
    return params


def seq2seq_encoder_forward(params, X):
    """Forward pass of Seq2SeqEncoder.

    X: (batch, seq_len) int32 token ids.
    Returns (output (seq_len, batch, hidden), state (num_layers, batch, hidden)).
    """
    B, T = X.shape
    h = params["hidden_size"]
    hp = params["hidden_pad"]
    bp = _round_up(B, 8)                                   # sublane-dense batch

    # Embedding lookup (gather) + permute(1,0,2) -- plain JAX glue.
    emb = jnp.take(params["embedding"], X, axis=0)         # (B, T, E)
    x = jnp.transpose(emb, (1, 0, 2))                      # (T, B, E)
    x = jnp.pad(x, ((0, 0), (0, bp - B), (0, 0)))          # (T, Bp, E)
    x2d = x.reshape(T * bp, x.shape[-1])

    finals = []
    for lyr in params["gru_layers"]:
        out2d = gru_layer(x2d.astype(jnp.bfloat16),
                          lyr["w_ih"], lyr["w_hh"], lyr["b_i"], lyr["b_hn"],
                          seq_len=T, batch_p=bp)           # (T*Bp, Hp) f32
        finals.append(out2d[(T - 1) * bp:(T - 1) * bp + B, :h])
        x2d = out2d
    # TODO(synk): inter-layer dropout is a no-op here (module default dropout=0).

    output = x2d.reshape(T, bp, hp)[:, :B, :h]             # (T, B, H)
    state = jnp.stack(finals, axis=0)                      # (num_layers, B, H)
    return output, state


if __name__ == "__main__":
    vocab_size, embed_size, hidden_size, num_layers = 20, 16, 32, 2
    batch, seq_len = 2, 8

    key = jax.random.PRNGKey(0)
    pkey, xkey = jax.random.split(key)
    params = init_params(pkey, vocab_size, embed_size, hidden_size, num_layers)
    X = jax.random.randint(xkey, (batch, seq_len), 0, vocab_size, dtype=jnp.int32)

    fwd = jax.jit(functools.partial(seq2seq_encoder_forward, params))
    output, state = fwd(X)
    jax.block_until_ready((output, state))

    assert output.shape == (seq_len, batch, hidden_size)
    assert state.shape == (num_layers, batch, hidden_size)
    print("KERNEL_OK")
</pallas_src>

<mosaic_0001>
module attributes {stable_mosaic.version = 11 : i64} {
  func.func @gru_layer_kernel(%arg0: i32, %arg1: memref<64x128xbf16, #tpu.memory_space<vmem>>, %arg2: memref<128x384xbf16, #tpu.memory_space<vmem>>, %arg3: memref<128x384xbf16, #tpu.memory_space<vmem>>, %arg4: memref<1x384xf32, #tpu.memory_space<vmem>>, %arg5: memref<1x128xf32, #tpu.memory_space<vmem>>, %arg6: memref<64x128xf32, #tpu.memory_space<vmem>>, %arg7: memref<64x384xf32, #tpu.memory_space<vmem>>) attributes {dimension_semantics = [#tpu.dimension_semantics<arbitrary>], iteration_bounds = array<i64: 1>, scalar_prefetch = 0 : i64, scratch_operands = 1 : i64, tpu.core_type = #tpu.core_type<tc>, window_params = [{pipeline_mode = #tpu.pipeline_mode<synchronous>, transform_indices = @transform_0, window_bounds = array<i64: 64, 128>}, {pipeline_mode = #tpu.pipeline_mode<synchronous>, transform_indices = @transform_1, window_bounds = array<i64: 128, 384>}, {pipeline_mode = #tpu.pipeline_mode<synchronous>, transform_indices = @transform_2, window_bounds = array<i64: 128, 384>}, {pipeline_mode = #tpu.pipeline_mode<synchronous>, transform_indices = @transform_3, window_bounds = array<i64: 1, 384>}, {pipeline_mode = #tpu.pipeline_mode<synchronous>, transform_indices = @transform_4, window_bounds = array<i64: 1, 128>}, {pipeline_mode = #tpu.pipeline_mode<synchronous>, transform_indices = @transform_5, window_bounds = array<i64: 64, 128>}]} {
    %c0 = arith.constant 0 : index
    %c0_0 = arith.constant 0 : index
    %0 = vector.load %arg1[%c0, %c0_0] : memref<64x128xbf16, #tpu.memory_space<vmem>>, vector<64x128xbf16>
    %c0_1 = arith.constant 0 : index
    %c0_2 = arith.constant 0 : index
    %1 = vector.load %arg2[%c0_1, %c0_2] : memref<128x384xbf16, #tpu.memory_space<vmem>>, vector<128x384xbf16>
    %cst = arith.constant dense<0.000000e+00> : vector<64x384xf32>
    %2 = tpu.matmul %0, %1, %cst {dimension_numbers = #tpu.dot_dimension_numbers<[1], [0], [0], [1], [0, 0, 1, 1], [], []>} : vector<64x128xbf16>, vector<128x384xbf16>, vector<64x384xf32> -> vector<64x384xf32>
    %c0_3 = arith.constant 0 : index
    %c0_4 = arith.constant 0 : index
    %3 = vector.load %arg4[%c0_3, %c0_4] : memref<1x384xf32, #tpu.memory_space<vmem>>, vector<1x384xf32>
    %4 = vector.broadcast %3 : vector<1x384xf32> to vector<64x384xf32>
    %5 = arith.addf %2, %4 : vector<64x384xf32>
    %c0_5 = arith.constant 0 : index
    %c0_6 = arith.constant 0 : index
    %6 = vector.load %arg7[%c0_5, %c0_6] : memref<64x384xf32, #tpu.memory_space<vmem>>, vector<64x384xf32>
    tpu.vector_store %arg7[%c0_5, %c0_6], %5 {strides = array<i32>} : memref<64x384xf32, #tpu.memory_space<vmem>>, vector<64x384xf32>,
    %c0_7 = arith.constant 0 : index
    %c0_8 = arith.constant 0 : index
    %7 = vector.load %arg3[%c0_7, %c0_8] : memref<128x384xbf16, #tpu.memory_space<vmem>>, vector<128x384xbf16>
    %c0_9 = arith.constant 0 : index
    %c0_10 = arith.constant 0 : index
    %8 = vector.load %arg5[%c0_9, %c0_10] : memref<1x128xf32, #tpu.memory_space<vmem>>, vector<1x128xf32>
    %cst_11 = arith.constant 0.000000e+00 : f32
    %9 = vector.broadcast %cst_11 : f32 to vector<8x128xf32>
    %c0_i32 = arith.constant 0 : i32
    %c8_i32 = arith.constant 8 : i32
    %10 = arith.muli %c0_i32, %c8_i32 : i32
    %11 = tpu.assume_multiple %10, 8 : i32
    %12 = arith.index_cast %11 : i32 to index
    %c0_12 = arith.constant 0 : index
    %13 = vector.load %arg7[%12, %c0_12] : memref<64x384xf32, #tpu.memory_space<vmem>>, vector<8x384xf32>
    %14 = arith.truncf %9 : vector<8x128xf32> to vector<8x128xbf16>
    %cst_13 = arith.constant dense<0.000000e+00> : vector<8x384xf32>
    %15 = tpu.matmul %14, %7, %cst_13 {dimension_numbers = #tpu.dot_dimension_numbers<[1], [0], [0], [1], [0, 0, 1, 1], [], []>} : vector<8x128xbf16>, vector<128x384xbf16>, vector<8x384xf32> -> vector<8x384xf32>
    %16 = vector.extract_strided_slice %13 {offsets = [0, 0], sizes = [8, 128], strides = [1, 1]} : vector<8x384xf32> to vector<8x128xf32>
    %17 = vector.extract_strided_slice %15 {offsets = [0, 0], sizes = [8, 128], strides = [1, 1]} : vector<8x384xf32> to vector<8x128xf32>
    %18 = arith.addf %16, %17 : vector<8x128xf32>
    %19 = arith.negf %18 : vector<8x128xf32>
    %20 = math.exp %19 : vector<8x128xf32>
    %cst_14 = arith.constant 1.000000e+00 : f32
    %21 = vector.broadcast %cst_14 : f32 to vector<8x128xf32>
    %22 = arith.addf %21, %20 : vector<8x128xf32>
    %23 = arith.divf %21, %22 : vector<8x128xf32>
    %24 = vector.extract_strided_slice %13 {offsets = [0, 128], sizes = [8, 128], strides = [1, 1]} : vector<8x384xf32> to vector<8x128xf32>
    %25 = vector.extract_strided_slice %15 {offsets = [0, 128], sizes = [8, 128], strides = [1, 1]} : vector<8x384xf32> to vector<8x128xf32>
    %26 = arith.addf %24, %25 : vector<8x128xf32>
    %27 = arith.negf %26 : vector<8x128xf32>
    %28 = math.exp %27 : vector<8x128xf32>
    %cst_15 = arith.constant 1.000000e+00 : f32
    %29 = vector.broadcast %cst_15 : f32 to vector<8x128xf32>
    %30 = arith.addf %29, %28 : vector<8x128xf32>
    %31 = arith.divf %29, %30 : vector<8x128xf32>
    %32 = vector.extract_strided_slice %13 {offsets = [0, 256], sizes = [8, 128], strides = [1, 1]} : vector<8x384xf32> to vector<8x128xf32>
    %33 = vector.extract_strided_slice %15 {offsets = [0, 256], sizes = [8, 128], strides = [1, 1]} : vector<8x384xf32> to vector<8x128xf32>
    %34 = vector.broadcast %8 : vector<1x128xf32> to vector<8x128xf32>
    %35 = arith.addf %33, %34 : vector<8x128xf32>
    %36 = arith.mulf %23, %35 : vector<8x128xf32>
    %37 = arith.addf %32, %36 : vector<8x128xf32>
    %38 = math.tanh %37 : vector<8x128xf32>
    %cst_16 = arith.constant 1.000000e+00 : f32
    %39 = vector.broadcast %cst_16 : f32 to vector<8x128xf32>
    %40 = arith.subf %39, %31 : vector<8x128xf32>
    %41 = arith.mulf %40, %38 : vector<8x128xf32>
    %42 = arith.mulf %31, %9 : vector<8x128xf32>
    %43 = arith.addf %41, %42 : vector<8x128xf32>
    %44 = arith.index_cast %11 : i32 to index
    %c0_17 = arith.constant 0 : index
    %45 = vector.load %arg6[%44, %c0_17] : memref<64x128xf32, #tpu.memory_space<vmem>>, vector<8x128xf32>
    tpu.vector_store %arg6[%44, %c0_17], %43 {strides = array<i32>} : memref<64x128xf32, #tpu.memory_space<vmem>>, vector<8x128xf32>,
    %c1_i32 = arith.constant 1 : i32
    %c8_i32_18 = arith.constant 8 : i32
    %46 = arith.muli %c1_i32, %c8_i32_18 : i32
    %47 = tpu.assume_multiple %46, 8 : i32
    %48 = arith.index_cast %47 : i32 to index
    %c0_19 = arith.constant 0 : index
    %49 = vector.load %arg7[%48, %c0_19] : memref<64x384xf32, #tpu.memory_space<vmem>>, vector<8x384xf32>
    %50 = arith.truncf %43 : vector<8x128xf32> to vector<8x128xbf16>
    %cst_20 = arith.constant dense<0.000000e+00> : vector<8x384xf32>
    %51 = tpu.matmul %50, %7, %cst_20 {dimension_numbers = #tpu.dot_dimension_numbers<[1], [0], [0], [1], [0, 0, 1, 1], [], []>} : vector<8x128xbf16>, vector<128x384xbf16>, vector<8x384xf32> -> vector<8x384xf32>
    %52 = vector.extract_strided_slice %49 {offsets = [0, 0], sizes = [8, 128], strides = [1, 1]} : vector<8x384xf32> to vector<8x128xf32>
    %53 = vector.extract_strided_slice %51 {offsets = [0, 0], sizes = [8, 128], strides = [1, 1]} : vector<8x384xf32> to vector<8x128xf32>
    %54 = arith.addf %52, %53 : vector<8x128xf32>
    %55 = arith.negf %54 : vector<8x128xf32>
    %56 = math.exp %55 : vector<8x128xf32>
    %cst_21 = arith.constant 1.000000e+00 : f32
    %57 = vector.broadcast %cst_21 : f32 to vector<8x128xf32>
    %58 = arith.addf %57, %56 : vector<8x128xf32>
    %59 = arith.divf %57, %58 : vector<8x128xf32>
    %60 = vector.extract_strided_slice %49 {offsets = [0, 128], sizes = [8, 128], strides = [1, 1]} : vector<8x384xf32> to vector<8x128xf32>
    %61 = vector.extract_strided_slice %51 {offsets = [0, 128], sizes = [8, 128], strides = [1, 1]} : vector<8x384xf32> to vector<8x128xf32>
    %62 = arith.addf %60, %61 : vector<8x128xf32>
    %63 = arith.negf %62 : vector<8x128xf32>
    %64 = math.exp %63 : vector<8x128xf32>
    %cst_22 = arith.constant 1.000000e+00 : f32
    %65 = vector.broadcast %cst_22 : f32 to vector<8x128xf32>
    %66 = arith.addf %65, %64 : vector<8x128xf32>
    %67 = arith.divf %65, %66 : vector<8x128xf32>
    %68 = vector.extract_strided_slice %49 {offsets = [0, 256], sizes = [8, 128], strides = [1, 1]} : vector<8x384xf32> to vector<8x128xf32>
    %69 = vector.extract_strided_slice %51 {offsets = [0, 256], sizes = [8, 128], strides = [1, 1]} : vector<8x384xf32> to vector<8x128xf32>
    %70 = vector.broadcast %8 : vector<1x128xf32> to vector<8x128xf32>
    %71 = arith.addf %69, %70 : vector<8x128xf32>
    %72 = arith.mulf %59, %71 : vector<8x128xf32>
    %73 = arith.addf %68, %72 : vector<8x128xf32>
    %74 = math.tanh %73 : vector<8x128xf32>
    %cst_23 = arith.constant 1.000000e+00 : f32
    %75 = vector.broadcast %cst_23 : f32 to vector<8x128xf32>
    %76 = arith.subf %75, %67 : vector<8x128xf32>
    %77 = arith.mulf %76, %74 : vector<8x128xf32>
    %78 = arith.mulf %67, %43 : vector<8x128xf32>
    %79 = arith.addf %77, %78 : vector<8x128xf32>
    %80 = arith.index_cast %47 : i32 to index
    %c0_24 = arith.constant 0 : index
    %81 = vector.load %arg6[%80, %c0_24] : memref<64x128xf32, #tpu.memory_space<vmem>>, vector<8x128xf32>
    tpu.vector_store %arg6[%80, %c0_24], %79 {strides = array<i32>} : memref<64x128xf32, #tpu.memory_space<vmem>>, vector<8x128xf32>,
    %c2_i32 = arith.constant 2 : i32
    %c8_i32_25 = arith.constant 8 : i32
    %82 = arith.muli %c2_i32, %c8_i32_25 : i32
    %83 = tpu.assume_multiple %82, 8 : i32
    %84 = arith.index_cast %83 : i32 to index
    %c0_26 = arith.constant 0 : index
    %85 = vector.load %arg7[%84, %c0_26] : memref<64x384xf32, #tpu.memory_space<vmem>>, vector<8x384xf32>
    %86 = arith.truncf %79 : vector<8x128xf32> to vector<8x128xbf16>
    %cst_27 = arith.constant dense<0.000000e+00> : vector<8x384xf32>
    %87 = tpu.matmul %86, %7, %cst_27 {dimension_numbers = #tpu.dot_dimension_numbers<[1], [0], [0], [1], [0, 0, 1, 1], [], []>} : vector<8x128xbf16>, vector<128x384xbf16>, vector<8x384xf32> -> vector<8x384xf32>
    %88 = vector.extract_strided_slice %85 {offsets = [0, 0], sizes = [8, 128], strides = [1, 1]} : vector<8x384xf32> to vector<8x128xf32>
    %89 = vector.extract_strided_slice %87 {offsets = [0, 0], sizes = [8, 128], strides = [1, 1]} : vector<8x384xf32> to vector<8x128xf32>
    %90 = arith.addf %88, %89 : vector<8x128xf32>
    %91 = arith.negf %90 : vector<8x128xf32>
    %92 = math.exp %91 : vector<8x128xf32>
    %cst_28 = arith.constant 1.000000e+00 : f32
    %93 = vector.broadcast %cst_28 : f32 to vector<8x128xf32>
    %94 = arith.addf %93, %92 : vector<8x128xf32>
    %95 = arith.divf %93, %94 : vector<8x128xf32>
    %96 = vector.extract_strided_slice %85 {offsets = [0, 128], sizes = [8, 128], strides = [1, 1]} : vector<8x384xf32> to vector<8x128xf32>
    %97 = vector.extract_strided_slice %87 {offsets = [0, 128], sizes = [8, 128], strides = [1, 1]} : vector<8x384xf32> to vector<8x128xf32>
    %98 = arith.addf %96, %97 : vector<8x128xf32>
    %99 = arith.negf %98 : vector<8x128xf32>
    %100 = math.exp %99 : vector<8x128xf32>
    %cst_29 = arith.constant 1.000000e+00 : f32
    %101 = vector.broadcast %cst_29 : f32 to vector<8x128xf32>
    %102 = arith.addf %101, %100 : vector<8x128xf32>
    %103 = arith.divf %101, %102 : vector<8x128xf32>
    %104 = vector.extract_strided_slice %85 {offsets = [0, 256], sizes = [8, 128], strides = [1, 1]} : vector<8x384xf32> to vector<8x128xf32>
    %105 = vector.extract_strided_slice %87 {offsets = [0, 256], sizes = [8, 128], strides = [1, 1]} : vector<8x384xf32> to vector<8x128xf32>
    %106 = vector.broadcast %8 : vector<1x128xf32> to vector<8x128xf32>
    %107 = arith.addf %105, %106 : vector<8x128xf32>
    %108 = arith.mulf %95, %107 : vector<8x128xf32>
    %109 = arith.addf %104, %108 : vector<8x128xf32>
    %110 = math.tanh %109 : vector<8x128xf32>
    %cst_30 = arith.constant 1.000000e+00 : f32
    %111 = vector.broadcast %cst_30 : f32 to vector<8x128xf32>
    %112 = arith.subf %111, %103 : vector<8x128xf32>
    %113 = arith.mulf %112, %110 : vector<8x128xf32>
    %114 = arith.mulf %103, %79 : vector<8x128xf32>
    %115 = arith.addf %113, %114 : vector<8x128xf32>
    %116 = arith.index_cast %83 : i32 to index
    %c0_31 = arith.constant 0 : index
    %117 = vector.load %arg6[%116, %c0_31] : memref<64x128xf32, #tpu.memory_space<vmem>>, vector<8x128xf32>
    tpu.vector_store %arg6[%116, %c0_31], %115 {strides = array<i32>} : memref<64x128xf32, #tpu.memory_space<vmem>>, vector<8x128xf32>,
    %c3_i32 = arith.constant 3 : i32
    %c8_i32_32 = arith.constant 8 : i32
    %118 = arith.muli %c3_i32, %c8_i32_32 : i32
    %119 = tpu.assume_multiple %118, 8 : i32
    %120 = arith.index_cast %119 : i32 to index
    %c0_33 = arith.constant 0 : index
    %121 = vector.load %arg7[%120, %c0_33] : memref<64x384xf32, #tpu.memory_space<vmem>>, vector<8x384xf32>
    %122 = arith.truncf %115 : vector<8x128xf32> to vector<8x128xbf16>
    %cst_34 = arith.constant dense<0.000000e+00> : vector<8x384xf32>
    %123 = tpu.matmul %122, %7, %cst_34 {dimension_numbers = #tpu.dot_dimension_numbers<[1], [0], [0], [1], [0, 0, 1, 1], [], []>} : vector<8x128xbf16>, vector<128x384xbf16>, vector<8x384xf32> -> vector<8x384xf32>
    %124 = vector.extract_strided_slice %121 {offsets = [0, 0], sizes = [8, 128], strides = [1, 1]} : vector<8x384xf32> to vector<8x128xf32>
    %125 = vector.extract_strided_slice %123 {offsets = [0, 0], sizes = [8, 128], strides = [1, 1]} : vector<8x384xf32> to vector<8x128xf32>
    %126 = arith.addf %124, %125 : vector<8x128xf32>
    %127 = arith.negf %126 : vector<8x128xf32>
    %128 = math.exp %127 : vector<8x128xf32>
    %cst_35 = arith.constant 1.000000e+00 : f32
    %129 = vector.broadcast %cst_35 : f32 to vector<8x128xf32>
    %130 = arith.addf %129, %128 : vector<8x128xf32>
    %131 = arith.divf %129, %130 : vector<8x128xf32>
    %132 = vector.extract_strided_slice %121 {offsets = [0, 128], sizes = [8, 128], strides = [1, 1]} : vector<8x384xf32> to vector<8x128xf32>
    %133 = vector.extract_strided_slice %123 {offsets = [0, 128], sizes = [8, 128], strides = [1, 1]} : vector<8x384xf32> to vector<8x128xf32>
    %134 = arith.addf %132, %133 : vector<8x128xf32>
    %135 = arith.negf %134 : vector<8x128xf32>
    %136 = math.exp %135 : vector<8x128xf32>
    %cst_36 = arith.constant 1.000000e+00 : f32
    %137 = vector.broadcast %cst_36 : f32 to vector<8x128xf32>
    %138 = arith.addf %137, %136 : vector<8x128xf32>
    %139 = arith.divf %137, %138 : vector<8x128xf32>
    %140 = vector.extract_strided_slice %121 {offsets = [0, 256], sizes = [8, 128], strides = [1, 1]} : vector<8x384xf32> to vector<8x128xf32>
    %141 = vector.extract_strided_slice %123 {offsets = [0, 256], sizes = [8, 128], strides = [1, 1]} : vector<8x384xf32> to vector<8x128xf32>
    %142 = vector.broadcast %8 : vector<1x128xf32> to vector<8x128xf32>
    %143 = arith.addf %141, %142 : vector<8x128xf32>
    %144 = arith.mulf %131, %143 : vector<8x128xf32>
    %145 = arith.addf %140, %144 : vector<8x128xf32>
    %146 = math.tanh %145 : vector<8x128xf32>
    %cst_37 = arith.constant 1.000000e+00 : f32
    %147 = vector.broadcast %cst_37 : f32 to vector<8x128xf32>
    %148 = arith.subf %147, %139 : vector<8x128xf32>
    %149 = arith.mulf %148, %146 : vector<8x128xf32>
    %150 = arith.mulf %139, %115 : vector<8x128xf32>
    %151 = arith.addf %149, %150 : vector<8x128xf32>
    %152 = arith.index_cast %119 : i32 to index
    %c0_38 = arith.constant 0 : index
    %153 = vector.load %arg6[%152, %c0_38] : memref<64x128xf32, #tpu.memory_space<vmem>>, vector<8x128xf32>
    tpu.vector_store %arg6[%152, %c0_38], %151 {strides = array<i32>} : memref<64x128xf32, #tpu.memory_space<vmem>>, vector<8x128xf32>,
    %c4_i32 = arith.constant 4 : i32
    %c8_i32_39 = arith.constant 8 : i32
    %154 = arith.muli %c4_i32, %c8_i32_39 : i32
    %155 = tpu.assume_multiple %154, 8 : i32
    %156 = arith.index_cast %155 : i32 to index
    %c0_40 = arith.constant 0 : index
    %157 = vector.load %arg7[%156, %c0_40] : memref<64x384xf32, #tpu.memory_space<vmem>>, vector<8x384xf32>
    %158 = arith.truncf %151 : vector<8x128xf32> to vector<8x128xbf16>
    %cst_41 = arith.constant dense<0.000000e+00> : vector<8x384xf32>
    %159 = tpu.matmul %158, %7, %cst_41 {dimension_numbers = #tpu.dot_dimension_numbers<[1], [0], [0], [1], [0, 0, 1, 1], [], []>} : vector<8x128xbf16>, vector<128x384xbf16>, vector<8x384xf32> -> vector<8x384xf32>
    %160 = vector.extract_strided_slice %157 {offsets = [0, 0], sizes = [8, 128], strides = [1, 1]} : vector<8x384xf32> to vector<8x128xf32>
    %161 = vector.extract_strided_slice %159 {offsets = [0, 0], sizes = [8, 128], strides = [1, 1]} : vector<8x384xf32> to vector<8x128xf32>
    %162 = arith.addf %160, %161 : vector<8x128xf32>
    %163 = arith.negf %162 : vector<8x128xf32>
    %164 = math.exp %163 : vector<8x128xf32>
    %cst_42 = arith.constant 1.000000e+00 : f32
    %165 = vector.broadcast %cst_42 : f32 to vector<8x128xf32>
    %166 = arith.addf %165, %164 : vector<8x128xf32>
    %167 = arith.divf %165, %166 : vector<8x128xf32>
    %168 = vector.extract_strided_slice %157 {offsets = [0, 128], sizes = [8, 128], strides = [1, 1]} : vector<8x384xf32> to vector<8x128xf32>
    %169 = vector.extract_strided_slice %159 {offsets = [0, 128], sizes = [8, 128], strides = [1, 1]} : vector<8x384xf32> to vector<8x128xf32>
    %170 = arith.addf %168, %169 : vector<8x128xf32>
    %171 = arith.negf %170 : vector<8x128xf32>
    %172 = math.exp %171 : vector<8x128xf32>
    %cst_43 = arith.constant 1.000000e+00 : f32
    %173 = vector.broadcast %cst_43 : f32 to vector<8x128xf32>
    %174 = arith.addf %173, %172 : vector<8x128xf32>
    %175 = arith.divf %173, %174 : vector<8x128xf32>
    %176 = vector.extract_strided_slice %157 {offsets = [0, 256], sizes = [8, 128], strides = [1, 1]} : vector<8x384xf32> to vector<8x128xf32>
    %177 = vector.extract_strided_slice %159 {offsets = [0, 256], sizes = [8, 128], strides = [1, 1]} : vector<8x384xf32> to vector<8x128xf32>
    %178 = vector.broadcast %8 : vector<1x128xf32> to vector<8x128xf32>
    %179 = arith.addf %177, %178 : vector<8x128xf32>
    %180 = arith.mulf %167, %179 : vector<8x128xf32>
    %181 = arith.addf %176, %180 : vector<8x128xf32>
    %182 = math.tanh %181 : vector<8x128xf32>
    %cst_44 = arith.constant 1.000000e+00 : f32
    %183 = vector.broadcast %cst_44 : f32 to vector<8x128xf32>
    %184 = arith.subf %183, %175 : vector<8x128xf32>
    %185 = arith.mulf %184, %182 : vector<8x128xf32>
    %186 = arith.mulf %175, %151 : vector<8x128xf32>
    %187 = arith.addf %185, %186 : vector<8x128xf32>
    %188 = arith.index_cast %155 : i32 to index
    %c0_45 = arith.constant 0 : index
    %189 = vector.load %arg6[%188, %c0_45] : memref<64x128xf32, #tpu.memory_space<vmem>>, vector<8x128xf32>
    tpu.vector_store %arg6[%188, %c0_45], %187 {strides = array<i32>} : memref<64x128xf32, #tpu.memory_space<vmem>>, vector<8x128xf32>,
    %c5_i32 = arith.constant 5 : i32
    %c8_i32_46 = arith.constant 8 : i32
    %190 = arith.muli %c5_i32, %c8_i32_46 : i32
    %191 = tpu.assume_multiple %190, 8 : i32
    %192 = arith.index_cast %191 : i32 to index
    %c0_47 = arith.constant 0 : index
    %193 = vector.load %arg7[%192, %c0_47] : memref<64x384xf32, #tpu.memory_space<vmem>>, vector<8x384xf32>
    %194 = arith.truncf %187 : vector<8x128xf32> to vector<8x128xbf16>
    %cst_48 = arith.constant dense<0.000000e+00> : vector<8x384xf32>
    %195 = tpu.matmul %194, %7, %cst_48 {dimension_numbers = #tpu.dot_dimension_numbers<[1], [0], [0], [1], [0, 0, 1, 1], [], []>} : vector<8x128xbf16>, vector<128x384xbf16>, vector<8x384xf32> -> vector<8x384xf32>
    %196 = vector.extract_strided_slice %193 {offsets = [0, 0], sizes = [8, 128], strides = [1, 1]} : vector<8x384xf32> to vector<8x128xf32>
    %197 = vector.extract_strided_slice %195 {offsets = [0, 0], sizes = [8, 128], strides = [1, 1]} : vector<8x384xf32> to vector<8x128xf32>
    %198 = arith.addf %196, %197 : vector<8x128xf32>
    %199 = arith.negf %198 : vector<8x128xf32>
    %200 = math.exp %199 : vector<8x128xf32>
    %cst_49 = arith.constant 1.000000e+00 : f32
    %201 = vector.broadcast %cst_49 : f32 to vector<8x128xf32>
    %202 = arith.addf %201, %200 : vector<8x128xf32>
    %203 = arith.divf %201, %202 : vector<8x128xf32>
    %204 = vector.extract_strided_slice %193 {offsets = [0, 128], sizes = [8, 128], strides = [1, 1]} : vector<8x384xf32> to vector<8x128xf32>
    %205 = vector.extract_strided_slice %195 {offsets = [0, 128], sizes = [8, 128], strides = [1, 1]} : vector<8x384xf32> to vector<8x128xf32>
    %206 = arith.addf %204, %205 : vector<8x128xf32>
    %207 = arith.negf %206 : vector<8x128xf32>
    %208 = math.exp %207 : vector<8x128xf32>
    %cst_50 = arith.constant 1.000000e+00 : f32
    %209 = vector.broadcast %cst_50 : f32 to vector<8x128xf32>
    %210 = arith.addf %209, %208 : vector<8x128xf32>
    %211 = arith.divf %209, %210 : vector<8x128xf32>
    %212 = vector.extract_strided_slice %193 {offsets = [0, 256], sizes = [8, 128], strides = [1, 1]} : vector<8x384xf32> to vector<8x128xf32>
    %213 = vector.extract_strided_slice %195 {offsets = [0, 256], sizes = [8, 128], strides = [1, 1]} : vector<8x384xf32> to vector<8x128xf32>
    %214 = vector.broadcast %8 : vector<1x128xf32> to vector<8x128xf32>
    %215 = arith.addf %213, %214 : vector<8x128xf32>
    %216 = arith.mulf %203, %215 : vector<8x128xf32>
    %217 = arith.addf %212, %216 : vector<8x128xf32>
    %218 = math.tanh %217 : vector<8x128xf32>
    %cst_51 = arith.constant 1.000000e+00 : f32
    %219 = vector.broadcast %cst_51 : f32 to vector<8x128xf32>
    %220 = arith.subf %219, %211 : vector<8x128xf32>
    %221 = arith.mulf %220, %218 : vector<8x128xf32>
    %222 = arith.mulf %211, %187 : vector<8x128xf32>
    %223 = arith.addf %221, %222 : vector<8x128xf32>
    %224 = arith.index_cast %191 : i32 to index
    %c0_52 = arith.constant 0 : index
    %225 = vector.load %arg6[%224, %c0_52] : memref<64x128xf32, #tpu.memory_space<vmem>>, vector<8x128xf32>
    tpu.vector_store %arg6[%224, %c0_52], %223 {strides = array<i32>} : memref<64x128xf32, #tpu.memory_space<vmem>>, vector<8x128xf32>,
    %c6_i32 = arith.constant 6 : i32
    %c8_i32_53 = arith.constant 8 : i32
    %226 = arith.muli %c6_i32, %c8_i32_53 : i32
    %227 = tpu.assume_multiple %226, 8 : i32
    %228 = arith.index_cast %227 : i32 to index
    %c0_54 = arith.constant 0 : index
    %229 = vector.load %arg7[%228, %c0_54] : memref<64x384xf32, #tpu.memory_space<vmem>>, vector<8x384xf32>
    %230 = arith.truncf %223 : vector<8x128xf32> to vector<8x128xbf16>
    %cst_55 = arith.constant dense<0.000000e+00> : vector<8x384xf32>
    %231 = tpu.matmul %230, %7, %cst_55 {dimension_numbers = #tpu.dot_dimension_numbers<[1], [0], [0], [1], [0, 0, 1, 1], [], []>} : vector<8x128xbf16>, vector<128x384xbf16>, vector<8x384xf32> -> vector<8x384xf32>
    %232 = vector.extract_strided_slice %229 {offsets = [0, 0], sizes = [8, 128], strides = [1, 1]} : vector<8x384xf32> to vector<8x128xf32>
    %233 = vector.extract_strided_slice %231 {offsets = [0, 0], sizes = [8, 128], strides = [1, 1]} : vector<8x384xf32> to vector<8x128xf32>
    %234 = arith.addf %232, %233 : vector<8x128xf32>
    %235 = arith.negf %234 : vector<8x128xf32>
    %236 = math.exp %235 : vector<8x128xf32>
    %cst_56 = arith.constant 1.000000e+00 : f32
    %237 = vector.broadcast %cst_56 : f32 to vector<8x128xf32>
    %238 = arith.addf %237, %236 : vector<8x128xf32>
    %239 = arith.divf %237, %238 : vector<8x128xf32>
    %240 = vector.extract_strided_slice %229 {offsets = [0, 128], sizes = [8, 128], strides = [1, 1]} : vector<8x384xf32> to vector<8x128xf32>
    %241 = vector.extract_strided_slice %231 {offsets = [0, 128], sizes = [8, 128], strides = [1, 1]} : vector<8x384xf32> to vector<8x128xf32>
    %242 = arith.addf %240, %241 : vector<8x128xf32>
    %243 = arith.negf %242 : vector<8x128xf32>
    %244 = math.exp %243 : vector<8x128xf32>
    %cst_57 = arith.constant 1.000000e+00 : f32
    %245 = vector.broadcast %cst_57 : f32 to vector<8x128xf32>
    %246 = arith.addf %245, %244 : vector<8x128xf32>
    %247 = arith.divf %245, %246 : vector<8x128xf32>
    %248 = vector.extract_strided_slice %229 {offsets = [0, 256], sizes = [8, 128], strides = [1, 1]} : vector<8x384xf32> to vector<8x128xf32>
    %249 = vector.extract_strided_slice %231 {offsets = [0, 256], sizes = [8, 128], strides = [1, 1]} : vector<8x384xf32> to vector<8x128xf32>
    %250 = vector.broadcast %8 : vector<1x128xf32> to vector<8x128xf32>
    %251 = arith.addf %249, %250 : vector<8x128xf32>
    %252 = arith.mulf %239, %251 : vector<8x128xf32>
    %253 = arith.addf %248, %252 : vector<8x128xf32>
    %254 = math.tanh %253 : vector<8x128xf32>
    %cst_58 = arith.constant 1.000000e+00 : f32
    %255 = vector.broadcast %cst_58 : f32 to vector<8x128xf32>
    %256 = arith.subf %255, %247 : vector<8x128xf32>
    %257 = arith.mulf %256, %254 : vector<8x128xf32>
    %258 = arith.mulf %247, %223 : vector<8x128xf32>
    %259 = arith.addf %257, %258 : vector<8x128xf32>
    %260 = arith.index_cast %227 : i32 to index
    %c0_59 = arith.constant 0 : index
    %261 = vector.load %arg6[%260, %c0_59] : memref<64x128xf32, #tpu.memory_space<vmem>>, vector<8x128xf32>
    tpu.vector_store %arg6[%260, %c0_59], %259 {strides = array<i32>} : memref<64x128xf32, #tpu.memory_space<vmem>>, vector<8x128xf32>,
    %c7_i32 = arith.constant 7 : i32
    %c8_i32_60 = arith.constant 8 : i32
    %262 = arith.muli %c7_i32, %c8_i32_60 : i32
    %263 = tpu.assume_multiple %262, 8 : i32
    %264 = arith.index_cast %263 : i32 to index
    %c0_61 = arith.constant 0 : index
    %265 = vector.load %arg7[%264, %c0_61] : memref<64x384xf32, #tpu.memory_space<vmem>>, vector<8x384xf32>
    %266 = arith.truncf %259 : vector<8x128xf32> to vector<8x128xbf16>
    %cst_62 = arith.constant dense<0.000000e+00> : vector<8x384xf32>
    %267 = tpu.matmul %266, %7, %cst_62 {dimension_numbers = #tpu.dot_dimension_numbers<[1], [0], [0], [1], [0, 0, 1, 1], [], []>} : vector<8x128xbf16>, vector<128x384xbf16>, vector<8x384xf32> -> vector<8x384xf32>
    %268 = vector.extract_strided_slice %265 {offsets = [0, 0], sizes = [8, 128], strides = [1, 1]} : vector<8x384xf32> to vector<8x128xf32>
    %269 = vector.extract_strided_slice %267 {offsets = [0, 0], sizes = [8, 128], strides = [1, 1]} : vector<8x384xf32> to vector<8x128xf32>
    %270 = arith.addf %268, %269 : vector<8x128xf32>
    %271 = arith.negf %270 : vector<8x128xf32>
    %272 = math.exp %271 : vector<8x128xf32>
    %cst_63 = arith.constant 1.000000e+00 : f32
    %273 = vector.broadcast %cst_63 : f32 to vector<8x128xf32>
    %274 = arith.addf %273, %272 : vector<8x128xf32>
    %275 = arith.divf %273, %274 : vector<8x128xf32>
    %276 = vector.extract_strided_slice %265 {offsets = [0, 128], sizes = [8, 128], strides = [1, 1]} : vector<8x384xf32> to vector<8x128xf32>
    %277 = vector.extract_strided_slice %267 {offsets = [0, 128], sizes = [8, 128], strides = [1, 1]} : vector<8x384xf32> to vector<8x128xf32>
    %278 = arith.addf %276, %277 : vector<8x128xf32>
    %279 = arith.negf %278 : vector<8x128xf32>
    %280 = math.exp %279 : vector<8x128xf32>
    %cst_64 = arith.constant 1.000000e+00 : f32
    %281 = vector.broadcast %cst_64 : f32 to vector<8x128xf32>
    %282 = arith.addf %281, %280 : vector<8x128xf32>
    %283 = arith.divf %281, %282 : vector<8x128xf32>
    %284 = vector.extract_strided_slice %265 {offsets = [0, 256], sizes = [8, 128], strides = [1, 1]} : vector<8x384xf32> to vector<8x128xf32>
    %285 = vector.extract_strided_slice %267 {offsets = [0, 256], sizes = [8, 128], strides = [1, 1]} : vector<8x384xf32> to vector<8x128xf32>
    %286 = vector.broadcast %8 : vector<1x128xf32> to vector<8x128xf32>
    %287 = arith.addf %285, %286 : vector<8x128xf32>
    %288 = arith.mulf %275, %287 : vector<8x128xf32>
    %289 = arith.addf %284, %288 : vector<8x128xf32>
    %290 = math.tanh %289 : vector<8x128xf32>
    %cst_65 = arith.constant 1.000000e+00 : f32
    %291 = vector.broadcast %cst_65 : f32 to vector<8x128xf32>
    %292 = arith.subf %291, %283 : vector<8x128xf32>
    %293 = arith.mulf %292, %290 : vector<8x128xf32>
    %294 = arith.mulf %283, %259 : vector<8x128xf32>
    %295 = arith.addf %293, %294 : vector<8x128xf32>
    %296 = arith.index_cast %263 : i32 to index
    %c0_66 = arith.constant 0 : index
    %297 = vector.load %arg6[%296, %c0_66] : memref<64x128xf32, #tpu.memory_space<vmem>>, vector<8x128xf32>
    tpu.vector_store %arg6[%296, %c0_66], %295 {strides = array<i32>} : memref<64x128xf32, #tpu.memory_space<vmem>>, vector<8x128xf32>,
    %c8_i32_67 = arith.constant 8 : i32
    return
  }
  func.func @transform_0(%arg0: i32) -> (i32, i32) {
    %c0_i32 = arith.constant 0 : i32
    %c0_i32_0 = arith.constant 0 : i32
    %c0_i32_1 = arith.constant 0 : i32
    return %c0_i32, %c0_i32_0 : i32, i32
  }
  func.func @transform_1(%arg0: i32) -> (i32, i32) {
    %c0_i32 = arith.constant 0 : i32
    %c0_i32_0 = arith.constant 0 : i32
    %c0_i32_1 = arith.constant 0 : i32
    return %c0_i32, %c0_i32_0 : i32, i32
  }
  func.func @transform_2(%arg0: i32) -> (i32, i32) {
    %c0_i32 = arith.constant 0 : i32
    %c0_i32_0 = arith.constant 0 : i32
    %c0_i32_1 = arith.constant 0 : i32
    return %c0_i32, %c0_i32_0 : i32, i32
  }
  func.func @transform_3(%arg0: i32) -> (i32, i32) {
    %c0_i32 = arith.constant 0 : i32
    %c0_i32_0 = arith.constant 0 : i32
    %c0_i32_1 = arith.constant 0 : i32
    return %c0_i32, %c0_i32_0 : i32, i32
  }
  func.func @transform_4(%arg0: i32) -> (i32, i32) {
    %c0_i32 = arith.constant 0 : i32
    %c0_i32_0 = arith.constant 0 : i32
    %c0_i32_1 = arith.constant 0 : i32
    return %c0_i32, %c0_i32_0 : i32, i32
  }
  func.func @transform_5(%arg0: i32) -> (i32, i32) {
    %c0_i32 = arith.constant 0 : i32
    %c0_i32_0 = arith.constant 0 : i32
    %c0_i32_1 = arith.constant 0 : i32
    return %c0_i32, %c0_i32_0 : i32, i32
  }
}

module attributes {stable_mosaic.version = 11 : i64} {
  func.func @gru_layer_kernel(%arg0: i32, %arg1: memref<64x16xbf16, #tpu.memory_space<vmem>>, %arg2: memref<16x384xbf16, #tpu.memory_space<vmem>>, %arg3: memref<128x384xbf16, #tpu.memory_space<vmem>>, %arg4: memref<1x384xf32, #tpu.memory_space<vmem>>, %arg5: memref<1x128xf32, #tpu.memory_space<vmem>>, %arg6: memref<64x128xf32, #tpu.memory_space<vmem>>, %arg7: memref<64x384xf32, #tpu.memory_space<vmem>>) attributes {dimension_semantics = [#tpu.dimension_semantics<arbitrary>], iteration_bounds = array<i64: 1>, scalar_prefetch = 0 : i64, scratch_operands = 1 : i64, tpu.core_type = #tpu.core_type<tc>, window_params = [{pipeline_mode = #tpu.pipeline_mode<synchronous>, transform_indices = @transform_0, window_bounds = array<i64: 64, 16>}, {pipeline_mode = #tpu.pipeline_mode<synchronous>, transform_indices = @transform_1, window_bounds = array<i64: 16, 384>}, {pipeline_mode = #tpu.pipeline_mode<synchronous>, transform_indices = @transform_2, window_bounds = array<i64: 128, 384>}, {pipeline_mode = #tpu.pipeline_mode<synchronous>, transform_indices = @transform_3, window_bounds = array<i64: 1, 384>}, {pipeline_mode = #tpu.pipeline_mode<synchronous>, transform_indices = @transform_4, window_bounds = array<i64: 1, 128>}, {pipeline_mode = #tpu.pipeline_mode<synchronous>, transform_indices = @transform_5, window_bounds = array<i64: 64, 128>}]} {
    %c0 = arith.constant 0 : index
    %c0_0 = arith.constant 0 : index
    %0 = vector.load %arg1[%c0, %c0_0] : memref<64x16xbf16, #tpu.memory_space<vmem>>, vector<64x16xbf16>
    %c0_1 = arith.constant 0 : index
    %c0_2 = arith.constant 0 : index
    %1 = vector.load %arg2[%c0_1, %c0_2] : memref<16x384xbf16, #tpu.memory_space<vmem>>, vector<16x384xbf16>
    %cst = arith.constant dense<0.000000e+00> : vector<64x384xf32>
    %2 = tpu.matmul %0, %1, %cst {dimension_numbers = #tpu.dot_dimension_numbers<[1], [0], [0], [1], [0, 0, 1, 1], [], []>} : vector<64x16xbf16>, vector<16x384xbf16>, vector<64x384xf32> -> vector<64x384xf32>
    %c0_3 = arith.constant 0 : index
    %c0_4 = arith.constant 0 : index
    %3 = vector.load %arg4[%c0_3, %c0_4] : memref<1x384xf32, #tpu.memory_space<vmem>>, vector<1x384xf32>
    %4 = vector.broadcast %3 : vector<1x384xf32> to vector<64x384xf32>
    %5 = arith.addf %2, %4 : vector<64x384xf32>
    %c0_5 = arith.constant 0 : index
    %c0_6 = arith.constant 0 : index
    %6 = vector.load %arg7[%c0_5, %c0_6] : memref<64x384xf32, #tpu.memory_space<vmem>>, vector<64x384xf32>
    tpu.vector_store %arg7[%c0_5, %c0_6], %5 {strides = array<i32>} : memref<64x384xf32, #tpu.memory_space<vmem>>, vector<64x384xf32>,
    %c0_7 = arith.constant 0 : index
    %c0_8 = arith.constant 0 : index
    %7 = vector.load %arg3[%c0_7, %c0_8] : memref<128x384xbf16, #tpu.memory_space<vmem>>, vector<128x384xbf16>
    %c0_9 = arith.constant 0 : index
    %c0_10 = arith.constant 0 : index
    %8 = vector.load %arg5[%c0_9, %c0_10] : memref<1x128xf32, #tpu.memory_space<vmem>>, vector<1x128xf32>
    %cst_11 = arith.constant 0.000000e+00 : f32
    %9 = vector.broadcast %cst_11 : f32 to vector<8x128xf32>
    %c0_i32 = arith.constant 0 : i32
    %c8_i32 = arith.constant 8 : i32
    %10 = arith.muli %c0_i32, %c8_i32 : i32
    %11 = tpu.assume_multiple %10, 8 : i32
    %12 = arith.index_cast %11 : i32 to index
    %c0_12 = arith.constant 0 : index
    %13 = vector.load %arg7[%12, %c0_12] : memref<64x384xf32, #tpu.memory_space<vmem>>, vector<8x384xf32>
    %14 = arith.truncf %9 : vector<8x128xf32> to vector<8x128xbf16>
    %cst_13 = arith.constant dense<0.000000e+00> : vector<8x384xf32>
    %15 = tpu.matmul %14, %7, %cst_13 {dimension_numbers = #tpu.dot_dimension_numbers<[1], [0], [0], [1], [0, 0, 1, 1], [], []>} : vector<8x128xbf16>, vector<128x384xbf16>, vector<8x384xf32> -> vector<8x384xf32>
    %16 = vector.extract_strided_slice %13 {offsets = [0, 0], sizes = [8, 128], strides = [1, 1]} : vector<8x384xf32> to vector<8x128xf32>
    %17 = vector.extract_strided_slice %15 {offsets = [0, 0], sizes = [8, 128], strides = [1, 1]} : vector<8x384xf32> to vector<8x128xf32>
    %18 = arith.addf %16, %17 : vector<8x128xf32>
    %19 = arith.negf %18 : vector<8x128xf32>
    %20 = math.exp %19 : vector<8x128xf32>
    %cst_14 = arith.constant 1.000000e+00 : f32
    %21 = vector.broadcast %cst_14 : f32 to vector<8x128xf32>
    %22 = arith.addf %21, %20 : vector<8x128xf32>
    %23 = arith.divf %21, %22 : vector<8x128xf32>
    %24 = vector.extract_strided_slice %13 {offsets = [0, 128], sizes = [8, 128], strides = [1, 1]} : vector<8x384xf32> to vector<8x128xf32>
    %25 = vector.extract_strided_slice %15 {offsets = [0, 128], sizes = [8, 128], strides = [1, 1]} : vector<8x384xf32> to vector<8x128xf32>
    %26 = arith.addf %24, %25 : vector<8x128xf32>
    %27 = arith.negf %26 : vector<8x128xf32>
    %28 = math.exp %27 : vector<8x128xf32>
    %cst_15 = arith.constant 1.000000e+00 : f32
    %29 = vector.broadcast %cst_15 : f32 to vector<8x128xf32>
    %30 = arith.addf %29, %28 : vector<8x128xf32>
    %31 = arith.divf %29, %30 : vector<8x128xf32>
    %32 = vector.extract_strided_slice %13 {offsets = [0, 256], sizes = [8, 128], strides = [1, 1]} : vector<8x384xf32> to vector<8x128xf32>
    %33 = vector.extract_strided_slice %15 {offsets = [0, 256], sizes = [8, 128], strides = [1, 1]} : vector<8x384xf32> to vector<8x128xf32>
    %34 = vector.broadcast %8 : vector<1x128xf32> to vector<8x128xf32>
    %35 = arith.addf %33, %34 : vector<8x128xf32>
    %36 = arith.mulf %23, %35 : vector<8x128xf32>
    %37 = arith.addf %32, %36 : vector<8x128xf32>
    %38 = math.tanh %37 : vector<8x128xf32>
    %cst_16 = arith.constant 1.000000e+00 : f32
    %39 = vector.broadcast %cst_16 : f32 to vector<8x128xf32>
    %40 = arith.subf %39, %31 : vector<8x128xf32>
    %41 = arith.mulf %40, %38 : vector<8x128xf32>
    %42 = arith.mulf %31, %9 : vector<8x128xf32>
    %43 = arith.addf %41, %42 : vector<8x128xf32>
    %44 = arith.index_cast %11 : i32 to index
    %c0_17 = arith.constant 0 : index
    %45 = vector.load %arg6[%44, %c0_17] : memref<64x128xf32, #tpu.memory_space<vmem>>, vector<8x128xf32>
    tpu.vector_store %arg6[%44, %c0_17], %43 {strides = array<i32>} : memref<64x128xf32, #tpu.memory_space<vmem>>, vector<8x128xf32>,
    %c1_i32 = arith.constant 1 : i32
    %c8_i32_18 = arith.constant 8 : i32
    %46 = arith.muli %c1_i32, %c8_i32_18 : i32
    %47 = tpu.assume_multiple %46, 8 : i32
    %48 = arith.index_cast %47 : i32 to index
    %c0_19 = arith.constant 0 : index
    %49 = vector.load %arg7[%48, %c0_19] : memref<64x384xf32, #tpu.memory_space<vmem>>, vector<8x384xf32>
    %50 = arith.truncf %43 : vector<8x128xf32> to vector<8x128xbf16>
    %cst_20 = arith.constant dense<0.000000e+00> : vector<8x384xf32>
    %51 = tpu.matmul %50, %7, %cst_20 {dimension_numbers = #tpu.dot_dimension_numbers<[1], [0], [0], [1], [0, 0, 1, 1], [], []>} : vector<8x128xbf16>, vector<128x384xbf16>, vector<8x384xf32> -> vector<8x384xf32>
    %52 = vector.extract_strided_slice %49 {offsets = [0, 0], sizes = [8, 128], strides = [1, 1]} : vector<8x384xf32> to vector<8x128xf32>
    %53 = vector.extract_strided_slice %51 {offsets = [0, 0], sizes = [8, 128], strides = [1, 1]} : vector<8x384xf32> to vector<8x128xf32>
    %54 = arith.addf %52, %53 : vector<8x128xf32>
    %55 = arith.negf %54 : vector<8x128xf32>
    %56 = math.exp %55 : vector<8x128xf32>
    %cst_21 = arith.constant 1.000000e+00 : f32
    %57 = vector.broadcast %cst_21 : f32 to vector<8x128xf32>
    %58 = arith.addf %57, %56 : vector<8x128xf32>
    %59 = arith.divf %57, %58 : vector<8x128xf32>
    %60 = vector.extract_strided_slice %49 {offsets = [0, 128], sizes = [8, 128], strides = [1, 1]} : vector<8x384xf32> to vector<8x128xf32>
    %61 = vector.extract_strided_slice %51 {offsets = [0, 128], sizes = [8, 128], strides = [1, 1]} : vector<8x384xf32> to vector<8x128xf32>
    %62 = arith.addf %60, %61 : vector<8x128xf32>
    %63 = arith.negf %62 : vector<8x128xf32>
    %64 = math.exp %63 : vector<8x128xf32>
    %cst_22 = arith.constant 1.000000e+00 : f32
    %65 = vector.broadcast %cst_22 : f32 to vector<8x128xf32>
    %66 = arith.addf %65, %64 : vector<8x128xf32>
    %67 = arith.divf %65, %66 : vector<8x128xf32>
    %68 = vector.extract_strided_slice %49 {offsets = [0, 256], sizes = [8, 128], strides = [1, 1]} : vector<8x384xf32> to vector<8x128xf32>
    %69 = vector.extract_strided_slice %51 {offsets = [0, 256], sizes = [8, 128], strides = [1, 1]} : vector<8x384xf32> to vector<8x128xf32>
    %70 = vector.broadcast %8 : vector<1x128xf32> to vector<8x128xf32>
    %71 = arith.addf %69, %70 : vector<8x128xf32>
    %72 = arith.mulf %59, %71 : vector<8x128xf32>
    %73 = arith.addf %68, %72 : vector<8x128xf32>
    %74 = math.tanh %73 : vector<8x128xf32>
    %cst_23 = arith.constant 1.000000e+00 : f32
    %75 = vector.broadcast %cst_23 : f32 to vector<8x128xf32>
    %76 = arith.subf %75, %67 : vector<8x128xf32>
    %77 = arith.mulf %76, %74 : vector<8x128xf32>
    %78 = arith.mulf %67, %43 : vector<8x128xf32>
    %79 = arith.addf %77, %78 : vector<8x128xf32>
    %80 = arith.index_cast %47 : i32 to index
    %c0_24 = arith.constant 0 : index
    %81 = vector.load %arg6[%80, %c0_24] : memref<64x128xf32, #tpu.memory_space<vmem>>, vector<8x128xf32>
    tpu.vector_store %arg6[%80, %c0_24], %79 {strides = array<i32>} : memref<64x128xf32, #tpu.memory_space<vmem>>, vector<8x128xf32>,
    %c2_i32 = arith.constant 2 : i32
    %c8_i32_25 = arith.constant 8 : i32
    %82 = arith.muli %c2_i32, %c8_i32_25 : i32
    %83 = tpu.assume_multiple %82, 8 : i32
    %84 = arith.index_cast %83 : i32 to index
    %c0_26 = arith.constant 0 : index
    %85 = vector.load %arg7[%84, %c0_26] : memref<64x384xf32, #tpu.memory_space<vmem>>, vector<8x384xf32>
    %86 = arith.truncf %79 : vector<8x128xf32> to vector<8x128xbf16>
    %cst_27 = arith.constant dense<0.000000e+00> : vector<8x384xf32>
    %87 = tpu.matmul %86, %7, %cst_27 {dimension_numbers = #tpu.dot_dimension_numbers<[1], [0], [0], [1], [0, 0, 1, 1], [], []>} : vector<8x128xbf16>, vector<128x384xbf16>, vector<8x384xf32> -> vector<8x384xf32>
    %88 = vector.extract_strided_slice %85 {offsets = [0, 0], sizes = [8, 128], strides = [1, 1]} : vector<8x384xf32> to vector<8x128xf32>
    %89 = vector.extract_strided_slice %87 {offsets = [0, 0], sizes = [8, 128], strides = [1, 1]} : vector<8x384xf32> to vector<8x128xf32>
    %90 = arith.addf %88, %89 : vector<8x128xf32>
    %91 = arith.negf %90 : vector<8x128xf32>
    %92 = math.exp %91 : vector<8x128xf32>
    %cst_28 = arith.constant 1.000000e+00 : f32
    %93 = vector.broadcast %cst_28 : f32 to vector<8x128xf32>
    %94 = arith.addf %93, %92 : vector<8x128xf32>
    %95 = arith.divf %93, %94 : vector<8x128xf32>
    %96 = vector.extract_strided_slice %85 {offsets = [0, 128], sizes = [8, 128], strides = [1, 1]} : vector<8x384xf32> to vector<8x128xf32>
    %97 = vector.extract_strided_slice %87 {offsets = [0, 128], sizes = [8, 128], strides = [1, 1]} : vector<8x384xf32> to vector<8x128xf32>
    %98 = arith.addf %96, %97 : vector<8x128xf32>
    %99 = arith.negf %98 : vector<8x128xf32>
    %100 = math.exp %99 : vector<8x128xf32>
    %cst_29 = arith.constant 1.000000e+00 : f32
    %101 = vector.broadcast %cst_29 : f32 to vector<8x128xf32>
    %102 = arith.addf %101, %100 : vector<8x128xf32>
    %103 = arith.divf %101, %102 : vector<8x128xf32>
    %104 = vector.extract_strided_slice %85 {offsets = [0, 256], sizes = [8, 128], strides = [1, 1]} : vector<8x384xf32> to vector<8x128xf32>
    %105 = vector.extract_strided_slice %87 {offsets = [0, 256], sizes = [8, 128], strides = [1, 1]} : vector<8x384xf32> to vector<8x128xf32>
    %106 = vector.broadcast %8 : vector<1x128xf32> to vector<8x128xf32>
    %107 = arith.addf %105, %106 : vector<8x128xf32>
    %108 = arith.mulf %95, %107 : vector<8x128xf32>
    %109 = arith.addf %104, %108 : vector<8x128xf32>
    %110 = math.tanh %109 : vector<8x128xf32>
    %cst_30 = arith.constant 1.000000e+00 : f32
    %111 = vector.broadcast %cst_30 : f32 to vector<8x128xf32>
    %112 = arith.subf %111, %103 : vector<8x128xf32>
    %113 = arith.mulf %112, %110 : vector<8x128xf32>
    %114 = arith.mulf %103, %79 : vector<8x128xf32>
    %115 = arith.addf %113, %114 : vector<8x128xf32>
    %116 = arith.index_cast %83 : i32 to index
    %c0_31 = arith.constant 0 : index
    %117 = vector.load %arg6[%116, %c0_31] : memref<64x128xf32, #tpu.memory_space<vmem>>, vector<8x128xf32>
    tpu.vector_store %arg6[%116, %c0_31], %115 {strides = array<i32>} : memref<64x128xf32, #tpu.memory_space<vmem>>, vector<8x128xf32>,
    %c3_i32 = arith.constant 3 : i32
    %c8_i32_32 = arith.constant 8 : i32
    %118 = arith.muli %c3_i32, %c8_i32_32 : i32
    %119 = tpu.assume_multiple %118, 8 : i32
    %120 = arith.index_cast %119 : i32 to index
    %c0_33 = arith.constant 0 : index
    %121 = vector.load %arg7[%120, %c0_33] : memref<64x384xf32, #tpu.memory_space<vmem>>, vector<8x384xf32>
    %122 = arith.truncf %115 : vector<8x128xf32> to vector<8x128xbf16>
    %cst_34 = arith.constant dense<0.000000e+00> : vector<8x384xf32>
    %123 = tpu.matmul %122, %7, %cst_34 {dimension_numbers = #tpu.dot_dimension_numbers<[1], [0], [0], [1], [0, 0, 1, 1], [], []>} : vector<8x128xbf16>, vector<128x384xbf16>, vector<8x384xf32> -> vector<8x384xf32>
    %124 = vector.extract_strided_slice %121 {offsets = [0, 0], sizes = [8, 128], strides = [1, 1]} : vector<8x384xf32> to vector<8x128xf32>
    %125 = vector.extract_strided_slice %123 {offsets = [0, 0], sizes = [8, 128], strides = [1, 1]} : vector<8x384xf32> to vector<8x128xf32>
    %126 = arith.addf %124, %125 : vector<8x128xf32>
    %127 = arith.negf %126 : vector<8x128xf32>
    %128 = math.exp %127 : vector<8x128xf32>
    %cst_35 = arith.constant 1.000000e+00 : f32
    %129 = vector.broadcast %cst_35 : f32 to vector<8x128xf32>
    %130 = arith.addf %129, %128 : vector<8x128xf32>
    %131 = arith.divf %129, %130 : vector<8x128xf32>
    %132 = vector.extract_strided_slice %121 {offsets = [0, 128], sizes = [8, 128], strides = [1, 1]} : vector<8x384xf32> to vector<8x128xf32>
    %133 = vector.extract_strided_slice %123 {offsets = [0, 128], sizes = [8, 128], strides = [1, 1]} : vector<8x384xf32> to vector<8x128xf32>
    %134 = arith.addf %132, %133 : vector<8x128xf32>
    %135 = arith.negf %134 : vector<8x128xf32>
    %136 = math.exp %135 : vector<8x128xf32>
    %cst_36 = arith.constant 1.000000e+00 : f32
    %137 = vector.broadcast %cst_36 : f32 to vector<8x128xf32>
    %138 = arith.addf %137, %136 : vector<8x128xf32>
    %139 = arith.divf %137, %138 : vector<8x128xf32>
    %140 = vector.extract_strided_slice %121 {offsets = [0, 256], sizes = [8, 128], strides = [1, 1]} : vector<8x384xf32> to vector<8x128xf32>
    %141 = vector.extract_strided_slice %123 {offsets = [0, 256], sizes = [8, 128], strides = [1, 1]} : vector<8x384xf32> to vector<8x128xf32>
    %142 = vector.broadcast %8 : vector<1x128xf32> to vector<8x128xf32>
    %143 = arith.addf %141, %142 : vector<8x128xf32>
    %144 = arith.mulf %131, %143 : vector<8x128xf32>
    %145 = arith.addf %140, %144 : vector<8x128xf32>
    %146 = math.tanh %145 : vector<8x128xf32>
    %cst_37 = arith.constant 1.000000e+00 : f32
    %147 = vector.broadcast %cst_37 : f32 to vector<8x128xf32>
    %148 = arith.subf %147, %139 : vector<8x128xf32>
    %149 = arith.mulf %148, %146 : vector<8x128xf32>
    %150 = arith.mulf %139, %115 : vector<8x128xf32>
    %151 = arith.addf %149, %150 : vector<8x128xf32>
    %152 = arith.index_cast %119 : i32 to index
    %c0_38 = arith.constant 0 : index
    %153 = vector.load %arg6[%152, %c0_38] : memref<64x128xf32, #tpu.memory_space<vmem>>, vector<8x128xf32>
    tpu.vector_store %arg6[%152, %c0_38], %151 {strides = array<i32>} : memref<64x128xf32, #tpu.memory_space<vmem>>, vector<8x128xf32>,
    %c4_i32 = arith.constant 4 : i32
    %c8_i32_39 = arith.constant 8 : i32
    %154 = arith.muli %c4_i32, %c8_i32_39 : i32
    %155 = tpu.assume_multiple %154, 8 : i32
    %156 = arith.index_cast %155 : i32 to index
    %c0_40 = arith.constant 0 : index
    %157 = vector.load %arg7[%156, %c0_40] : memref<64x384xf32, #tpu.memory_space<vmem>>, vector<8x384xf32>
    %158 = arith.truncf %151 : vector<8x128xf32> to vector<8x128xbf16>
    %cst_41 = arith.constant dense<0.000000e+00> : vector<8x384xf32>
    %159 = tpu.matmul %158, %7, %cst_41 {dimension_numbers = #tpu.dot_dimension_numbers<[1], [0], [0], [1], [0, 0, 1, 1], [], []>} : vector<8x128xbf16>, vector<128x384xbf16>, vector<8x384xf32> -> vector<8x384xf32>
    %160 = vector.extract_strided_slice %157 {offsets = [0, 0], sizes = [8, 128], strides = [1, 1]} : vector<8x384xf32> to vector<8x128xf32>
    %161 = vector.extract_strided_slice %159 {offsets = [0, 0], sizes = [8, 128], strides = [1, 1]} : vector<8x384xf32> to vector<8x128xf32>
    %162 = arith.addf %160, %161 : vector<8x128xf32>
    %163 = arith.negf %162 : vector<8x128xf32>
    %164 = math.exp %163 : vector<8x128xf32>
    %cst_42 = arith.constant 1.000000e+00 : f32
    %165 = vector.broadcast %cst_42 : f32 to vector<8x128xf32>
    %166 = arith.addf %165, %164 : vector<8x128xf32>
    %167 = arith.divf %165, %166 : vector<8x128xf32>
    %168 = vector.extract_strided_slice %157 {offsets = [0, 128], sizes = [8, 128], strides = [1, 1]} : vector<8x384xf32> to vector<8x128xf32>
    %169 = vector.extract_strided_slice %159 {offsets = [0, 128], sizes = [8, 128], strides = [1, 1]} : vector<8x384xf32> to vector<8x128xf32>
    %170 = arith.addf %168, %169 : vector<8x128xf32>
    %171 = arith.negf %170 : vector<8x128xf32>
    %172 = math.exp %171 : vector<8x128xf32>
    %cst_43 = arith.constant 1.000000e+00 : f32
    %173 = vector.broadcast %cst_43 : f32 to vector<8x128xf32>
    %174 = arith.addf %173, %172 : vector<8x128xf32>
    %175 = arith.divf %173, %174 : vector<8x128xf32>
    %176 = vector.extract_strided_slice %157 {offsets = [0, 256], sizes = [8, 128], strides = [1, 1]} : vector<8x384xf32> to vector<8x128xf32>
    %177 = vector.extract_strided_slice %159 {offsets = [0, 256], sizes = [8, 128], strides = [1, 1]} : vector<8x384xf32> to vector<8x128xf32>
    %178 = vector.broadcast %8 : vector<1x128xf32> to vector<8x128xf32>
    %179 = arith.addf %177, %178 : vector<8x128xf32>
    %180 = arith.mulf %167, %179 : vector<8x128xf32>
    %181 = arith.addf %176, %180 : vector<8x128xf32>
    %182 = math.tanh %181 : vector<8x128xf32>
    %cst_44 = arith.constant 1.000000e+00 : f32
    %183 = vector.broadcast %cst_44 : f32 to vector<8x128xf32>
    %184 = arith.subf %183, %175 : vector<8x128xf32>
    %185 = arith.mulf %184, %182 : vector<8x128xf32>
    %186 = arith.mulf %175, %151 : vector<8x128xf32>
    %187 = arith.addf %185, %186 : vector<8x128xf32>
    %188 = arith.index_cast %155 : i32 to index
    %c0_45 = arith.constant 0 : index
    %189 = vector.load %arg6[%188, %c0_45] : memref<64x128xf32, #tpu.memory_space<vmem>>, vector<8x128xf32>
    tpu.vector_store %arg6[%188, %c0_45], %187 {strides = array<i32>} : memref<64x128xf32, #tpu.memory_space<vmem>>, vector<8x128xf32>,
    %c5_i32 = arith.constant 5 : i32
    %c8_i32_46 = arith.constant 8 : i32
    %190 = arith.muli %c5_i32, %c8_i32_46 : i32
    %191 = tpu.assume_multiple %190, 8 : i32
    %192 = arith.index_cast %191 : i32 to index
    %c0_47 = arith.constant 0 : index
    %193 = vector.load %arg7[%192, %c0_47] : memref<64x384xf32, #tpu.memory_space<vmem>>, vector<8x384xf32>
    %194 = arith.truncf %187 : vector<8x128xf32> to vector<8x128xbf16>
    %cst_48 = arith.constant dense<0.000000e+00> : vector<8x384xf32>
    %195 = tpu.matmul %194, %7, %cst_48 {dimension_numbers = #tpu.dot_dimension_numbers<[1], [0], [0], [1], [0, 0, 1, 1], [], []>} : vector<8x128xbf16>, vector<128x384xbf16>, vector<8x384xf32> -> vector<8x384xf32>
    %196 = vector.extract_strided_slice %193 {offsets = [0, 0], sizes = [8, 128], strides = [1, 1]} : vector<8x384xf32> to vector<8x128xf32>
    %197 = vector.extract_strided_slice %195 {offsets = [0, 0], sizes = [8, 128], strides = [1, 1]} : vector<8x384xf32> to vector<8x128xf32>
    %198 = arith.addf %196, %197 : vector<8x128xf32>
    %199 = arith.negf %198 : vector<8x128xf32>
    %200 = math.exp %199 : vector<8x128xf32>
    %cst_49 = arith.constant 1.000000e+00 : f32
    %201 = vector.broadcast %cst_49 : f32 to vector<8x128xf32>
    %202 = arith.addf %201, %200 : vector<8x128xf32>
    %203 = arith.divf %201, %202 : vector<8x128xf32>
    %204 = vector.extract_strided_slice %193 {offsets = [0, 128], sizes = [8, 128], strides = [1, 1]} : vector<8x384xf32> to vector<8x128xf32>
    %205 = vector.extract_strided_slice %195 {offsets = [0, 128], sizes = [8, 128], strides = [1, 1]} : vector<8x384xf32> to vector<8x128xf32>
    %206 = arith.addf %204, %205 : vector<8x128xf32>
    %207 = arith.negf %206 : vector<8x128xf32>
    %208 = math.exp %207 : vector<8x128xf32>
    %cst_50 = arith.constant 1.000000e+00 : f32
    %209 = vector.broadcast %cst_50 : f32 to vector<8x128xf32>
    %210 = arith.addf %209, %208 : vector<8x128xf32>
    %211 = arith.divf %209, %210 : vector<8x128xf32>
    %212 = vector.extract_strided_slice %193 {offsets = [0, 256], sizes = [8, 128], strides = [1, 1]} : vector<8x384xf32> to vector<8x128xf32>
    %213 = vector.extract_strided_slice %195 {offsets = [0, 256], sizes = [8, 128], strides = [1, 1]} : vector<8x384xf32> to vector<8x128xf32>
    %214 = vector.broadcast %8 : vector<1x128xf32> to vector<8x128xf32>
    %215 = arith.addf %213, %214 : vector<8x128xf32>
    %216 = arith.mulf %203, %215 : vector<8x128xf32>
    %217 = arith.addf %212, %216 : vector<8x128xf32>
    %218 = math.tanh %217 : vector<8x128xf32>
    %cst_51 = arith.constant 1.000000e+00 : f32
    %219 = vector.broadcast %cst_51 : f32 to vector<8x128xf32>
    %220 = arith.subf %219, %211 : vector<8x128xf32>
    %221 = arith.mulf %220, %218 : vector<8x128xf32>
    %222 = arith.mulf %211, %187 : vector<8x128xf32>
    %223 = arith.addf %221, %222 : vector<8x128xf32>
    %224 = arith.index_cast %191 : i32 to index
    %c0_52 = arith.constant 0 : index
    %225 = vector.load %arg6[%224, %c0_52] : memref<64x128xf32, #tpu.memory_space<vmem>>, vector<8x128xf32>
    tpu.vector_store %arg6[%224, %c0_52], %223 {strides = array<i32>} : memref<64x128xf32, #tpu.memory_space<vmem>>, vector<8x128xf32>,
    %c6_i32 = arith.constant 6 : i32
    %c8_i32_53 = arith.constant 8 : i32
    %226 = arith.muli %c6_i32, %c8_i32_53 : i32
    %227 = tpu.assume_multiple %226, 8 : i32
    %228 = arith.index_cast %227 : i32 to index
    %c0_54 = arith.constant 0 : index
    %229 = vector.load %arg7[%228, %c0_54] : memref<64x384xf32, #tpu.memory_space<vmem>>, vector<8x384xf32>
    %230 = arith.truncf %223 : vector<8x128xf32> to vector<8x128xbf16>
    %cst_55 = arith.constant dense<0.000000e+00> : vector<8x384xf32>
    %231 = tpu.matmul %230, %7, %cst_55 {dimension_numbers = #tpu.dot_dimension_numbers<[1], [0], [0], [1], [0, 0, 1, 1], [], []>} : vector<8x128xbf16>, vector<128x384xbf16>, vector<8x384xf32> -> vector<8x384xf32>
    %232 = vector.extract_strided_slice %229 {offsets = [0, 0], sizes = [8, 128], strides = [1, 1]} : vector<8x384xf32> to vector<8x128xf32>
    %233 = vector.extract_strided_slice %231 {offsets = [0, 0], sizes = [8, 128], strides = [1, 1]} : vector<8x384xf32> to vector<8x128xf32>
    %234 = arith.addf %232, %233 : vector<8x128xf32>
    %235 = arith.negf %234 : vector<8x128xf32>
    %236 = math.exp %235 : vector<8x128xf32>
    %cst_56 = arith.constant 1.000000e+00 : f32
    %237 = vector.broadcast %cst_56 : f32 to vector<8x128xf32>
    %238 = arith.addf %237, %236 : vector<8x128xf32>
    %239 = arith.divf %237, %238 : vector<8x128xf32>
    %240 = vector.extract_strided_slice %229 {offsets = [0, 128], sizes = [8, 128], strides = [1, 1]} : vector<8x384xf32> to vector<8x128xf32>
    %241 = vector.extract_strided_slice %231 {offsets = [0, 128], sizes = [8, 128], strides = [1, 1]} : vector<8x384xf32> to vector<8x128xf32>
    %242 = arith.addf %240, %241 : vector<8x128xf32>
    %243 = arith.negf %242 : vector<8x128xf32>
    %244 = math.exp %243 : vector<8x128xf32>
    %cst_57 = arith.constant 1.000000e+00 : f32
    %245 = vector.broadcast %cst_57 : f32 to vector<8x128xf32>
    %246 = arith.addf %245, %244 : vector<8x128xf32>
    %247 = arith.divf %245, %246 : vector<8x128xf32>
    %248 = vector.extract_strided_slice %229 {offsets = [0, 256], sizes = [8, 128], strides = [1, 1]} : vector<8x384xf32> to vector<8x128xf32>
    %249 = vector.extract_strided_slice %231 {offsets = [0, 256], sizes = [8, 128], strides = [1, 1]} : vector<8x384xf32> to vector<8x128xf32>
    %250 = vector.broadcast %8 : vector<1x128xf32> to vector<8x128xf32>
    %251 = arith.addf %249, %250 : vector<8x128xf32>
    %252 = arith.mulf %239, %251 : vector<8x128xf32>
    %253 = arith.addf %248, %252 : vector<8x128xf32>
    %254 = math.tanh %253 : vector<8x128xf32>
    %cst_58 = arith.constant 1.000000e+00 : f32
    %255 = vector.broadcast %cst_58 : f32 to vector<8x128xf32>
    %256 = arith.subf %255, %247 : vector<8x128xf32>
    %257 = arith.mulf %256, %254 : vector<8x128xf32>
    %258 = arith.mulf %247, %223 : vector<8x128xf32>
    %259 = arith.addf %257, %258 : vector<8x128xf32>
    %260 = arith.index_cast %227 : i32 to index
    %c0_59 = arith.constant 0 : index
    %261 = vector.load %arg6[%260, %c0_59] : memref<64x128xf32, #tpu.memory_space<vmem>>, vector<8x128xf32>
    tpu.vector_store %arg6[%260, %c0_59], %259 {strides = array<i32>} : memref<64x128xf32, #tpu.memory_space<vmem>>, vector<8x128xf32>,
    %c7_i32 = arith.constant 7 : i32
    %c8_i32_60 = arith.constant 8 : i32
    %262 = arith.muli %c7_i32, %c8_i32_60 : i32
    %263 = tpu.assume_multiple %262, 8 : i32
    %264 = arith.index_cast %263 : i32 to index
    %c0_61 = arith.constant 0 : index
    %265 = vector.load %arg7[%264, %c0_61] : memref<64x384xf32, #tpu.memory_space<vmem>>, vector<8x384xf32>
    %266 = arith.truncf %259 : vector<8x128xf32> to vector<8x128xbf16>
    %cst_62 = arith.constant dense<0.000000e+00> : vector<8x384xf32>
    %267 = tpu.matmul %266, %7, %cst_62 {dimension_numbers = #tpu.dot_dimension_numbers<[1], [0], [0], [1], [0, 0, 1, 1], [], []>} : vector<8x128xbf16>, vector<128x384xbf16>, vector<8x384xf32> -> vector<8x384xf32>
    %268 = vector.extract_strided_slice %265 {offsets = [0, 0], sizes = [8, 128], strides = [1, 1]} : vector<8x384xf32> to vector<8x128xf32>
    %269 = vector.extract_strided_slice %267 {offsets = [0, 0], sizes = [8, 128], strides = [1, 1]} : vector<8x384xf32> to vector<8x128xf32>
    %270 = arith.addf %268, %269 : vector<8x128xf32>
    %271 = arith.negf %270 : vector<8x128xf32>
    %272 = math.exp %271 : vector<8x128xf32>
    %cst_63 = arith.constant 1.000000e+00 : f32
    %273 = vector.broadcast %cst_63 : f32 to vector<8x128xf32>
    %274 = arith.addf %273, %272 : vector<8x128xf32>
    %275 = arith.divf %273, %274 : vector<8x128xf32>
    %276 = vector.extract_strided_slice %265 {offsets = [0, 128], sizes = [8, 128], strides = [1, 1]} : vector<8x384xf32> to vector<8x128xf32>
    %277 = vector.extract_strided_slice %267 {offsets = [0, 128], sizes = [8, 128], strides = [1, 1]} : vector<8x384xf32> to vector<8x128xf32>
    %278 = arith.addf %276, %277 : vector<8x128xf32>
    %279 = arith.negf %278 : vector<8x128xf32>
    %280 = math.exp %279 : vector<8x128xf32>
    %cst_64 = arith.constant 1.000000e+00 : f32
    %281 = vector.broadcast %cst_64 : f32 to vector<8x128xf32>
    %282 = arith.addf %281, %280 : vector<8x128xf32>
    %283 = arith.divf %281, %282 : vector<8x128xf32>
    %284 = vector.extract_strided_slice %265 {offsets = [0, 256], sizes = [8, 128], strides = [1, 1]} : vector<8x384xf32> to vector<8x128xf32>
    %285 = vector.extract_strided_slice %267 {offsets = [0, 256], sizes = [8, 128], strides = [1, 1]} : vector<8x384xf32> to vector<8x128xf32>
    %286 = vector.broadcast %8 : vector<1x128xf32> to vector<8x128xf32>
    %287 = arith.addf %285, %286 : vector<8x128xf32>
    %288 = arith.mulf %275, %287 : vector<8x128xf32>
    %289 = arith.addf %284, %288 : vector<8x128xf32>
    %290 = math.tanh %289 : vector<8x128xf32>
    %cst_65 = arith.constant 1.000000e+00 : f32
    %291 = vector.broadcast %cst_65 : f32 to vector<8x128xf32>
    %292 = arith.subf %291, %283 : vector<8x128xf32>
    %293 = arith.mulf %292, %290 : vector<8x128xf32>
    %294 = arith.mulf %283, %259 : vector<8x128xf32>
    %295 = arith.addf %293, %294 : vector<8x128xf32>
    %296 = arith.index_cast %263 : i32 to index
    %c0_66 = arith.constant 0 : index
    %297 = vector.load %arg6[%296, %c0_66] : memref<64x128xf32, #tpu.memory_space<vmem>>, vector<8x128xf32>
    tpu.vector_store %arg6[%296, %c0_66], %295 {strides = array<i32>} : memref<64x128xf32, #tpu.memory_space<vmem>>, vector<8x128xf32>,
    %c8_i32_67 = arith.constant 8 : i32
    return
  }
  func.func @transform_0(%arg0: i32) -> (i32, i32) {
    %c0_i32 = arith.constant 0 : i32
    %c0_i32_0 = arith.constant 0 : i32
    %c0_i32_1 = arith.constant 0 : i32
    return %c0_i32, %c0_i32_0 : i32, i32
  }
  func.func @transform_1(%arg0: i32) -> (i32, i32) {
    %c0_i32 = arith.constant 0 : i32
    %c0_i32_0 = arith.constant 0 : i32
    %c0_i32_1 = arith.constant 0 : i32
    return %c0_i32, %c0_i32_0 : i32, i32
  }
  func.func @transform_2(%arg0: i32) -> (i32, i32) {
    %c0_i32 = arith.constant 0 : i32
    %c0_i32_0 = arith.constant 0 : i32
    %c0_i32_1 = arith.constant 0 : i32
    return %c0_i32, %c0_i32_0 : i32, i32
  }
  func.func @transform_3(%arg0: i32) -> (i32, i32) {
    %c0_i32 = arith.constant 0 : i32
    %c0_i32_0 = arith.constant 0 : i32
    %c0_i32_1 = arith.constant 0 : i32
    return %c0_i32, %c0_i32_0 : i32, i32
  }
  func.func @transform_4(%arg0: i32) -> (i32, i32) {
    %c0_i32 = arith.constant 0 : i32
    %c0_i32_0 = arith.constant 0 : i32
    %c0_i32_1 = arith.constant 0 : i32
    return %c0_i32, %c0_i32_0 : i32, i32
  }
  func.func @transform_5(%arg0: i32) -> (i32, i32) {
    %c0_i32 = arith.constant 0 : i32
    %c0_i32_0 = arith.constant 0 : i32
    %c0_i32_1 = arith.constant 0 : i32
    return %c0_i32, %c0_i32_0 : i32, i32
  }
}

</mosaic_0001>

<llo_original>
// kernel: seq2seq_encoder_forward.2
$region0: #{seq2seq_encoder_forward.2}
  #allocation0 [shape = 'u32[]', space=smem, size = 0x4, offset = 0x4, fixed_abs, tag = 'smem constant byte address 0x4 - core index']
  #allocation1 [shape = 'u32[72,128]{1,0:T(1,128)}', space=vmem, size = 0x9000, scoped, tag = 'internal scratch']
  #allocation2 [shape = 'f32[64,384]{1,0:T(8,128)}', space=vmem, size = 0x18000, scoped, tag = 'scratch operand']
  %s0 = inlined_call_operand.vmem [shape: bf16[64,16], index: 0, kind: input, shape index: {}]
  %s1 = inlined_call_operand.hbm [shape: bf16[16,384], index: 1, kind: input, shape index: {}]
  %s2 = inlined_call_operand.hbm [shape: bf16[128,384], index: 2, kind: input, shape index: {}]
  %s3 = inlined_call_operand.vmem [shape: f32[1,384], index: 3, kind: input, shape index: {}]
  %s4 = inlined_call_operand.vmem [shape: f32[1,128], index: 4, kind: input, shape index: {}]
  %s5 = inlined_call_operand.vmem [shape: f32[64,128], index: 5, kind: output, shape index: {}]
  %s6 = sld [smem:[#allocation0]]
  $region38: #{seq2seq_encoder_forward.2} parent=0
    _
  %s8 = ssub.s32 1, %s6
  %s9 = scalar_select 0, %s8, %s6
  $region1: #{seq2seq_encoder_forward.2} parent=0
    #allocation3 [shape = 'u8[12288]{0}', space=vmem, size = 0x3000, scoped, tag = 'input window, operand 1, single buffered']
    #allocation4 [shape = 's32[1]{0}', space=sflag, size = 0x4, scoped, tag = 'scoped memory for seq2seq_encoder_forward.2']
    #allocation5 [shape = 'u8[98304]{0}', space=vmem, size = 0x18000, scoped, tag = 'input window, operand 2, single buffered']
    #allocation6 [shape = 's32[1]{0}', space=sflag, size = 0x4, scoped, tag = 'scoped memory for seq2seq_encoder_forward.2']
    %10 = vsyncpa [#allocation4], 0
    %11 = vsyncpa [#allocation6], 0
    // Predicated region
    $region2: #{seq2seq_encoder_forward.2} parent=1 // pred_check
      _
    $region3: #{seq2seq_encoder_forward.2} parent=1 // pred_check_branch
      %13 = sbr.rel (0) target = $region5
    $region4: #{seq2seq_encoder_forward.2} parent=1 // pred_region
      _
    $region5: #{seq2seq_encoder_forward.2} parent=1 // pred_fallthru
      _
    // Predicated region
    $region6: #{seq2seq_encoder_forward.2} parent=1 // pred_check
      _
    $region7: #{seq2seq_encoder_forward.2} parent=1 // pred_check_branch
      %15 = sbr.rel (0) target = $region9
    $region8: #{seq2seq_encoder_forward.2} parent=1 // pred_region
      %17 = vsyncadd [#allocation4], 0
      %s18 = sshll.u32 %s1, 4
      %s19 = int_to_ptr.hbm [resolvable:$true] %s18
      %s20 = sshll.u32 [#allocation3], 4
      %s21 = int_to_ptr.vmem [resolvable:$true] %s20
      %26 = dma.hbm_to_vmem [thread:$0]  %s19, 384, %s21, [#allocation4], 192, 192, 12
    $region9: #{seq2seq_encoder_forward.2} parent=1 // pred_fallthru
      _
    // Predicated region
    $region10: #{seq2seq_encoder_forward.2} parent=1 // pred_check
      _
    $region11: #{seq2seq_encoder_forward.2} parent=1 // pred_check_branch
      %28 = sbr.rel (0) target = $region13
    $region12: #{seq2seq_encoder_forward.2} parent=1 // pred_region
      %30 = vsyncadd [#allocation6], 0
      %s31 = sshll.u32 %s2, 4
      %s32 = int_to_ptr.hbm [resolvable:$true] %s31
      %s33 = sshll.u32 [#allocation5], 4
      %s34 = int_to_ptr.vmem [resolvable:$true] %s33
      %39 = dma.hbm_to_vmem [thread:$0]  %s32, 3072, %s34, [#allocation6], 192, 192, 12
    $region13: #{seq2seq_encoder_forward.2} parent=1 // pred_fallthru
      _
    // Predicated region
    $region14: #{seq2seq_encoder_forward.2} parent=1 // pred_check
      _
    $region15: #{seq2seq_encoder_forward.2} parent=1 // pred_check_branch
      %41 = sbr.rel (0) target = $region17
    $region16: #{seq2seq_encoder_forward.2} parent=1 // pred_region
      _
    $region17: #{seq2seq_encoder_forward.2} parent=1 // pred_fallthru
      _
    // Predicated region
    $region18: #{seq2seq_encoder_forward.2} parent=1 // pred_check
      _
    $region19: #{seq2seq_encoder_forward.2} parent=1 // pred_check_branch
      %43 = sbr.rel (0) target = $region21
    $region20: #{seq2seq_encoder_forward.2} parent=1 // pred_region
      _
    $region21: #{seq2seq_encoder_forward.2} parent=1 // pred_fallthru
      _
    // Predicated region
    $region22: #{seq2seq_encoder_forward.2} parent=1 // pred_check
      _
    $region23: #{seq2seq_encoder_forward.2} parent=1 // pred_check_branch
      %45 = sbr.rel (0) target = $region25
    $region24: #{seq2seq_encoder_forward.2} parent=1 // pred_region
      %47 = dma.done [#allocation4], 384
    $region25: #{seq2seq_encoder_forward.2} parent=1 // pred_fallthru
      _
    // Predicated region
    $region26: #{seq2seq_encoder_forward.2} parent=1 // pred_check
      _
    $region27: #{seq2seq_encoder_forward.2} parent=1 // pred_check_branch
      %49 = sbr.rel (0) target = $region29
    $region28: #{seq2seq_encoder_forward.2} parent=1 // pred_region
      %51 = dma.done [#allocation6], 3072
    $region29: #{seq2seq_encoder_forward.2} parent=1 // pred_fallthru
      _
    %v53 = vld [vmem:[%s0] sm:$0xf]
    %v54 = vld [vmem:[%s0 + $0x4] sm:$0xf]
    %v55 = vld [vmem:[%s0 + $0x8] sm:$0xf]
    %v56 = vld [vmem:[%s0 + $0xc] sm:$0xf]
    %v57 = vld [vmem:[%s0 + $0x10] sm:$0xf]
    %v58 = vld [vmem:[%s0 + $0x14] sm:$0xf]
    %v59 = vld [vmem:[%s0 + $0x18] sm:$0xf]
    %v60 = vld [vmem:[%s0 + $0x1c] sm:$0xf]
    %v61 = vld [vmem:[#allocation3] sm:$0xff]
    %v62 = vld [vmem:[#allocation3 + $0x8] sm:$0xf]
    %v63 = vld [vmem:[#allocation3 + $0xc] sm:$0xff]
    %v64 = vld [vmem:[#allocation3 + $0x14] sm:$0xf]
    %v65 = vld [vmem:[%s3] sm:$0x7]
    %v67 = vperm.slane %v65, 0
    %v68 = vperm.slane %v65, 1
    %v69 = vperm.slane %v65, 2
    %v81 = vunpack.c.l.b16 %v53
    %v82 = vunpack.c.l.b16 %v54
    %v83 = vunpack.c.l.b16 %v55
    %v84 = vunpack.c.l.b16 %v56
    %v85 = vunpack.c.l.b16 %v57
    %v86 = vunpack.c.l.b16 %v58
    %v87 = vunpack.c.l.b16 %v59
    %v88 = vunpack.c.l.b16 %v60
    %v89 = vpack.c.b16 %v82, %v81
    %v90 = vpack.c.b16 %v84, %v83
    %v91 = vpack.c.b16 %v86, %v85
    %v92 = vpack.c.b16 %v88, %v87
    %v97 = vunpack.c.l.b16 %v61
    %v98 = vunpack.c.h.b16 %v61
    %v99 = vunpack.c.l.b16 %v62
    %v100 = vunpack.c.l.b16 %v63
    %v101 = vunpack.c.h.b16 %v63
    %v102 = vunpack.c.l.b16 %v64
    %v103 = vpack.c.b16 %v100, %v97
    %v104 = vpack.c.b16 %v101, %v98
    %v105 = vpack.c.b16 %v102, %v99
    %vm109 = vcmask 130048
    %v111 = vsel %vm109, %v89, 0
    %v114 = vsel %vm109, %v90, 0
    %v117 = vsel %vm109, %v91, 0
    %v120 = vsel %vm109, %v92, 0
    %122 = vmatpush.bf16.msra.mxu0 0
    %123 = vmatpush.bf16.msra.mxu0 0
    %124 = vmatpush.bf16.msra.mxu0 0
    %125 = vmatpush.bf16.msra.mxu0 0
    %126 = vmatpush.bf16.msra.mxu0 0
    %127 = vmatpush.bf16.msra.mxu0 0
    %128 = vmatpush.bf16.msra.mxu0 0
    %129 = vmatpush.bf16.msra.mxu0 %v103
    %130 = vmatmul.bf16.gmra.mxu0 %v111
    %v131 = vpop.f32.mrf.mxu0
    %v132 = vadd.f32 %v67, %v131
    %v133 = vpop.f32.mrf.mxu0
    %v134 = vadd.f32 %v67, %v133
    %135 = vmatmul.bf16.gmra.mxu0 %v114
    %v136 = vpop.f32.mrf.mxu0
    %v137 = vadd.f32 %v67, %v136
    %v138 = vpop.f32.mrf.mxu0
    %v139 = vadd.f32 %v67, %v138
    %140 = vmatmul.bf16.gmra.mxu0 %v117
    %v141 = vpop.f32.mrf.mxu0
    %v142 = vadd.f32 %v67, %v141
    %v143 = vpop.f32.mrf.mxu0
    %v144 = vadd.f32 %v67, %v143
    %145 = vmatmul.bf16.gmra.mxu0 %v120
    %v146 = vpop.f32.mrf.mxu0
    %v147 = vadd.f32 %v67, %v146
    %v148 = vpop.f32.mrf.mxu0
    %v149 = vadd.f32 %v67, %v148
    %150 = vdwg.mxu0
    %151 = vmatpush.bf16.msra.mxu0 0
    %152 = vmatpush.bf16.msra.mxu0 0
    %153 = vmatpush.bf16.msra.mxu0 0
    %154 = vmatpush.bf16.msra.mxu0 0
    %155 = vmatpush.bf16.msra.mxu0 0
    %156 = vmatpush.bf16.msra.mxu0 0
    %157 = vmatpush.bf16.msra.mxu0 0
    %158 = vmatpush.bf16.msra.mxu0 %v104
    %159 = vmatmul.bf16.gmra.mxu0 %v111
    %v160 = vpop.f32.mrf.mxu0
    %v161 = vadd.f32 %v68, %v160
    %v162 = vpop.f32.mrf.mxu0
    %v163 = vadd.f32 %v68, %v162
    %164 = vmatmul.bf16.gmra.mxu0 %v114
    %v165 = vpop.f32.mrf.mxu0
    %v166 = vadd.f32 %v68, %v165
    %v167 = vpop.f32.mrf.mxu0
    %v168 = vadd.f32 %v68, %v167
    %169 = vmatmul.bf16.gmra.mxu0 %v117
    %v170 = vpop.f32.mrf.mxu0
    %v171 = vadd.f32 %v68, %v170
    %v172 = vpop.f32.mrf.mxu0
    %v173 = vadd.f32 %v68, %v172
    %174 = vmatmul.bf16.gmra.mxu0 %v120
    %v175 = vpop.f32.mrf.mxu0
    %v176 = vadd.f32 %v68, %v175
    %v177 = vpop.f32.mrf.mxu0
    %v178 = vadd.f32 %v68, %v177
    %179 = vdwg.mxu0
    %180 = vmatpush.bf16.msra.mxu0 0
    %181 = vmatpush.bf16.msra.mxu0 0
    %182 = vmatpush.bf16.msra.mxu0 0
    %183 = vmatpush.bf16.msra.mxu0 0
    %184 = vmatpush.bf16.msra.mxu0 0
    %185 = vmatpush.bf16.msra.mxu0 0
    %186 = vmatpush.bf16.msra.mxu0 0
    %187 = vmatpush.bf16.msra.mxu0 %v105
    %188 = vmatmul.bf16.gmra.mxu0 %v111
    %v189 = vpop.f32.mrf.mxu0
    %v190 = vadd.f32 %v69, %v189
    %v191 = vpop.f32.mrf.mxu0
    %v192 = vadd.f32 %v69, %v191
    %193 = vmatmul.bf16.gmra.mxu0 %v114
    %v194 = vpop.f32.mrf.mxu0
    %v195 = vadd.f32 %v69, %v194
    %v196 = vpop.f32.mrf.mxu0
    %v197 = vadd.f32 %v69, %v196
    %198 = vmatmul.bf16.gmra.mxu0 %v117
    %v199 = vpop.f32.mrf.mxu0
    %v200 = vadd.f32 %v69, %v199
    %v201 = vpop.f32.mrf.mxu0
    %v202 = vadd.f32 %v69, %v201
    %203 = vmatmul.bf16.gmra.mxu0 %v120
    %v204 = vpop.f32.mrf.mxu0
    %v205 = vadd.f32 %v69, %v204
    %v206 = vpop.f32.mrf.mxu0
    %v207 = vadd.f32 %v69, %v206
    %208 = vdwg.mxu0
    %209 = vst [vmem:[#allocation2] sm:$0xff] %v132
    %210 = vst [vmem:[#allocation2 + $0x8] sm:$0xff] %v161
    %211 = vst [vmem:[#allocation2 + $0x10] sm:$0xff] %v190
    %212 = vst [vmem:[#allocation2 + $0x18] sm:$0xff] %v134
    %213 = vst [vmem:[#allocation2 + $0x20] sm:$0xff] %v163
    %214 = vst [vmem:[#allocation2 + $0x28] sm:$0xff] %v192
    %215 = vst [vmem:[#allocation2 + $0x30] sm:$0xff] %v137
    %216 = vst [vmem:[#allocation2 + $0x38] sm:$0xff] %v166
    %217 = vst [vmem:[#allocation2 + $0x40] sm:$0xff] %v195
    %218 = vst [vmem:[#allocation2 + $0x48] sm:$0xff] %v139
    %219 = vst [vmem:[#allocation2 + $0x50] sm:$0xff] %v168
    %220 = vst [vmem:[#allocation2 + $0x58] sm:$0xff] %v197
    %221 = vst [vmem:[#allocation2 + $0x60] sm:$0xff] %v142
    %222 = vst [vmem:[#allocation2 + $0x68] sm:$0xff] %v171
    %223 = vst [vmem:[#allocation2 + $0x70] sm:$0xff] %v200
    %224 = vst [vmem:[#allocation2 + $0x78] sm:$0xff] %v144
    %225 = vst [vmem:[#allocation2 + $0x80] sm:$0xff] %v173
    %226 = vst [vmem:[#allocation2 + $0x88] sm:$0xff] %v202
    %227 = vst [vmem:[#allocation2 + $0x90] sm:$0xff] %v147
    %228 = vst [vmem:[#allocation2 + $0x98] sm:$0xff] %v176
    %229 = vst [vmem:[#allocation2 + $0xa0] sm:$0xff] %v205
    %230 = vst [vmem:[#allocation2 + $0xa8] sm:$0xff] %v149
    %231 = vst [vmem:[#allocation2 + $0xb0] sm:$0xff] %v178
    %232 = vst [vmem:[#allocation2 + $0xb8] sm:$0xff] %v207
    %v233 = vld [vmem:[#allocation5] sm:$0xff]
    %v234 = vld [vmem:[#allocation5 + $0x8] sm:$0xf]
    %v235 = vld [vmem:[#allocation5 + $0xc] sm:$0xff]
    %v236 = vld [vmem:[#allocation5 + $0x14] sm:$0xf]
    %v237 = vld [vmem:[#allocation5 + $0x18] sm:$0xff]
    %v238 = vld [vmem:[#allocation5 + $0x20] sm:$0xf]
    %v239 = vld [vmem:[#allocation5 + $0x24] sm:$0xff]
    %v240 = vld [vmem:[#allocation5 + $0x2c] sm:$0xf]
    %v241 = vld [vmem:[#allocation5 + $0x30] sm:$0xff]
    %v242 = vld [vmem:[#allocation5 + $0x38] sm:$0xf]
    %v243 = vld [vmem:[#allocation5 + $0x3c] sm:$0xff]
    %v244 = vld [vmem:[#allocation5 + $0x44] sm:$0xf]
    %v245 = vld [vmem:[#allocation5 + $0x48] sm:$0xff]
    %v246 = vld [vmem:[#allocation5 + $0x50] sm:$0xf]
    %v247 = vld [vmem:[#allocation5 + $0x54] sm:$0xff]
    %v248 = vld [vmem:[#allocation5 + $0x5c] sm:$0xf]
    %v249 = vld [vmem:[#allocation5 + $0x60] sm:$0xff]
    %v250 = vld [vmem:[#allocation5 + $0x68] sm:$0xf]
    %v251 = vld [vmem:[#allocation5 + $0x6c] sm:$0xff]
    %v252 = vld [vmem:[#allocation5 + $0x74] sm:$0xf]
    %v253 = vld [vmem:[#allocation5 + $0x78] sm:$0xff]
    %v254 = vld [vmem:[#allocation5 + $0x80] sm:$0xf]
    %v255 = vld [vmem:[#allocation5 + $0x84] sm:$0xff]
    %v256 = vld [vmem:[#allocation5 + $0x8c] sm:$0xf]
    %v257 = vld [vmem:[#allocation5 + $0x90] sm:$0xff]
    %v258 = vld [vmem:[#allocation5 + $0x98] sm:$0xf]
    %v259 = vld [vmem:[#allocation5 + $0x9c] sm:$0xff]
    %v260 = vld [vmem:[#allocation5 + $0xa4] sm:$0xf]
    %v261 = vld [vmem:[#allocation5 + $0xa8] sm:$0xff]
    %v262 = vld [vmem:[#allocation5 + $0xb0] sm:$0xf]
    %v263 = vld [vmem:[#allocation5 + $0xb4] sm:$0xff]
    %v264 = vld [vmem:[#allocation5 + $0xbc] sm:$0xf]
    %v265 = vld [vmem:[%s4] sm:$0x1]
    %s266 = smul.u32 0, 3
    %s267 = smul.addr %s266, 8
    %s268 = scalar_lea.vmem [#allocation2], %s267
    %v269 = vld [vmem:[%s268] sm:$0xff]
    %v270 = vld [vmem:[%s268 + $0x8] sm:$0xff]
    %v271 = vld [vmem:[%s268 + $0x10] sm:$0xff]
    %v304 = vunpack.c.l.b16 %v233
    %v305 = vunpack.c.h.b16 %v233
    %v306 = vunpack.c.l.b16 %v234
    %v307 = vunpack.c.l.b16 %v235
    %v308 = vunpack.c.h.b16 %v235
    %v309 = vunpack.c.l.b16 %v236
    %v310 = vunpack.c.l.b16 %v237
    %v311 = vunpack.c.h.b16 %v237
    %v312 = vunpack.c.l.b16 %v238
    %v313 = vunpack.c.l.b16 %v239
    %v314 = vunpack.c.h.b16 %v239
    %v315 = vunpack.c.l.b16 %v240
    %v316 = vunpack.c.l.b16 %v241
    %v317 = vunpack.c.h.b16 %v241
    %v318 = vunpack.c.l.b16 %v242
    %v319 = vunpack.c.l.b16 %v243
    %v320 = vunpack.c.h.b16 %v243
    %v321 = vunpack.c.l.b16 %v244
    %v322 = vunpack.c.l.b16 %v245
    %v323 = vunpack.c.h.b16 %v245
    %v324 = vunpack.c.l.b16 %v246
    %v325 = vunpack.c.l.b16 %v247
    %v326 = vunpack.c.h.b16 %v247
    %v327 = vunpack.c.l.b16 %v248
    %v328 = vunpack.c.l.b16 %v249
    %v329 = vunpack.c.h.b16 %v249
    %v330 = vunpack.c.l.b16 %v250
    %v331 = vunpack.c.l.b16 %v251
    %v332 = vunpack.c.h.b16 %v251
    %v333 = vunpack.c.l.b16 %v252
    %v334 = vunpack.c.l.b16 %v253
    %v335 = vunpack.c.h.b16 %v253
    %v336 = vunpack.c.l.b16 %v254
    %v337 = vunpack.c.l.b16 %v255
    %v338 = vunpack.c.h.b16 %v255
    %v339 = vunpack.c.l.b16 %v256
    %v340 = vunpack.c.l.b16 %v257
    %v341 = vunpack.c.h.b16 %v257
    %v342 = vunpack.c.l.b16 %v258
    %v343 = vunpack.c.l.b16 %v259
    %v344 = vunpack.c.h.b16 %v259
    %v345 = vunpack.c.l.b16 %v260
    %v346 = vunpack.c.l.b16 %v261
    %v347 = vunpack.c.h.b16 %v261
    %v348 = vunpack.c.l.b16 %v262
    %v349 = vunpack.c.l.b16 %v263
    %v350 = vunpack.c.h.b16 %v263
    %v351 = vunpack.c.l.b16 %v264
    %v352 = vpack.c.b16 %v307, %v304
    %v353 = vpack.c.b16 %v308, %v305
    %v354 = vpack.c.b16 %v309, %v306
    %v355 = vpack.c.b16 %v313, %v310
    %v356 = vpack.c.b16 %v314, %v311
    %v357 = vpack.c.b16 %v315, %v312
    %v358 = vpack.c.b16 %v319, %v316
    %v359 = vpack.c.b16 %v320, %v317
    %v360 = vpack.c.b16 %v321, %v318
    %v361 = vpack.c.b16 %v325, %v322
    %v362 = vpack.c.b16 %v326, %v323
    %v363 = vpack.c.b16 %v327, %v324
    %v364 = vpack.c.b16 %v331, %v328
    %v365 = vpack.c.b16 %v332, %v329
    %v366 = vpack.c.b16 %v333, %v330
    %v367 = vpack.c.b16 %v337, %v334
    %v368 = vpack.c.b16 %v338, %v335
    %v369 = vpack.c.b16 %v339, %v336
    %v370 = vpack.c.b16 %v343, %v340
    %v371 = vpack.c.b16 %v344, %v341
    %v372 = vpack.c.b16 %v345, %v342
    %v373 = vpack.c.b16 %v349, %v346
    %v374 = vpack.c.b16 %v350, %v347
    %v375 = vpack.c.b16 %v351, %v348
    %400 = vmatpush.bf16.msra.mxu0 %v373
    %401 = vmatpush.bf16.msra.mxu0 %v370
    %402 = vmatpush.bf16.msra.mxu0 %v367
    %403 = vmatpush.bf16.msra.mxu0 %v364
    %404 = vmatpush.bf16.msra.mxu0 %v361
    %405 = vmatpush.bf16.msra.mxu0 %v358
    %406 = vmatpush.bf16.msra.mxu0 %v355
    %407 = vmatpush.bf16.msra.mxu0 %v352
    %408 = vmatmul.bf16.gmra.mxu0 0
    %v409 = vpop.f32.mrf.mxu0
    %v410 = vadd.f32 0.0, %v409
    %v411 = vpop.f32.mrf.mxu0
    %412 = vdwg.mxu0
    %413 = vmatpush.bf16.msra.mxu0 %v374
    %414 = vmatpush.bf16.msra.mxu0 %v371
    %415 = vmatpush.bf16.msra.mxu0 %v368
    %416 = vmatpush.bf16.msra.mxu0 %v365
    %417 = vmatpush.bf16.msra.mxu0 %v362
    %418 = vmatpush.bf16.msra.mxu0 %v359
    %419 = vmatpush.bf16.msra.mxu0 %v356
    %420 = vmatpush.bf16.msra.mxu0 %v353
    %421 = vmatmul.bf16.gmra.mxu0 0
    %v422 = vpop.f32.mrf.mxu0
    %v423 = vadd.f32 0.0, %v422
    %v424 = vpop.f32.mrf.mxu0
    %425 = vdwg.mxu0
    %426 = vmatpush.bf16.msra.mxu0 %v375
    %427 = vmatpush.bf16.msra.mxu0 %v372
    %428 = vmatpush.bf16.msra.mxu0 %v369
    %429 = vmatpush.bf16.msra.mxu0 %v366
    %430 = vmatpush.bf16.msra.mxu0 %v363
    %431 = vmatpush.bf16.msra.mxu0 %v360
    %432 = vmatpush.bf16.msra.mxu0 %v357
    %433 = vmatpush.bf16.msra.mxu0 %v354
    %434 = vmatmul.bf16.gmra.mxu0 0
    %v435 = vpop.f32.mrf.mxu0
    %v436 = vadd.f32 0.0, %v435
    %v437 = vpop.f32.mrf.mxu0
    %438 = vdwg.mxu0
    %v439 = vadd.f32 %v269, %v410
    %v440 = vxor.u32 %v439, 2147483648
    %v441 = vmul.f32 %v440, 1.442695
    %v442 = vpow.pop %v441
    %v443 = vadd.f32 %v442, 1.0
    %v444 = vrcp.pop %v443
    %v445 = vmul.f32 %v443, %v444
    %v446 = vsub.f32 1.0, %v445
    %v447 = vmul.f32 %v444, %v446
    %v448 = vadd.f32 %v444, %v447
    %vm449 = vweird.f32 %v443
    %vm450 = vweird.f32 %v444
    %vm451 = vmor %vm449, %vm450
    %v452 = vsel %vm451, %v444, %v448
    %v453 = vand.u32 2147483647, %v443
    %vm454 = vcmp.eq.f32.partialorder %v453, 8.507059e+37
    %v455 = vand.u32 %v443, 2147483648
    %v456 = vor.u32 1.1754944e-38, %v455
    %v457 = vsel %vm454, %v456, %v452
    %v458 = vmul.f32 1.0, %v457
    %v459 = vadd.f32 %v270, %v423
    %v460 = vxor.u32 %v459, 2147483648
    %v461 = vmul.f32 %v460, 1.442695
    %v462 = vpow.pop %v461
    %v463 = vadd.f32 %v462, 1.0
    %v464 = vrcp.pop %v463
    %v465 = vmul.f32 %v463, %v464
    %v466 = vsub.f32 1.0, %v465
    %v467 = vmul.f32 %v464, %v466
    %v468 = vadd.f32 %v464, %v467
    %vm469 = vweird.f32 %v463
    %vm470 = vweird.f32 %v464
    %vm471 = vmor %vm469, %vm470
    %v472 = vsel %vm471, %v464, %v468
    %v473 = vand.u32 2147483647, %v463
    %vm474 = vcmp.eq.f32.partialorder %v473, 8.507059e+37
    %v475 = vand.u32 %v463, 2147483648
    %v476 = vor.u32 1.1754944e-38, %v475
    %v477 = vsel %vm474, %v476, %v472
    %v478 = vmul.f32 1.0, %v477
    %v480 = vperm.slane %v265, 0
    %v482 = vadd.f32 %v436, %v480
    %v483 = vmul.f32 %v458, %v482
    %v484 = vadd.f32 %v271, %v483
    %v485 = vtanh.pop %v484
    %v486 = vsub.f32 1.0, %v478
    %v487 = vmul.f32 %v486, %v485
    %v488 = vmul.f32 %v478, 0.0
    %v489 = vadd.f32 %v487, %v488
    %490 = vst [vmem:[%s5] sm:$0xff] %v489
    %s491 = smul.u32 1, 3
    %s492 = smul.addr %s491, 8
    %s493 = scalar_lea.vmem [#allocation2], %s492
    %v494 = vld [vmem:[%s493] sm:$0xff]
    %v495 = vld [vmem:[%s493 + $0x8] sm:$0xff]
    %v496 = vld [vmem:[%s493 + $0x10] sm:$0xff]
    %v497 = vpack.c.bf16 %v489, %v489
    %498 = vmatpush.bf16.msra.mxu0 %v373
    %499 = vmatpush.bf16.msra.mxu0 %v370
    %500 = vmatpush.bf16.msra.mxu0 %v367
    %501 = vmatpush.bf16.msra.mxu0 %v364
    %502 = vmatpush.bf16.msra.mxu0 %v361
    %503 = vmatpush.bf16.msra.mxu0 %v358
    %504 = vmatpush.bf16.msra.mxu0 %v355
    %505 = vmatpush.bf16.msra.mxu0 %v352
    %506 = vmatmul.bf16.gmra.mxu0 %v497
    %v507 = vpop.f32.mrf.mxu0
    %v508 = vadd.f32 0.0, %v507
    %v509 = vpop.f32.mrf.mxu0
    %510 = vdwg.mxu0
    %511 = vmatpush.bf16.msra.mxu0 %v374
    %512 = vmatpush.bf16.msra.mxu0 %v371
    %513 = vmatpush.bf16.msra.mxu0 %v368
    %514 = vmatpush.bf16.msra.mxu0 %v365
    %515 = vmatpush.bf16.msra.mxu0 %v362
    %516 = vmatpush.bf16.msra.mxu0 %v359
    %517 = vmatpush.bf16.msra.mxu0 %v356
    %518 = vmatpush.bf16.msra.mxu0 %v353
    %519 = vmatmul.bf16.gmra.mxu0 %v497
    %v520 = vpop.f32.mrf.mxu0
    %v521 = vadd.f32 0.0, %v520
    %v522 = vpop.f32.mrf.mxu0
    %523 = vdwg.mxu0
    %524 = vmatpush.bf16.msra.mxu0 %v375
    %525 = vmatpush.bf16.msra.mxu0 %v372
    %526 = vmatpush.bf16.msra.mxu0 %v369
    %527 = vmatpush.bf16.msra.mxu0 %v366
    %528 = vmatpush.bf16.msra.mxu0 %v363
    %529 = vmatpush.bf16.msra.mxu0 %v360
    %530 = vmatpush.bf16.msra.mxu0 %v357
    %531 = vmatpush.bf16.msra.mxu0 %v354
    %532 = vmatmul.bf16.gmra.mxu0 %v497
    %v533 = vpop.f32.mrf.mxu0
    %v534 = vadd.f32 0.0, %v533
    %v535 = vpop.f32.mrf.mxu0
    %536 = vdwg.mxu0
    %v537 = vadd.f32 %v494, %v508
    %v538 = vxor.u32 %v537, 2147483648
    %v539 = vmul.f32 %v538, 1.442695
    %v540 = vpow.pop %v539
    %v541 = vadd.f32 %v540, 1.0
    %v542 = vrcp.pop %v541
    %v543 = vmul.f32 %v541, %v542
    %v544 = vsub.f32 1.0, %v543
    %v545 = vmul.f32 %v542, %v544
    %v546 = vadd.f32 %v542, %v545
    %vm547 = vweird.f32 %v541
    %vm548 = vweird.f32 %v542
    %vm549 = vmor %vm547, %vm548
    %v550 = vsel %vm549, %v542, %v546
    %v551 = vand.u32 2147483647, %v541
    %vm552 = vcmp.eq.f32.partialorder %v551, 8.507059e+37
    %v553 = vand.u32 %v541, 2147483648
    %v554 = vor.u32 1.1754944e-38, %v553
    %v555 = vsel %vm552, %v554, %v550
    %v556 = vmul.f32 1.0, %v555
    %v557 = vadd.f32 %v495, %v521
    %v558 = vxor.u32 %v557, 2147483648
    %v559 = vmul.f32 %v558, 1.442695
    %v560 = vpow.pop %v559
    %v561 = vadd.f32 %v560, 1.0
    %v562 = vrcp.pop %v561
    %v563 = vmul.f32 %v561, %v562
    %v564 = vsub.f32 1.0, %v563
    %v565 = vmul.f32 %v562, %v564
    %v566 = vadd.f32 %v562, %v565
    %vm567 = vweird.f32 %v561
    %vm568 = vweird.f32 %v562
    %vm569 = vmor %vm567, %vm568
    %v570 = vsel %vm569, %v562, %v566
    %v571 = vand.u32 2147483647, %v561
    %vm572 = vcmp.eq.f32.partialorder %v571, 8.507059e+37
    %v573 = vand.u32 %v561, 2147483648
    %v574 = vor.u32 1.1754944e-38, %v573
    %v575 = vsel %vm572, %v574, %v570
    %v576 = vmul.f32 1.0, %v575
    %v577 = vadd.f32 %v534, %v480
    %v578 = vmul.f32 %v556, %v577
    %v579 = vadd.f32 %v496, %v578
    %v580 = vtanh.pop %v579
    %v581 = vsub.f32 1.0, %v576
    %v582 = vmul.f32 %v581, %v580
    %v583 = vmul.f32 %v576, %v489
    %v584 = vadd.f32 %v582, %v583
    %s585 = scalar_lea.vmem %s5, 8
    %586 = vst [vmem:[%s585] sm:$0xff] %v584
    %s587 = smul.u32 2, 3
    %s588 = smul.addr %s587, 8
    %s589 = scalar_lea.vmem [#allocation2], %s588
    %v590 = vld [vmem:[%s589] sm:$0xff]
    %v591 = vld [vmem:[%s589 + $0x8] sm:$0xff]
    %v592 = vld [vmem:[%s589 + $0x10] sm:$0xff]
    %v593 = vpack.c.bf16 %v584, %v584
    %594 = vmatpush.bf16.msra.mxu0 %v373
    %595 = vmatpush.bf16.msra.mxu0 %v370
    %596 = vmatpush.bf16.msra.mxu0 %v367
    %597 = vmatpush.bf16.msra.mxu0 %v364
    %598 = vmatpush.bf16.msra.mxu0 %v361
    %599 = vmatpush.bf16.msra.mxu0 %v358
    %600 = vmatpush.bf16.msra.mxu0 %v355
    %601 = vmatpush.bf16.msra.mxu0 %v352
    %602 = vmatmul.bf16.gmra.mxu0 %v593
    %v603 = vpop.f32.mrf.mxu0
    %v604 = vadd.f32 0.0, %v603
    %v605 = vpop.f32.mrf.mxu0
    %606 = vdwg.mxu0
    %607 = vmatpush.bf16.msra.mxu0 %v374
    %608 = vmatpush.bf16.msra.mxu0 %v371
    %609 = vmatpush.bf16.msra.mxu0 %v368
    %610 = vmatpush.bf16.msra.mxu0 %v365
    %611 = vmatpush.bf16.msra.mxu0 %v362
    %612 = vmatpush.bf16.msra.mxu0 %v359
    %613 = vmatpush.bf16.msra.mxu0 %v356
    %614 = vmatpush.bf16.msra.mxu0 %v353
    %615 = vmatmul.bf16.gmra.mxu0 %v593
    %v616 = vpop.f32.mrf.mxu0
    %v617 = vadd.f32 0.0, %v616
    %v618 = vpop.f32.mrf.mxu0
    %619 = vdwg.mxu0
    %620 = vmatpush.bf16.msra.mxu0 %v375
    %621 = vmatpush.bf16.msra.mxu0 %v372
    %622 = vmatpush.bf16.msra.mxu0 %v369
    %623 = vmatpush.bf16.msra.mxu0 %v366
    %624 = vmatpush.bf16.msra.mxu0 %v363
    %625 = vmatpush.bf16.msra.mxu0 %v360
    %626 = vmatpush.bf16.msra.mxu0 %v357
    %627 = vmatpush.bf16.msra.mxu0 %v354
    %628 = vmatmul.bf16.gmra.mxu0 %v593
    %v629 = vpop.f32.mrf.mxu0
    %v630 = vadd.f32 0.0, %v629
    %v631 = vpop.f32.mrf.mxu0
    %632 = vdwg.mxu0
    %v633 = vadd.f32 %v590, %v604
    %v634 = vxor.u32 %v633, 2147483648
    %v635 = vmul.f32 %v634, 1.442695
    %v636 = vpow.pop %v635
    %v637 = vadd.f32 %v636, 1.0
    %v638 = vrcp.pop %v637
    %v639 = vmul.f32 %v637, %v638
    %v640 = vsub.f32 1.0, %v639
    %v641 = vmul.f32 %v638, %v640
    %v642 = vadd.f32 %v638, %v641
    %vm643 = vweird.f32 %v637
    %vm644 = vweird.f32 %v638
    %vm645 = vmor %vm643, %vm644
    %v646 = vsel %vm645, %v638, %v642
    %v647 = vand.u32 2147483647, %v637
    %vm648 = vcmp.eq.f32.partialorder %v647, 8.507059e+37
    %v649 = vand.u32 %v637, 2147483648
    %v650 = vor.u32 1.1754944e-38, %v649
    %v651 = vsel %vm648, %v650, %v646
    %v652 = vmul.f32 1.0, %v651
    %v653 = vadd.f32 %v591, %v617
    %v654 = vxor.u32 %v653, 2147483648
    %v655 = vmul.f32 %v654, 1.442695
    %v656 = vpow.pop %v655
    %v657 = vadd.f32 %v656, 1.0
    %v658 = vrcp.pop %v657
    %v659 = vmul.f32 %v657, %v658
    %v660 = vsub.f32 1.0, %v659
    %v661 = vmul.f32 %v658, %v660
    %v662 = vadd.f32 %v658, %v661
    %vm663 = vweird.f32 %v657
    %vm664 = vweird.f32 %v658
    %vm665 = vmor %vm663, %vm664
    %v666 = vsel %vm665, %v658, %v662
    %v667 = vand.u32 2147483647, %v657
    %vm668 = vcmp.eq.f32.partialorder %v667, 8.507059e+37
    %v669 = vand.u32 %v657, 2147483648
    %v670 = vor.u32 1.1754944e-38, %v669
    %v671 = vsel %vm668, %v670, %v666
    %v672 = vmul.f32 1.0, %v671
    %v673 = vadd.f32 %v630, %v480
    %v674 = vmul.f32 %v652, %v673
    %v675 = vadd.f32 %v592, %v674
    %v676 = vtanh.pop %v675
    %v677 = vsub.f32 1.0, %v672
    %v678 = vmul.f32 %v677, %v676
    %v679 = vmul.f32 %v672, %v584
    %v680 = vadd.f32 %v678, %v679
    %s681 = scalar_lea.vmem %s5, 16
    %682 = vst [vmem:[%s681] sm:$0xff] %v680
    %s683 = smul.u32 3, 3
    %s684 = smul.addr %s683, 8
    %s685 = scalar_lea.vmem [#allocation2], %s684
    %v686 = vld [vmem:[%s685] sm:$0xff]
    %v687 = vld [vmem:[%s685 + $0x8] sm:$0xff]
    %v688 = vld [vmem:[%s685 + $0x10] sm:$0xff]
    %v689 = vpack.c.bf16 %v680, %v680
    %690 = vmatpush.bf16.msra.mxu0 %v373
    %691 = vmatpush.bf16.msra.mxu0 %v370
    %692 = vmatpush.bf16.msra.mxu0 %v367
    %693 = vmatpush.bf16.msra.mxu0 %v364
    %694 = vmatpush.bf16.msra.mxu0 %v361
    %695 = vmatpush.bf16.msra.mxu0 %v358
    %696 = vmatpush.bf16.msra.mxu0 %v355
    %697 = vmatpush.bf16.msra.mxu0 %v352
    %698 = vmatmul.bf16.gmra.mxu0 %v689
    %v699 = vpop.f32.mrf.mxu0
    %v700 = vadd.f32 0.0, %v699
    %v701 = vpop.f32.mrf.mxu0
    %702 = vdwg.mxu0
    %703 = vmatpush.bf16.msra.mxu0 %v374
    %704 = vmatpush.bf16.msra.mxu0 %v371
    %705 = vmatpush.bf16.msra.mxu0 %v368
    %706 = vmatpush.bf16.msra.mxu0 %v365
    %707 = vmatpush.bf16.msra.mxu0 %v362
    %708 = vmatpush.bf16.msra.mxu0 %v359
    %709 = vmatpush.bf16.msra.mxu0 %v356
    %710 = vmatpush.bf16.msra.mxu0 %v353
    %711 = vmatmul.bf16.gmra.mxu0 %v689
    %v712 = vpop.f32.mrf.mxu0
    %v713 = vadd.f32 0.0, %v712
    %v714 = vpop.f32.mrf.mxu0
    %715 = vdwg.mxu0
    %716 = vmatpush.bf16.msra.mxu0 %v375
    %717 = vmatpush.bf16.msra.mxu0 %v372
    %718 = vmatpush.bf16.msra.mxu0 %v369
    %719 = vmatpush.bf16.msra.mxu0 %v366
    %720 = vmatpush.bf16.msra.mxu0 %v363
    %721 = vmatpush.bf16.msra.mxu0 %v360
    %722 = vmatpush.bf16.msra.mxu0 %v357
    %723 = vmatpush.bf16.msra.mxu0 %v354
    %724 = vmatmul.bf16.gmra.mxu0 %v689
    %v725 = vpop.f32.mrf.mxu0
    %v726 = vadd.f32 0.0, %v725
    %v727 = vpop.f32.mrf.mxu0
    %728 = vdwg.mxu0
    %v729 = vadd.f32 %v686, %v700
    %v730 = vxor.u32 %v729, 2147483648
    %v731 = vmul.f32 %v730, 1.442695
    %v732 = vpow.pop %v731
    %v733 = vadd.f32 %v732, 1.0
    %v734 = vrcp.pop %v733
    %v735 = vmul.f32 %v733, %v734
    %v736 = vsub.f32 1.0, %v735
    %v737 = vmul.f32 %v734, %v736
    %v738 = vadd.f32 %v734, %v737
    %vm739 = vweird.f32 %v733
    %vm740 = vweird.f32 %v734
    %vm741 = vmor %vm739, %vm740
    %v742 = vsel %vm741, %v734, %v738
    %v743 = vand.u32 2147483647, %v733
    %vm744 = vcmp.eq.f32.partialorder %v743, 8.507059e+37
    %v745 = vand.u32 %v733, 2147483648
    %v746 = vor.u32 1.1754944e-38, %v745
    %v747 = vsel %vm744, %v746, %v742
    %v748 = vmul.f32 1.0, %v747
    %v749 = vadd.f32 %v687, %v713
    %v750 = vxor.u32 %v749, 2147483648
    %v751 = vmul.f32 %v750, 1.442695
    %v752 = vpow.pop %v751
    %v753 = vadd.f32 %v752, 1.0
    %v754 = vrcp.pop %v753
    %v755 = vmul.f32 %v753, %v754
    %v756 = vsub.f32 1.0, %v755
    %v757 = vmul.f32 %v754, %v756
    %v758 = vadd.f32 %v754, %v757
    %vm759 = vweird.f32 %v753
    %vm760 = vweird.f32 %v754
    %vm761 = vmor %vm759, %vm760
    %v762 = vsel %vm761, %v754, %v758
    %v763 = vand.u32 2147483647, %v753
    %vm764 = vcmp.eq.f32.partialorder %v763, 8.507059e+37
    %v765 = vand.u32 %v753, 2147483648
    %v766 = vor.u32 1.1754944e-38, %v765
    %v767 = vsel %vm764, %v766, %v762
    %v768 = vmul.f32 1.0, %v767
    %v769 = vadd.f32 %v726, %v480
    %v770 = vmul.f32 %v748, %v769
    %v771 = vadd.f32 %v688, %v770
    %v772 = vtanh.pop %v771
    %v773 = vsub.f32 1.0, %v768
    %v774 = vmul.f32 %v773, %v772
    %v775 = vmul.f32 %v768, %v680
    %v776 = vadd.f32 %v774, %v775
    %s777 = scalar_lea.vmem %s5, 24
    %778 = vst [vmem:[%s777] sm:$0xff] %v776
    %s779 = smul.u32 4, 3
    %s780 = smul.addr %s779, 8
    %s781 = scalar_lea.vmem [#allocation2], %s780
    %v782 = vld [vmem:[%s781] sm:$0xff]
    %v783 = vld [vmem:[%s781 + $0x8] sm:$0xff]
    %v784 = vld [vmem:[%s781 + $0x10] sm:$0xff]
    %v785 = vpack.c.bf16 %v776, %v776
    %786 = vmatpush.bf16.msra.mxu0 %v373
    %787 = vmatpush.bf16.msra.mxu0 %v370
    %788 = vmatpush.bf16.msra.mxu0 %v367
    %789 = vmatpush.bf16.msra.mxu0 %v364
    %790 = vmatpush.bf16.msra.mxu0 %v361
    %791 = vmatpush.bf16.msra.mxu0 %v358
    %792 = vmatpush.bf16.msra.mxu0 %v355
    %793 = vmatpush.bf16.msra.mxu0 %v352
    %794 = vmatmul.bf16.gmra.mxu0 %v785
    %v795 = vpop.f32.mrf.mxu0
    %v796 = vadd.f32 0.0, %v795
    %v797 = vpop.f32.mrf.mxu0
    %798 = vdwg.mxu0
    %799 = vmatpush.bf16.msra.mxu0 %v374
    %800 = vmatpush.bf16.msra.mxu0 %v371
    %801 = vmatpush.bf16.msra.mxu0 %v368
    %802 = vmatpush.bf16.msra.mxu0 %v365
    %803 = vmatpush.bf16.msra.mxu0 %v362
    %804 = vmatpush.bf16.msra.mxu0 %v359
    %805 = vmatpush.bf16.msra.mxu0 %v356
    %806 = vmatpush.bf16.msra.mxu0 %v353
    %807 = vmatmul.bf16.gmra.mxu0 %v785
    %v808 = vpop.f32.mrf.mxu0
    %v809 = vadd.f32 0.0, %v808
    %v810 = vpop.f32.mrf.mxu0
    %811 = vdwg.mxu0
    %812 = vmatpush.bf16.msra.mxu0 %v375
    %813 = vmatpush.bf16.msra.mxu0 %v372
    %814 = vmatpush.bf16.msra.mxu0 %v369
    %815 = vmatpush.bf16.msra.mxu0 %v366
    %816 = vmatpush.bf16.msra.mxu0 %v363
    %817 = vmatpush.bf16.msra.mxu0 %v360
    %818 = vmatpush.bf16.msra.mxu0 %v357
    %819 = vmatpush.bf16.msra.mxu0 %v354
    %820 = vmatmul.bf16.gmra.mxu0 %v785
    %v821 = vpop.f32.mrf.mxu0
    %v822 = vadd.f32 0.0, %v821
    %v823 = vpop.f32.mrf.mxu0
    %824 = vdwg.mxu0
    %v825 = vadd.f32 %v782, %v796
    %v826 = vxor.u32 %v825, 2147483648
    %v827 = vmul.f32 %v826, 1.442695
    %v828 = vpow.pop %v827
    %v829 = vadd.f32 %v828, 1.0
    %v830 = vrcp.pop %v829
    %v831 = vmul.f32 %v829, %v830
    %v832 = vsub.f32 1.0, %v831
    %v833 = vmul.f32 %v830, %v832
    %v834 = vadd.f32 %v830, %v833
    %vm835 = vweird.f32 %v829
    %vm836 = vweird.f32 %v830
    %vm837 = vmor %vm835, %vm836
    %v838 = vsel %vm837, %v830, %v834
    %v839 = vand.u32 2147483647, %v829
    %vm840 = vcmp.eq.f32.partialorder %v839, 8.507059e+37
    %v841 = vand.u32 %v829, 2147483648
    %v842 = vor.u32 1.1754944e-38, %v841
    %v843 = vsel %vm840, %v842, %v838
    %v844 = vmul.f32 1.0, %v843
    %v845 = vadd.f32 %v783, %v809
    %v846 = vxor.u32 %v845, 2147483648
    %v847 = vmul.f32 %v846, 1.442695
    %v848 = vpow.pop %v847
    %v849 = vadd.f32 %v848, 1.0
    %v850 = vrcp.pop %v849
    %v851 = vmul.f32 %v849, %v850
    %v852 = vsub.f32 1.0, %v851
    %v853 = vmul.f32 %v850, %v852
    %v854 = vadd.f32 %v850, %v853
    %vm855 = vweird.f32 %v849
    %vm856 = vweird.f32 %v850
    %vm857 = vmor %vm855, %vm856
    %v858 = vsel %vm857, %v850, %v854
    %v859 = vand.u32 2147483647, %v849
    %vm860 = vcmp.eq.f32.partialorder %v859, 8.507059e+37
    %v861 = vand.u32 %v849, 2147483648
    %v862 = vor.u32 1.1754944e-38, %v861
    %v863 = vsel %vm860, %v862, %v858
    %v864 = vmul.f32 1.0, %v863
    %v865 = vadd.f32 %v822, %v480
    %v866 = vmul.f32 %v844, %v865
    %v867 = vadd.f32 %v784, %v866
    %v868 = vtanh.pop %v867
    %v869 = vsub.f32 1.0, %v864
    %v870 = vmul.f32 %v869, %v868
    %v871 = vmul.f32 %v864, %v776
    %v872 = vadd.f32 %v870, %v871
    %s873 = scalar_lea.vmem %s5, 32
    %874 = vst [vmem:[%s873] sm:$0xff] %v872
    %s875 = smul.u32 5, 3
    %s876 = smul.addr %s875, 8
    %s877 = scalar_lea.vmem [#allocation2], %s876
    %v878 = vld [vmem:[%s877] sm:$0xff]
    %v879 = vld [vmem:[%s877 + $0x8] sm:$0xff]
    %v880 = vld [vmem:[%s877 + $0x10] sm:$0xff]
    %v881 = vpack.c.bf16 %v872, %v872
    %882 = vmatpush.bf16.msra.mxu0 %v373
    %883 = vmatpush.bf16.msra.mxu0 %v370
    %884 = vmatpush.bf16.msra.mxu0 %v367
    %885 = vmatpush.bf16.msra.mxu0 %v364
    %886 = vmatpush.bf16.msra.mxu0 %v361
    %887 = vmatpush.bf16.msra.mxu0 %v358
    %888 = vmatpush.bf16.msra.mxu0 %v355
    %889 = vmatpush.bf16.msra.mxu0 %v352
    %890 = vmatmul.bf16.gmra.mxu0 %v881
    %v891 = vpop.f32.mrf.mxu0
    %v892 = vadd.f32 0.0, %v891
    %v893 = vpop.f32.mrf.mxu0
    %894 = vdwg.mxu0
    %895 = vmatpush.bf16.msra.mxu0 %v374
    %896 = vmatpush.bf16.msra.mxu0 %v371
    %897 = vmatpush.bf16.msra.mxu0 %v368
    %898 = vmatpush.bf16.msra.mxu0 %v365
    %899 = vmatpush.bf16.msra.mxu0 %v362
    %900 = vmatpush.bf16.msra.mxu0 %v359
    %901 = vmatpush.bf16.msra.mxu0 %v356
    %902 = vmatpush.bf16.msra.mxu0 %v353
    %903 = vmatmul.bf16.gmra.mxu0 %v881
    %v904 = vpop.f32.mrf.mxu0
    %v905 = vadd.f32 0.0, %v904
    %v906 = vpop.f32.mrf.mxu0
    %907 = vdwg.mxu0
    %908 = vmatpush.bf16.msra.mxu0 %v375
    %909 = vmatpush.bf16.msra.mxu0 %v372
    %910 = vmatpush.bf16.msra.mxu0 %v369
    %911 = vmatpush.bf16.msra.mxu0 %v366
    %912 = vmatpush.bf16.msra.mxu0 %v363
    %913 = vmatpush.bf16.msra.mxu0 %v360
    %914 = vmatpush.bf16.msra.mxu0 %v357
    %915 = vmatpush.bf16.msra.mxu0 %v354
    %916 = vmatmul.bf16.gmra.mxu0 %v881
    %v917 = vpop.f32.mrf.mxu0
    %v918 = vadd.f32 0.0, %v917
    %v919 = vpop.f32.mrf.mxu0
    %920 = vdwg.mxu0
    %v921 = vadd.f32 %v878, %v892
    %v922 = vxor.u32 %v921, 2147483648
    %v923 = vmul.f32 %v922, 1.442695
    %v924 = vpow.pop %v923
    %v925 = vadd.f32 %v924, 1.0
    %v926 = vrcp.pop %v925
    %v927 = vmul.f32 %v925, %v926
    %v928 = vsub.f32 1.0, %v927
    %v929 = vmul.f32 %v926, %v928
    %v930 = vadd.f32 %v926, %v929
    %vm931 = vweird.f32 %v925
    %vm932 = vweird.f32 %v926
    %vm933 = vmor %vm931, %vm932
    %v934 = vsel %vm933, %v926, %v930
    %v935 = vand.u32 2147483647, %v925
    %vm936 = vcmp.eq.f32.partialorder %v935, 8.507059e+37
    %v937 = vand.u32 %v925, 2147483648
    %v938 = vor.u32 1.1754944e-38, %v937
    %v939 = vsel %vm936, %v938, %v934
    %v940 = vmul.f32 1.0, %v939
    %v941 = vadd.f32 %v879, %v905
    %v942 = vxor.u32 %v941, 2147483648
    %v943 = vmul.f32 %v942, 1.442695
    %v944 = vpow.pop %v943
    %v945 = vadd.f32 %v944, 1.0
    %v946 = vrcp.pop %v945
    %v947 = vmul.f32 %v945, %v946
    %v948 = vsub.f32 1.0, %v947
    %v949 = vmul.f32 %v946, %v948
    %v950 = vadd.f32 %v946, %v949
    %vm951 = vweird.f32 %v945
    %vm952 = vweird.f32 %v946
    %vm953 = vmor %vm951, %vm952
    %v954 = vsel %vm953, %v946, %v950
    %v955 = vand.u32 2147483647, %v945
    %vm956 = vcmp.eq.f32.partialorder %v955, 8.507059e+37
    %v957 = vand.u32 %v945, 2147483648
    %v958 = vor.u32 1.1754944e-38, %v957
    %v959 = vsel %vm956, %v958, %v954
    %v960 = vmul.f32 1.0, %v959
    %v961 = vadd.f32 %v918, %v480
    %v962 = vmul.f32 %v940, %v961
    %v963 = vadd.f32 %v880, %v962
    %v964 = vtanh.pop %v963
    %v965 = vsub.f32 1.0, %v960
    %v966 = vmul.f32 %v965, %v964
    %v967 = vmul.f32 %v960, %v872
    %v968 = vadd.f32 %v966, %v967
    %s969 = scalar_lea.vmem %s5, 40
    %970 = vst [vmem:[%s969] sm:$0xff] %v968
    %s971 = smul.u32 6, 3
    %s972 = smul.addr %s971, 8
    %s973 = scalar_lea.vmem [#allocation2], %s972
    %v974 = vld [vmem:[%s973] sm:$0xff]
    %v975 = vld [vmem:[%s973 + $0x8] sm:$0xff]
    %v976 = vld [vmem:[%s973 + $0x10] sm:$0xff]
    %v977 = vpack.c.bf16 %v968, %v968
    %978 = vmatpush.bf16.msra.mxu0 %v373
    %979 = vmatpush.bf16.msra.mxu0 %v370
    %980 = vmatpush.bf16.msra.mxu0 %v367
    %981 = vmatpush.bf16.msra.mxu0 %v364
    %982 = vmatpush.bf16.msra.mxu0 %v361
    %983 = vmatpush.bf16.msra.mxu0 %v358
    %984 = vmatpush.bf16.msra.mxu0 %v355
    %985 = vmatpush.bf16.msra.mxu0 %v352
    %986 = vmatmul.bf16.gmra.mxu0 %v977
    %v987 = vpop.f32.mrf.mxu0
    %v988 = vadd.f32 0.0, %v987
    %v989 = vpop.f32.mrf.mxu0
    %990 = vdwg.mxu0
    %991 = vmatpush.bf16.msra.mxu0 %v374
    %992 = vmatpush.bf16.msra.mxu0 %v371
    %993 = vmatpush.bf16.msra.mxu0 %v368
    %994 = vmatpush.bf16.msra.mxu0 %v365
    %995 = vmatpush.bf16.msra.mxu0 %v362
    %996 = vmatpush.bf16.msra.mxu0 %v359
    %997 = vmatpush.bf16.msra.mxu0 %v356
    %998 = vmatpush.bf16.msra.mxu0 %v353
    %999 = vmatmul.bf16.gmra.mxu0 %v977
    %v1000 = vpop.f32.mrf.mxu0
    %v1001 = vadd.f32 0.0, %v1000
    %v1002 = vpop.f32.mrf.mxu0
    %1003 = vdwg.mxu0
    %1004 = vmatpush.bf16.msra.mxu0 %v375
    %1005 = vmatpush.bf16.msra.mxu0 %v372
    %1006 = vmatpush.bf16.msra.mxu0 %v369
    %1007 = vmatpush.bf16.msra.mxu0 %v366
    %1008 = vmatpush.bf16.msra.mxu0 %v363
    %1009 = vmatpush.bf16.msra.mxu0 %v360
    %1010 = vmatpush.bf16.msra.mxu0 %v357
    %1011 = vmatpush.bf16.msra.mxu0 %v354
    %1012 = vmatmul.bf16.gmra.mxu0 %v977
    %v1013 = vpop.f32.mrf.mxu0
    %v1014 = vadd.f32 0.0, %v1013
    %v1015 = vpop.f32.mrf.mxu0
    %1016 = vdwg.mxu0
    %v1017 = vadd.f32 %v974, %v988
    %v1018 = vxor.u32 %v1017, 2147483648
    %v1019 = vmul.f32 %v1018, 1.442695
    %v1020 = vpow.pop %v1019
    %v1021 = vadd.f32 %v1020, 1.0
    %v1022 = vrcp.pop %v1021
    %v1023 = vmul.f32 %v1021, %v1022
    %v1024 = vsub.f32 1.0, %v1023
    %v1025 = vmul.f32 %v1022, %v1024
    %v1026 = vadd.f32 %v1022, %v1025
    %vm1027 = vweird.f32 %v1021
    %vm1028 = vweird.f32 %v1022
    %vm1029 = vmor %vm1027, %vm1028
    %v1030 = vsel %vm1029, %v1022, %v1026
    %v1031 = vand.u32 2147483647, %v1021
    %vm1032 = vcmp.eq.f32.partialorder %v1031, 8.507059e+37
    %v1033 = vand.u32 %v1021, 2147483648
    %v1034 = vor.u32 1.1754944e-38, %v1033
    %v1035 = vsel %vm1032, %v1034, %v1030
    %v1036 = vmul.f32 1.0, %v1035
    %v1037 = vadd.f32 %v975, %v1001
    %v1038 = vxor.u32 %v1037, 2147483648
    %v1039 = vmul.f32 %v1038, 1.442695
    %v1040 = vpow.pop %v1039
    %v1041 = vadd.f32 %v1040, 1.0
    %v1042 = vrcp.pop %v1041
    %v1043 = vmul.f32 %v1041, %v1042
    %v1044 = vsub.f32 1.0, %v1043
    %v1045 = vmul.f32 %v1042, %v1044
    %v1046 = vadd.f32 %v1042, %v1045
    %vm1047 = vweird.f32 %v1041
    %vm1048 = vweird.f32 %v1042
    %vm1049 = vmor %vm1047, %vm1048
    %v1050 = vsel %vm1049, %v1042, %v1046
    %v1051 = vand.u32 2147483647, %v1041
    %vm1052 = vcmp.eq.f32.partialorder %v1051, 8.507059e+37
    %v1053 = vand.u32 %v1041, 2147483648
    %v1054 = vor.u32 1.1754944e-38, %v1053
    %v1055 = vsel %vm1052, %v1054, %v1050
    %v1056 = vmul.f32 1.0, %v1055
    %v1057 = vadd.f32 %v1014, %v480
    %v1058 = vmul.f32 %v1036, %v1057
    %v1059 = vadd.f32 %v976, %v1058
    %v1060 = vtanh.pop %v1059
    %v1061 = vsub.f32 1.0, %v1056
    %v1062 = vmul.f32 %v1061, %v1060
    %v1063 = vmul.f32 %v1056, %v968
    %v1064 = vadd.f32 %v1062, %v1063
    %s1065 = scalar_lea.vmem %s5, 48
    %1066 = vst [vmem:[%s1065] sm:$0xff] %v1064
    %s1067 = smul.u32 7, 3
    %s1068 = smul.addr %s1067, 8
    %s1069 = scalar_lea.vmem [#allocation2], %s1068
    %v1070 = vld [vmem:[%s1069] sm:$0xff]
    %v1071 = vld [vmem:[%s1069 + $0x8] sm:$0xff]
    %v1072 = vld [vmem:[%s1069 + $0x10] sm:$0xff]
    %v1073 = vpack.c.bf16 %v1064, %v1064
    %1074 = vmatpush.bf16.msra.mxu0 %v373
    %1075 = vmatpush.bf16.msra.mxu0 %v370
    %1076 = vmatpush.bf16.msra.mxu0 %v367
    %1077 = vmatpush.bf16.msra.mxu0 %v364
    %1078 = vmatpush.bf16.msra.mxu0 %v361
    %1079 = vmatpush.bf16.msra.mxu0 %v358
    %1080 = vmatpush.bf16.msra.mxu0 %v355
    %1081 = vmatpush.bf16.msra.mxu0 %v352
    %1082 = vmatmul.bf16.gmra.mxu0 %v1073
    %v1083 = vpop.f32.mrf.mxu0
    %v1084 = vadd.f32 0.0, %v1083
    %v1085 = vpop.f32.mrf.mxu0
    %1086 = vdwg.mxu0
    %1087 = vmatpush.bf16.msra.mxu0 %v374
    %1088 = vmatpush.bf16.msra.mxu0 %v371
    %1089 = vmatpush.bf16.msra.mxu0 %v368
    %1090 = vmatpush.bf16.msra.mxu0 %v365
    %1091 = vmatpush.bf16.msra.mxu0 %v362
    %1092 = vmatpush.bf16.msra.mxu0 %v359
    %1093 = vmatpush.bf16.msra.mxu0 %v356
    %1094 = vmatpush.bf16.msra.mxu0 %v353
    %1095 = vmatmul.bf16.gmra.mxu0 %v1073
    %v1096 = vpop.f32.mrf.mxu0
    %v1097 = vadd.f32 0.0, %v1096
    %v1098 = vpop.f32.mrf.mxu0
    %1099 = vdwg.mxu0
    %1100 = vmatpush.bf16.msra.mxu0 %v375
    %1101 = vmatpush.bf16.msra.mxu0 %v372
    %1102 = vmatpush.bf16.msra.mxu0 %v369
    %1103 = vmatpush.bf16.msra.mxu0 %v366
    %1104 = vmatpush.bf16.msra.mxu0 %v363
    %1105 = vmatpush.bf16.msra.mxu0 %v360
    %1106 = vmatpush.bf16.msra.mxu0 %v357
    %1107 = vmatpush.bf16.msra.mxu0 %v354
    %1108 = vmatmul.bf16.gmra.mxu0 %v1073
    %v1109 = vpop.f32.mrf.mxu0
    %v1110 = vadd.f32 0.0, %v1109
    %v1111 = vpop.f32.mrf.mxu0
    %1112 = vdwg.mxu0
    %v1113 = vadd.f32 %v1070, %v1084
    %v1114 = vxor.u32 %v1113, 2147483648
    %v1115 = vmul.f32 %v1114, 1.442695
    %v1116 = vpow.pop %v1115
    %v1117 = vadd.f32 %v1116, 1.0
    %v1118 = vrcp.pop %v1117
    %v1119 = vmul.f32 %v1117, %v1118
    %v1120 = vsub.f32 1.0, %v1119
    %v1121 = vmul.f32 %v1118, %v1120
    %v1122 = vadd.f32 %v1118, %v1121
    %vm1123 = vweird.f32 %v1117
    %vm1124 = vweird.f32 %v1118
    %vm1125 = vmor %vm1123, %vm1124
    %v1126 = vsel %vm1125, %v1118, %v1122
    %v1127 = vand.u32 2147483647, %v1117
    %vm1128 = vcmp.eq.f32.partialorder %v1127, 8.507059e+37
    %v1129 = vand.u32 %v1117, 2147483648
    %v1130 = vor.u32 1.1754944e-38, %v1129
    %v1131 = vsel %vm1128, %v1130, %v1126
    %v1132 = vmul.f32 1.0, %v1131
    %v1133 = vadd.f32 %v1071, %v1097
    %v1134 = vxor.u32 %v1133, 2147483648
    %v1135 = vmul.f32 %v1134, 1.442695
    %v1136 = vpow.pop %v1135
    %v1137 = vadd.f32 %v1136, 1.0
    %v1138 = vrcp.pop %v1137
    %v1139 = vmul.f32 %v1137, %v1138
    %v1140 = vsub.f32 1.0, %v1139
    %v1141 = vmul.f32 %v1138, %v1140
    %v1142 = vadd.f32 %v1138, %v1141
    %vm1143 = vweird.f32 %v1137
    %vm1144 = vweird.f32 %v1138
    %vm1145 = vmor %vm1143, %vm1144
    %v1146 = vsel %vm1145, %v1138, %v1142
    %v1147 = vand.u32 2147483647, %v1137
    %vm1148 = vcmp.eq.f32.partialorder %v1147, 8.507059e+37
    %v1149 = vand.u32 %v1137, 2147483648
    %v1150 = vor.u32 1.1754944e-38, %v1149
    %v1151 = vsel %vm1148, %v1150, %v1146
    %v1152 = vmul.f32 1.0, %v1151
    %v1153 = vadd.f32 %v1110, %v480
    %v1154 = vmul.f32 %v1132, %v1153
    %v1155 = vadd.f32 %v1072, %v1154
    %v1156 = vtanh.pop %v1155
    %v1157 = vsub.f32 1.0, %v1152
    %v1158 = vmul.f32 %v1157, %v1156
    %v1159 = vmul.f32 %v1152, %v1064
    %v1160 = vadd.f32 %v1158, %v1159
    %s1161 = scalar_lea.vmem %s5, 56
    %1162 = vst [vmem:[%s1161] sm:$0xff] %v1160
    // Predicated region
    $region30: #{seq2seq_encoder_forward.2} parent=1 // pred_check
      _
    $region31: #{seq2seq_encoder_forward.2} parent=1 // pred_check_branch
      %1164 = sbr.rel (0) target = $region33
    $region32: #{seq2seq_encoder_forward.2} parent=1 // pred_region
      _
    $region33: #{seq2seq_encoder_forward.2} parent=1 // pred_fallthru
      _
    // Predicated region
    $region34: #{seq2seq_encoder_forward.2} parent=1 // pred_check
      _
    $region35: #{seq2seq_encoder_forward.2} parent=1 // pred_check_branch
      %1166 = sbr.rel (0) target = $region37
    $region36: #{seq2seq_encoder_forward.2} parent=1 // pred_region
      _
    $region37: #{seq2seq_encoder_forward.2} parent=1 // pred_fallthru
      _
    %1167 = vsyncpa [#allocation4], 1
    %1168 = vsyncpa [#allocation6], 1

// kernel: seq2seq_encoder_forward.3
$region0: #{seq2seq_encoder_forward.3}
  #allocation0 [shape = 'u32[]', space=smem, size = 0x4, offset = 0x4, fixed_abs, tag = 'smem constant byte address 0x4 - core index']
  #allocation1 [shape = 'u32[72,128]{1,0:T(1,128)}', space=vmem, size = 0x9000, scoped, tag = 'internal scratch']
  #allocation2 [shape = 'f32[64,384]{1,0:T(8,128)}', space=vmem, size = 0x18000, scoped, tag = 'scratch operand']
  %s0 = inlined_call_operand.vmem [shape: bf16[64,128], index: 0, kind: input, shape index: {}]
  %s1 = inlined_call_operand.hbm [shape: bf16[128,384], index: 1, kind: input, shape index: {}]
  %s2 = inlined_call_operand.vmem [shape: bf16[128,384], index: 2, kind: input, shape index: {}]
  %s3 = inlined_call_operand.vmem [shape: f32[1,384], index: 3, kind: input, shape index: {}]
  %s4 = inlined_call_operand.vmem [shape: f32[1,128], index: 4, kind: input, shape index: {}]
  %s5 = inlined_call_operand.vmem [shape: f32[64,128], index: 5, kind: output, shape index: {}]
  %s6 = sld [smem:[#allocation0]]
  $region34: #{seq2seq_encoder_forward.3} parent=0
    _
  %s8 = ssub.s32 1, %s6
  %s9 = scalar_select 0, %s8, %s6
  $region1: #{seq2seq_encoder_forward.3} parent=0
    #allocation3 [shape = 'u8[98304]{0}', space=vmem, size = 0x18000, scoped, tag = 'input window, operand 1, single buffered']
    #allocation4 [shape = 's32[1]{0}', space=sflag, size = 0x4, scoped, tag = 'scoped memory for seq2seq_encoder_forward.3']
    %10 = vsyncpa [#allocation4], 0
    // Predicated region
    $region2: #{seq2seq_encoder_forward.3} parent=1 // pred_check
      _
    $region3: #{seq2seq_encoder_forward.3} parent=1 // pred_check_branch
      %12 = sbr.rel (0) target = $region5
    $region4: #{seq2seq_encoder_forward.3} parent=1 // pred_region
      _
    $region5: #{seq2seq_encoder_forward.3} parent=1 // pred_fallthru
      _
    // Predicated region
    $region6: #{seq2seq_encoder_forward.3} parent=1 // pred_check
      _
    $region7: #{seq2seq_encoder_forward.3} parent=1 // pred_check_branch
      %14 = sbr.rel (0) target = $region9
    $region8: #{seq2seq_encoder_forward.3} parent=1 // pred_region
      %16 = vsyncadd [#allocation4], 0
      %s17 = sshll.u32 %s1, 4
      %s18 = int_to_ptr.hbm [resolvable:$true] %s17
      %s19 = sshll.u32 [#allocation3], 4
      %s20 = int_to_ptr.vmem [resolvable:$true] %s19
      %25 = dma.hbm_to_vmem [thread:$0]  %s18, 3072, %s20, [#allocation4], 192, 192, 12
    $region9: #{seq2seq_encoder_forward.3} parent=1 // pred_fallthru
      _
    // Predicated region
    $region10: #{seq2seq_encoder_forward.3} parent=1 // pred_check
      _
    $region11: #{seq2seq_encoder_forward.3} parent=1 // pred_check_branch
      %27 = sbr.rel (0) target = $region13
    $region12: #{seq2seq_encoder_forward.3} parent=1 // pred_region
      _
    $region13: #{seq2seq_encoder_forward.3} parent=1 // pred_fallthru
      _
    // Predicated region
    $region14: #{seq2seq_encoder_forward.3} parent=1 // pred_check
      _
    $region15: #{seq2seq_encoder_forward.3} parent=1 // pred_check_branch
      %29 = sbr.rel (0) target = $region17
    $region16: #{seq2seq_encoder_forward.3} parent=1 // pred_region
      _
    $region17: #{seq2seq_encoder_forward.3} parent=1 // pred_fallthru
      _
    // Predicated region
    $region18: #{seq2seq_encoder_forward.3} parent=1 // pred_check
      _
    $region19: #{seq2seq_encoder_forward.3} parent=1 // pred_check_branch
      %31 = sbr.rel (0) target = $region21
    $region20: #{seq2seq_encoder_forward.3} parent=1 // pred_region
      _
    $region21: #{seq2seq_encoder_forward.3} parent=1 // pred_fallthru
      _
    // Predicated region
    $region22: #{seq2seq_encoder_forward.3} parent=1 // pred_check
      _
    $region23: #{seq2seq_encoder_forward.3} parent=1 // pred_check_branch
      %33 = sbr.rel (0) target = $region25
    $region24: #{seq2seq_encoder_forward.3} parent=1 // pred_region
      %35 = dma.done [#allocation4], 3072
    $region25: #{seq2seq_encoder_forward.3} parent=1 // pred_fallthru
      _
    %v37 = vld [vmem:[%s0] sm:$0xf]
    %v38 = vld [vmem:[%s0 + $0x4] sm:$0xf]
    %v39 = vld [vmem:[%s0 + $0x8] sm:$0xf]
    %v40 = vld [vmem:[%s0 + $0xc] sm:$0xf]
    %v41 = vld [vmem:[%s0 + $0x10] sm:$0xf]
    %v42 = vld [vmem:[%s0 + $0x14] sm:$0xf]
    %v43 = vld [vmem:[%s0 + $0x18] sm:$0xf]
    %v44 = vld [vmem:[%s0 + $0x1c] sm:$0xf]
    %v45 = vld [vmem:[#allocation3] sm:$0xff]
    %v46 = vld [vmem:[#allocation3 + $0x8] sm:$0xf]
    %v47 = vld [vmem:[#allocation3 + $0xc] sm:$0xff]
    %v48 = vld [vmem:[#allocation3 + $0x14] sm:$0xf]
    %v49 = vld [vmem:[#allocation3 + $0x18] sm:$0xff]
    %v50 = vld [vmem:[#allocation3 + $0x20] sm:$0xf]
    %v51 = vld [vmem:[#allocation3 + $0x24] sm:$0xff]
    %v52 = vld [vmem:[#allocation3 + $0x2c] sm:$0xf]
    %v53 = vld [vmem:[#allocation3 + $0x30] sm:$0xff]
    %v54 = vld [vmem:[#allocation3 + $0x38] sm:$0xf]
    %v55 = vld [vmem:[#allocation3 + $0x3c] sm:$0xff]
    %v56 = vld [vmem:[#allocation3 + $0x44] sm:$0xf]
    %v57 = vld [vmem:[#allocation3 + $0x48] sm:$0xff]
    %v58 = vld [vmem:[#allocation3 + $0x50] sm:$0xf]
    %v59 = vld [vmem:[#allocation3 + $0x54] sm:$0xff]
    %v60 = vld [vmem:[#allocation3 + $0x5c] sm:$0xf]
    %v61 = vld [vmem:[#allocation3 + $0x60] sm:$0xff]
    %v62 = vld [vmem:[#allocation3 + $0x68] sm:$0xf]
    %v63 = vld [vmem:[#allocation3 + $0x6c] sm:$0xff]
    %v64 = vld [vmem:[#allocation3 + $0x74] sm:$0xf]
    %v65 = vld [vmem:[#allocation3 + $0x78] sm:$0xff]
    %v66 = vld [vmem:[#allocation3 + $0x80] sm:$0xf]
    %v67 = vld [vmem:[#allocation3 + $0x84] sm:$0xff]
    %v68 = vld [vmem:[#allocation3 + $0x8c] sm:$0xf]
    %v69 = vld [vmem:[#allocation3 + $0x90] sm:$0xff]
    %v70 = vld [vmem:[#allocation3 + $0x98] sm:$0xf]
    %v71 = vld [vmem:[#allocation3 + $0x9c] sm:$0xff]
    %v72 = vld [vmem:[#allocation3 + $0xa4] sm:$0xf]
    %v73 = vld [vmem:[#allocation3 + $0xa8] sm:$0xff]
    %v74 = vld [vmem:[#allocation3 + $0xb0] sm:$0xf]
    %v75 = vld [vmem:[#allocation3 + $0xb4] sm:$0xff]
    %v76 = vld [vmem:[#allocation3 + $0xbc] sm:$0xf]
    %v77 = vld [vmem:[%s3] sm:$0x7]
    %v79 = vperm.slane %v77, 0
    %v80 = vperm.slane %v77, 1
    %v81 = vperm.slane %v77, 2
    %v93 = vunpack.c.l.b16 %v37
    %v94 = vunpack.c.l.b16 %v38
    %v95 = vunpack.c.l.b16 %v39
    %v96 = vunpack.c.l.b16 %v40
    %v97 = vunpack.c.l.b16 %v41
    %v98 = vunpack.c.l.b16 %v42
    %v99 = vunpack.c.l.b16 %v43
    %v100 = vunpack.c.l.b16 %v44
    %v101 = vpack.c.b16 %v94, %v93
    %v102 = vpack.c.b16 %v96, %v95
    %v103 = vpack.c.b16 %v98, %v97
    %v104 = vpack.c.b16 %v100, %v99
    %v141 = vunpack.c.l.b16 %v45
    %v142 = vunpack.c.h.b16 %v45
    %v143 = vunpack.c.l.b16 %v46
    %v144 = vunpack.c.l.b16 %v47
    %v145 = vunpack.c.h.b16 %v47
    %v146 = vunpack.c.l.b16 %v48
    %v147 = vunpack.c.l.b16 %v49
    %v148 = vunpack.c.h.b16 %v49
    %v149 = vunpack.c.l.b16 %v50
    %v150 = vunpack.c.l.b16 %v51
    %v151 = vunpack.c.h.b16 %v51
    %v152 = vunpack.c.l.b16 %v52
    %v153 = vunpack.c.l.b16 %v53
    %v154 = vunpack.c.h.b16 %v53
    %v155 = vunpack.c.l.b16 %v54
    %v156 = vunpack.c.l.b16 %v55
    %v157 = vunpack.c.h.b16 %v55
    %v158 = vunpack.c.l.b16 %v56
    %v159 = vunpack.c.l.b16 %v57
    %v160 = vunpack.c.h.b16 %v57
    %v161 = vunpack.c.l.b16 %v58
    %v162 = vunpack.c.l.b16 %v59
    %v163 = vunpack.c.h.b16 %v59
    %v164 = vunpack.c.l.b16 %v60
    %v165 = vunpack.c.l.b16 %v61
    %v166 = vunpack.c.h.b16 %v61
    %v167 = vunpack.c.l.b16 %v62
    %v168 = vunpack.c.l.b16 %v63
    %v169 = vunpack.c.h.b16 %v63
    %v170 = vunpack.c.l.b16 %v64
    %v171 = vunpack.c.l.b16 %v65
    %v172 = vunpack.c.h.b16 %v65
    %v173 = vunpack.c.l.b16 %v66
    %v174 = vunpack.c.l.b16 %v67
    %v175 = vunpack.c.h.b16 %v67
    %v176 = vunpack.c.l.b16 %v68
    %v177 = vunpack.c.l.b16 %v69
    %v178 = vunpack.c.h.b16 %v69
    %v179 = vunpack.c.l.b16 %v70
    %v180 = vunpack.c.l.b16 %v71
    %v181 = vunpack.c.h.b16 %v71
    %v182 = vunpack.c.l.b16 %v72
    %v183 = vunpack.c.l.b16 %v73
    %v184 = vunpack.c.h.b16 %v73
    %v185 = vunpack.c.l.b16 %v74
    %v186 = vunpack.c.l.b16 %v75
    %v187 = vunpack.c.h.b16 %v75
    %v188 = vunpack.c.l.b16 %v76
    %v189 = vpack.c.b16 %v144, %v141
    %v190 = vpack.c.b16 %v145, %v142
    %v191 = vpack.c.b16 %v146, %v143
    %v192 = vpack.c.b16 %v150, %v147
    %v193 = vpack.c.b16 %v151, %v148
    %v194 = vpack.c.b16 %v152, %v149
    %v195 = vpack.c.b16 %v156, %v153
    %v196 = vpack.c.b16 %v157, %v154
    %v197 = vpack.c.b16 %v158, %v155
    %v198 = vpack.c.b16 %v162, %v159
    %v199 = vpack.c.b16 %v163, %v160
    %v200 = vpack.c.b16 %v164, %v161
    %v201 = vpack.c.b16 %v168, %v165
    %v202 = vpack.c.b16 %v169, %v166
    %v203 = vpack.c.b16 %v170, %v167
    %v204 = vpack.c.b16 %v174, %v171
    %v205 = vpack.c.b16 %v175, %v172
    %v206 = vpack.c.b16 %v176, %v173
    %v207 = vpack.c.b16 %v180, %v177
    %v208 = vpack.c.b16 %v181, %v178
    %v209 = vpack.c.b16 %v182, %v179
    %v210 = vpack.c.b16 %v186, %v183
    %v211 = vpack.c.b16 %v187, %v184
    %v212 = vpack.c.b16 %v188, %v185
    %237 = vmatpush.bf16.msra.mxu0 %v210
    %238 = vmatpush.bf16.msra.mxu0 %v207
    %239 = vmatpush.bf16.msra.mxu0 %v204
    %240 = vmatpush.bf16.msra.mxu0 %v201
    %241 = vmatpush.bf16.msra.mxu0 %v198
    %242 = vmatpush.bf16.msra.mxu0 %v195
    %243 = vmatpush.bf16.msra.mxu0 %v192
    %244 = vmatpush.bf16.msra.mxu0 %v189
    %245 = vmatmul.bf16.gmra.mxu0 %v101
    %v246 = vpop.f32.mrf.mxu0
    %v247 = vadd.f32 %v79, %v246
    %v248 = vpop.f32.mrf.mxu0
    %v249 = vadd.f32 %v79, %v248
    %250 = vmatmul.bf16.gmra.mxu0 %v102
    %v251 = vpop.f32.mrf.mxu0
    %v252 = vadd.f32 %v79, %v251
    %v253 = vpop.f32.mrf.mxu0
    %v254 = vadd.f32 %v79, %v253
    %255 = vmatmul.bf16.gmra.mxu0 %v103
    %v256 = vpop.f32.mrf.mxu0
    %v257 = vadd.f32 %v79, %v256
    %v258 = vpop.f32.mrf.mxu0
    %v259 = vadd.f32 %v79, %v258
    %260 = vmatmul.bf16.gmra.mxu0 %v104
    %v261 = vpop.f32.mrf.mxu0
    %v262 = vadd.f32 %v79, %v261
    %v263 = vpop.f32.mrf.mxu0
    %v264 = vadd.f32 %v79, %v263
    %265 = vdwg.mxu0
    %266 = vmatpush.bf16.msra.mxu0 %v211
    %267 = vmatpush.bf16.msra.mxu0 %v208
    %268 = vmatpush.bf16.msra.mxu0 %v205
    %269 = vmatpush.bf16.msra.mxu0 %v202
    %270 = vmatpush.bf16.msra.mxu0 %v199
    %271 = vmatpush.bf16.msra.mxu0 %v196
    %272 = vmatpush.bf16.msra.mxu0 %v193
    %273 = vmatpush.bf16.msra.mxu0 %v190
    %274 = vmatmul.bf16.gmra.mxu0 %v101
    %v275 = vpop.f32.mrf.mxu0
    %v276 = vadd.f32 %v80, %v275
    %v277 = vpop.f32.mrf.mxu0
    %v278 = vadd.f32 %v80, %v277
    %279 = vmatmul.bf16.gmra.mxu0 %v102
    %v280 = vpop.f32.mrf.mxu0
    %v281 = vadd.f32 %v80, %v280
    %v282 = vpop.f32.mrf.mxu0
    %v283 = vadd.f32 %v80, %v282
    %284 = vmatmul.bf16.gmra.mxu0 %v103
    %v285 = vpop.f32.mrf.mxu0
    %v286 = vadd.f32 %v80, %v285
    %v287 = vpop.f32.mrf.mxu0
    %v288 = vadd.f32 %v80, %v287
    %289 = vmatmul.bf16.gmra.mxu0 %v104
    %v290 = vpop.f32.mrf.mxu0
    %v291 = vadd.f32 %v80, %v290
    %v292 = vpop.f32.mrf.mxu0
    %v293 = vadd.f32 %v80, %v292
    %294 = vdwg.mxu0
    %295 = vmatpush.bf16.msra.mxu0 %v212
    %296 = vmatpush.bf16.msra.mxu0 %v209
    %297 = vmatpush.bf16.msra.mxu0 %v206
    %298 = vmatpush.bf16.msra.mxu0 %v203
    %299 = vmatpush.bf16.msra.mxu0 %v200
    %300 = vmatpush.bf16.msra.mxu0 %v197
    %301 = vmatpush.bf16.msra.mxu0 %v194
    %302 = vmatpush.bf16.msra.mxu0 %v191
    %303 = vmatmul.bf16.gmra.mxu0 %v101
    %v304 = vpop.f32.mrf.mxu0
    %v305 = vadd.f32 %v81, %v304
    %v306 = vpop.f32.mrf.mxu0
    %v307 = vadd.f32 %v81, %v306
    %308 = vmatmul.bf16.gmra.mxu0 %v102
    %v309 = vpop.f32.mrf.mxu0
    %v310 = vadd.f32 %v81, %v309
    %v311 = vpop.f32.mrf.mxu0
    %v312 = vadd.f32 %v81, %v311
    %313 = vmatmul.bf16.gmra.mxu0 %v103
    %v314 = vpop.f32.mrf.mxu0
    %v315 = vadd.f32 %v81, %v314
    %v316 = vpop.f32.mrf.mxu0
    %v317 = vadd.f32 %v81, %v316
    %318 = vmatmul.bf16.gmra.mxu0 %v104
    %v319 = vpop.f32.mrf.mxu0
    %v320 = vadd.f32 %v81, %v319
    %v321 = vpop.f32.mrf.mxu0
    %v322 = vadd.f32 %v81, %v321
    %323 = vdwg.mxu0
    %324 = vst [vmem:[#allocation2] sm:$0xff] %v247
    %325 = vst [vmem:[#allocation2 + $0x8] sm:$0xff] %v276
    %326 = vst [vmem:[#allocation2 + $0x10] sm:$0xff] %v305
    %327 = vst [vmem:[#allocation2 + $0x18] sm:$0xff] %v249
    %328 = vst [vmem:[#allocation2 + $0x20] sm:$0xff] %v278
    %329 = vst [vmem:[#allocation2 + $0x28] sm:$0xff] %v307
    %330 = vst [vmem:[#allocation2 + $0x30] sm:$0xff] %v252
    %331 = vst [vmem:[#allocation2 + $0x38] sm:$0xff] %v281
    %332 = vst [vmem:[#allocation2 + $0x40] sm:$0xff] %v310
    %333 = vst [vmem:[#allocation2 + $0x48] sm:$0xff] %v254
    %334 = vst [vmem:[#allocation2 + $0x50] sm:$0xff] %v283
    %335 = vst [vmem:[#allocation2 + $0x58] sm:$0xff] %v312
    %336 = vst [vmem:[#allocation2 + $0x60] sm:$0xff] %v257
    %337 = vst [vmem:[#allocation2 + $0x68] sm:$0xff] %v286
    %338 = vst [vmem:[#allocation2 + $0x70] sm:$0xff] %v315
    %339 = vst [vmem:[#allocation2 + $0x78] sm:$0xff] %v259
    %340 = vst [vmem:[#allocation2 + $0x80] sm:$0xff] %v288
    %341 = vst [vmem:[#allocation2 + $0x88] sm:$0xff] %v317
    %342 = vst [vmem:[#allocation2 + $0x90] sm:$0xff] %v262
    %343 = vst [vmem:[#allocation2 + $0x98] sm:$0xff] %v291
    %344 = vst [vmem:[#allocation2 + $0xa0] sm:$0xff] %v320
    %345 = vst [vmem:[#allocation2 + $0xa8] sm:$0xff] %v264
    %346 = vst [vmem:[#allocation2 + $0xb0] sm:$0xff] %v293
    %347 = vst [vmem:[#allocation2 + $0xb8] sm:$0xff] %v322
    %v348 = vld [vmem:[%s2] sm:$0xff]
    %v349 = vld [vmem:[%s2 + $0x8] sm:$0xf]
    %v350 = vld [vmem:[%s2 + $0xc] sm:$0xff]
    %v351 = vld [vmem:[%s2 + $0x14] sm:$0xf]
    %v352 = vld [vmem:[%s2 + $0x18] sm:$0xff]
    %v353 = vld [vmem:[%s2 + $0x20] sm:$0xf]
    %v354 = vld [vmem:[%s2 + $0x24] sm:$0xff]
    %v355 = vld [vmem:[%s2 + $0x2c] sm:$0xf]
    %v356 = vld [vmem:[%s2 + $0x30] sm:$0xff]
    %v357 = vld [vmem:[%s2 + $0x38] sm:$0xf]
    %v358 = vld [vmem:[%s2 + $0x3c] sm:$0xff]
    %v359 = vld [vmem:[%s2 + $0x44] sm:$0xf]
    %v360 = vld [vmem:[%s2 + $0x48] sm:$0xff]
    %v361 = vld [vmem:[%s2 + $0x50] sm:$0xf]
    %v362 = vld [vmem:[%s2 + $0x54] sm:$0xff]
    %v363 = vld [vmem:[%s2 + $0x5c] sm:$0xf]
    %v364 = vld [vmem:[%s2 + $0x60] sm:$0xff]
    %v365 = vld [vmem:[%s2 + $0x68] sm:$0xf]
    %v366 = vld [vmem:[%s2 + $0x6c] sm:$0xff]
    %v367 = vld [vmem:[%s2 + $0x74] sm:$0xf]
    %v368 = vld [vmem:[%s2 + $0x78] sm:$0xff]
    %v369 = vld [vmem:[%s2 + $0x80] sm:$0xf]
    %v370 = vld [vmem:[%s2 + $0x84] sm:$0xff]
    %v371 = vld [vmem:[%s2 + $0x8c] sm:$0xf]
    %v372 = vld [vmem:[%s2 + $0x90] sm:$0xff]
    %v373 = vld [vmem:[%s2 + $0x98] sm:$0xf]
    %v374 = vld [vmem:[%s2 + $0x9c] sm:$0xff]
    %v375 = vld [vmem:[%s2 + $0xa4] sm:$0xf]
    %v376 = vld [vmem:[%s2 + $0xa8] sm:$0xff]
    %v377 = vld [vmem:[%s2 + $0xb0] sm:$0xf]
    %v378 = vld [vmem:[%s2 + $0xb4] sm:$0xff]
    %v379 = vld [vmem:[%s2 + $0xbc] sm:$0xf]
    %v380 = vld [vmem:[%s4] sm:$0x1]
    %s381 = smul.u32 0, 3
    %s382 = smul.addr %s381, 8
    %s383 = scalar_lea.vmem [#allocation2], %s382
    %v384 = vld [vmem:[%s383] sm:$0xff]
    %v385 = vld [vmem:[%s383 + $0x8] sm:$0xff]
    %v386 = vld [vmem:[%s383 + $0x10] sm:$0xff]
    %v419 = vunpack.c.l.b16 %v348
    %v420 = vunpack.c.h.b16 %v348
    %v421 = vunpack.c.l.b16 %v349
    %v422 = vunpack.c.l.b16 %v350
    %v423 = vunpack.c.h.b16 %v350
    %v424 = vunpack.c.l.b16 %v351
    %v425 = vunpack.c.l.b16 %v352
    %v426 = vunpack.c.h.b16 %v352
    %v427 = vunpack.c.l.b16 %v353
    %v428 = vunpack.c.l.b16 %v354
    %v429 = vunpack.c.h.b16 %v354
    %v430 = vunpack.c.l.b16 %v355
    %v431 = vunpack.c.l.b16 %v356
    %v432 = vunpack.c.h.b16 %v356
    %v433 = vunpack.c.l.b16 %v357
    %v434 = vunpack.c.l.b16 %v358
    %v435 = vunpack.c.h.b16 %v358
    %v436 = vunpack.c.l.b16 %v359
    %v437 = vunpack.c.l.b16 %v360
    %v438 = vunpack.c.h.b16 %v360
    %v439 = vunpack.c.l.b16 %v361
    %v440 = vunpack.c.l.b16 %v362
    %v441 = vunpack.c.h.b16 %v362
    %v442 = vunpack.c.l.b16 %v363
    %v443 = vunpack.c.l.b16 %v364
    %v444 = vunpack.c.h.b16 %v364
    %v445 = vunpack.c.l.b16 %v365
    %v446 = vunpack.c.l.b16 %v366
    %v447 = vunpack.c.h.b16 %v366
    %v448 = vunpack.c.l.b16 %v367
    %v449 = vunpack.c.l.b16 %v368
    %v450 = vunpack.c.h.b16 %v368
    %v451 = vunpack.c.l.b16 %v369
    %v452 = vunpack.c.l.b16 %v370
    %v453 = vunpack.c.h.b16 %v370
    %v454 = vunpack.c.l.b16 %v371
    %v455 = vunpack.c.l.b16 %v372
    %v456 = vunpack.c.h.b16 %v372
    %v457 = vunpack.c.l.b16 %v373
    %v458 = vunpack.c.l.b16 %v374
    %v459 = vunpack.c.h.b16 %v374
    %v460 = vunpack.c.l.b16 %v375
    %v461 = vunpack.c.l.b16 %v376
    %v462 = vunpack.c.h.b16 %v376
    %v463 = vunpack.c.l.b16 %v377
    %v464 = vunpack.c.l.b16 %v378
    %v465 = vunpack.c.h.b16 %v378
    %v466 = vunpack.c.l.b16 %v379
    %v467 = vpack.c.b16 %v422, %v419
    %v468 = vpack.c.b16 %v423, %v420
    %v469 = vpack.c.b16 %v424, %v421
    %v470 = vpack.c.b16 %v428, %v425
    %v471 = vpack.c.b16 %v429, %v426
    %v472 = vpack.c.b16 %v430, %v427
    %v473 = vpack.c.b16 %v434, %v431
    %v474 = vpack.c.b16 %v435, %v432
    %v475 = vpack.c.b16 %v436, %v433
    %v476 = vpack.c.b16 %v440, %v437
    %v477 = vpack.c.b16 %v441, %v438
    %v478 = vpack.c.b16 %v442, %v439
    %v479 = vpack.c.b16 %v446, %v443
    %v480 = vpack.c.b16 %v447, %v444
    %v481 = vpack.c.b16 %v448, %v445
    %v482 = vpack.c.b16 %v452, %v449
    %v483 = vpack.c.b16 %v453, %v450
    %v484 = vpack.c.b16 %v454, %v451
    %v485 = vpack.c.b16 %v458, %v455
    %v486 = vpack.c.b16 %v459, %v456
    %v487 = vpack.c.b16 %v460, %v457
    %v488 = vpack.c.b16 %v464, %v461
    %v489 = vpack.c.b16 %v465, %v462
    %v490 = vpack.c.b16 %v466, %v463
    %515 = vmatpush.bf16.msra.mxu0 %v488
    %516 = vmatpush.bf16.msra.mxu0 %v485
    %517 = vmatpush.bf16.msra.mxu0 %v482
    %518 = vmatpush.bf16.msra.mxu0 %v479
    %519 = vmatpush.bf16.msra.mxu0 %v476
    %520 = vmatpush.bf16.msra.mxu0 %v473
    %521 = vmatpush.bf16.msra.mxu0 %v470
    %522 = vmatpush.bf16.msra.mxu0 %v467
    %523 = vmatmul.bf16.gmra.mxu0 0
    %v524 = vpop.f32.mrf.mxu0
    %v525 = vadd.f32 0.0, %v524
    %v526 = vpop.f32.mrf.mxu0
    %527 = vdwg.mxu0
    %528 = vmatpush.bf16.msra.mxu0 %v489
    %529 = vmatpush.bf16.msra.mxu0 %v486
    %530 = vmatpush.bf16.msra.mxu0 %v483
    %531 = vmatpush.bf16.msra.mxu0 %v480
    %532 = vmatpush.bf16.msra.mxu0 %v477
    %533 = vmatpush.bf16.msra.mxu0 %v474
    %534 = vmatpush.bf16.msra.mxu0 %v471
    %535 = vmatpush.bf16.msra.mxu0 %v468
    %536 = vmatmul.bf16.gmra.mxu0 0
    %v537 = vpop.f32.mrf.mxu0
    %v538 = vadd.f32 0.0, %v537
    %v539 = vpop.f32.mrf.mxu0
    %540 = vdwg.mxu0
    %541 = vmatpush.bf16.msra.mxu0 %v490
    %542 = vmatpush.bf16.msra.mxu0 %v487
    %543 = vmatpush.bf16.msra.mxu0 %v484
    %544 = vmatpush.bf16.msra.mxu0 %v481
    %545 = vmatpush.bf16.msra.mxu0 %v478
    %546 = vmatpush.bf16.msra.mxu0 %v475
    %547 = vmatpush.bf16.msra.mxu0 %v472
    %548 = vmatpush.bf16.msra.mxu0 %v469
    %549 = vmatmul.bf16.gmra.mxu0 0
    %v550 = vpop.f32.mrf.mxu0
    %v551 = vadd.f32 0.0, %v550
    %v552 = vpop.f32.mrf.mxu0
    %553 = vdwg.mxu0
    %v554 = vadd.f32 %v384, %v525
    %v555 = vxor.u32 %v554, 2147483648
    %v556 = vmul.f32 %v555, 1.442695
    %v557 = vpow.pop %v556
    %v558 = vadd.f32 %v557, 1.0
    %v559 = vrcp.pop %v558
    %v560 = vmul.f32 %v558, %v559
    %v561 = vsub.f32 1.0, %v560
    %v562 = vmul.f32 %v559, %v561
    %v563 = vadd.f32 %v559, %v562
    %vm564 = vweird.f32 %v558
    %vm565 = vweird.f32 %v559
    %vm566 = vmor %vm564, %vm565
    %v567 = vsel %vm566, %v559, %v563
    %v568 = vand.u32 2147483647, %v558
    %vm569 = vcmp.eq.f32.partialorder %v568, 8.507059e+37
    %v570 = vand.u32 %v558, 2147483648
    %v571 = vor.u32 1.1754944e-38, %v570
    %v572 = vsel %vm569, %v571, %v567
    %v573 = vmul.f32 1.0, %v572
    %v574 = vadd.f32 %v385, %v538
    %v575 = vxor.u32 %v574, 2147483648
    %v576 = vmul.f32 %v575, 1.442695
    %v577 = vpow.pop %v576
    %v578 = vadd.f32 %v577, 1.0
    %v579 = vrcp.pop %v578
    %v580 = vmul.f32 %v578, %v579
    %v581 = vsub.f32 1.0, %v580
    %v582 = vmul.f32 %v579, %v581
    %v583 = vadd.f32 %v579, %v582
    %vm584 = vweird.f32 %v578
    %vm585 = vweird.f32 %v579
    %vm586 = vmor %vm584, %vm585
    %v587 = vsel %vm586, %v579, %v583
    %v588 = vand.u32 2147483647, %v578
    %vm589 = vcmp.eq.f32.partialorder %v588, 8.507059e+37
    %v590 = vand.u32 %v578, 2147483648
    %v591 = vor.u32 1.1754944e-38, %v590
    %v592 = vsel %vm589, %v591, %v587
    %v593 = vmul.f32 1.0, %v592
    %v595 = vperm.slane %v380, 0
    %v597 = vadd.f32 %v551, %v595
    %v598 = vmul.f32 %v573, %v597
    %v599 = vadd.f32 %v386, %v598
    %v600 = vtanh.pop %v599
    %v601 = vsub.f32 1.0, %v593
    %v602 = vmul.f32 %v601, %v600
    %v603 = vmul.f32 %v593, 0.0
    %v604 = vadd.f32 %v602, %v603
    %605 = vst [vmem:[%s5] sm:$0xff] %v604
    %s606 = smul.u32 1, 3
    %s607 = smul.addr %s606, 8
    %s608 = scalar_lea.vmem [#allocation2], %s607
    %v609 = vld [vmem:[%s608] sm:$0xff]
    %v610 = vld [vmem:[%s608 + $0x8] sm:$0xff]
    %v611 = vld [vmem:[%s608 + $0x10] sm:$0xff]
    %v612 = vpack.c.bf16 %v604, %v604
    %613 = vmatpush.bf16.msra.mxu0 %v488
    %614 = vmatpush.bf16.msra.mxu0 %v485
    %615 = vmatpush.bf16.msra.mxu0 %v482
    %616 = vmatpush.bf16.msra.mxu0 %v479
    %617 = vmatpush.bf16.msra.mxu0 %v476
    %618 = vmatpush.bf16.msra.mxu0 %v473
    %619 = vmatpush.bf16.msra.mxu0 %v470
    %620 = vmatpush.bf16.msra.mxu0 %v467
    %621 = vmatmul.bf16.gmra.mxu0 %v612
    %v622 = vpop.f32.mrf.mxu0
    %v623 = vadd.f32 0.0, %v622
    %v624 = vpop.f32.mrf.mxu0
    %625 = vdwg.mxu0
    %626 = vmatpush.bf16.msra.mxu0 %v489
    %627 = vmatpush.bf16.msra.mxu0 %v486
    %628 = vmatpush.bf16.msra.mxu0 %v483
    %629 = vmatpush.bf16.msra.mxu0 %v480
    %630 = vmatpush.bf16.msra.mxu0 %v477
    %631 = vmatpush.bf16.msra.mxu0 %v474
    %632 = vmatpush.bf16.msra.mxu0 %v471
    %633 = vmatpush.bf16.msra.mxu0 %v468
    %634 = vmatmul.bf16.gmra.mxu0 %v612
    %v635 = vpop.f32.mrf.mxu0
    %v636 = vadd.f32 0.0, %v635
    %v637 = vpop.f32.mrf.mxu0
    %638 = vdwg.mxu0
    %639 = vmatpush.bf16.msra.mxu0 %v490
    %640 = vmatpush.bf16.msra.mxu0 %v487
    %641 = vmatpush.bf16.msra.mxu0 %v484
    %642 = vmatpush.bf16.msra.mxu0 %v481
    %643 = vmatpush.bf16.msra.mxu0 %v478
    %644 = vmatpush.bf16.msra.mxu0 %v475
    %645 = vmatpush.bf16.msra.mxu0 %v472
    %646 = vmatpush.bf16.msra.mxu0 %v469
    %647 = vmatmul.bf16.gmra.mxu0 %v612
    %v648 = vpop.f32.mrf.mxu0
    %v649 = vadd.f32 0.0, %v648
    %v650 = vpop.f32.mrf.mxu0
    %651 = vdwg.mxu0
    %v652 = vadd.f32 %v609, %v623
    %v653 = vxor.u32 %v652, 2147483648
    %v654 = vmul.f32 %v653, 1.442695
    %v655 = vpow.pop %v654
    %v656 = vadd.f32 %v655, 1.0
    %v657 = vrcp.pop %v656
    %v658 = vmul.f32 %v656, %v657
    %v659 = vsub.f32 1.0, %v658
    %v660 = vmul.f32 %v657, %v659
    %v661 = vadd.f32 %v657, %v660
    %vm662 = vweird.f32 %v656
    %vm663 = vweird.f32 %v657
    %vm664 = vmor %vm662, %vm663
    %v665 = vsel %vm664, %v657, %v661
    %v666 = vand.u32 2147483647, %v656
    %vm667 = vcmp.eq.f32.partialorder %v666, 8.507059e+37
    %v668 = vand.u32 %v656, 2147483648
    %v669 = vor.u32 1.1754944e-38, %v668
    %v670 = vsel %vm667, %v669, %v665
    %v671 = vmul.f32 1.0, %v670
    %v672 = vadd.f32 %v610, %v636
    %v673 = vxor.u32 %v672, 2147483648
    %v674 = vmul.f32 %v673, 1.442695
    %v675 = vpow.pop %v674
    %v676 = vadd.f32 %v675, 1.0
    %v677 = vrcp.pop %v676
    %v678 = vmul.f32 %v676, %v677
    %v679 = vsub.f32 1.0, %v678
    %v680 = vmul.f32 %v677, %v679
    %v681 = vadd.f32 %v677, %v680
    %vm682 = vweird.f32 %v676
    %vm683 = vweird.f32 %v677
    %vm684 = vmor %vm682, %vm683
    %v685 = vsel %vm684, %v677, %v681
    %v686 = vand.u32 2147483647, %v676
    %vm687 = vcmp.eq.f32.partialorder %v686, 8.507059e+37
    %v688 = vand.u32 %v676, 2147483648
    %v689 = vor.u32 1.1754944e-38, %v688
    %v690 = vsel %vm687, %v689, %v685
    %v691 = vmul.f32 1.0, %v690
    %v692 = vadd.f32 %v649, %v595
    %v693 = vmul.f32 %v671, %v692
    %v694 = vadd.f32 %v611, %v693
    %v695 = vtanh.pop %v694
    %v696 = vsub.f32 1.0, %v691
    %v697 = vmul.f32 %v696, %v695
    %v698 = vmul.f32 %v691, %v604
    %v699 = vadd.f32 %v697, %v698
    %s700 = scalar_lea.vmem %s5, 8
    %701 = vst [vmem:[%s700] sm:$0xff] %v699
    %s702 = smul.u32 2, 3
    %s703 = smul.addr %s702, 8
    %s704 = scalar_lea.vmem [#allocation2], %s703
    %v705 = vld [vmem:[%s704] sm:$0xff]
    %v706 = vld [vmem:[%s704 + $0x8] sm:$0xff]
    %v707 = vld [vmem:[%s704 + $0x10] sm:$0xff]
    %v708 = vpack.c.bf16 %v699, %v699
    %709 = vmatpush.bf16.msra.mxu0 %v488
    %710 = vmatpush.bf16.msra.mxu0 %v485
    %711 = vmatpush.bf16.msra.mxu0 %v482
    %712 = vmatpush.bf16.msra.mxu0 %v479
    %713 = vmatpush.bf16.msra.mxu0 %v476
    %714 = vmatpush.bf16.msra.mxu0 %v473
    %715 = vmatpush.bf16.msra.mxu0 %v470
    %716 = vmatpush.bf16.msra.mxu0 %v467
    %717 = vmatmul.bf16.gmra.mxu0 %v708
    %v718 = vpop.f32.mrf.mxu0
    %v719 = vadd.f32 0.0, %v718
    %v720 = vpop.f32.mrf.mxu0
    %721 = vdwg.mxu0
    %722 = vmatpush.bf16.msra.mxu0 %v489
    %723 = vmatpush.bf16.msra.mxu0 %v486
    %724 = vmatpush.bf16.msra.mxu0 %v483
    %725 = vmatpush.bf16.msra.mxu0 %v480
    %726 = vmatpush.bf16.msra.mxu0 %v477
    %727 = vmatpush.bf16.msra.mxu0 %v474
    %728 = vmatpush.bf16.msra.mxu0 %v471
    %729 = vmatpush.bf16.msra.mxu0 %v468
    %730 = vmatmul.bf16.gmra.mxu0 %v708
    %v731 = vpop.f32.mrf.mxu0
    %v732 = vadd.f32 0.0, %v731
    %v733 = vpop.f32.mrf.mxu0
    %734 = vdwg.mxu0
    %735 = vmatpush.bf16.msra.mxu0 %v490
    %736 = vmatpush.bf16.msra.mxu0 %v487
    %737 = vmatpush.bf16.msra.mxu0 %v484
    %738 = vmatpush.bf16.msra.mxu0 %v481
    %739 = vmatpush.bf16.msra.mxu0 %v478
    %740 = vmatpush.bf16.msra.mxu0 %v475
    %741 = vmatpush.bf16.msra.mxu0 %v472
    %742 = vmatpush.bf16.msra.mxu0 %v469
    %743 = vmatmul.bf16.gmra.mxu0 %v708
    %v744 = vpop.f32.mrf.mxu0
    %v745 = vadd.f32 0.0, %v744
    %v746 = vpop.f32.mrf.mxu0
    %747 = vdwg.mxu0
    %v748 = vadd.f32 %v705, %v719
    %v749 = vxor.u32 %v748, 2147483648
    %v750 = vmul.f32 %v749, 1.442695
    %v751 = vpow.pop %v750
    %v752 = vadd.f32 %v751, 1.0
    %v753 = vrcp.pop %v752
    %v754 = vmul.f32 %v752, %v753
    %v755 = vsub.f32 1.0, %v754
    %v756 = vmul.f32 %v753, %v755
    %v757 = vadd.f32 %v753, %v756
    %vm758 = vweird.f32 %v752
    %vm759 = vweird.f32 %v753
    %vm760 = vmor %vm758, %vm759
    %v761 = vsel %vm760, %v753, %v757
    %v762 = vand.u32 2147483647, %v752
    %vm763 = vcmp.eq.f32.partialorder %v762, 8.507059e+37
    %v764 = vand.u32 %v752, 2147483648
    %v765 = vor.u32 1.1754944e-38, %v764
    %v766 = vsel %vm763, %v765, %v761
    %v767 = vmul.f32 1.0, %v766
    %v768 = vadd.f32 %v706, %v732
    %v769 = vxor.u32 %v768, 2147483648
    %v770 = vmul.f32 %v769, 1.442695
    %v771 = vpow.pop %v770
    %v772 = vadd.f32 %v771, 1.0
    %v773 = vrcp.pop %v772
    %v774 = vmul.f32 %v772, %v773
    %v775 = vsub.f32 1.0, %v774
    %v776 = vmul.f32 %v773, %v775
    %v777 = vadd.f32 %v773, %v776
    %vm778 = vweird.f32 %v772
    %vm779 = vweird.f32 %v773
    %vm780 = vmor %vm778, %vm779
    %v781 = vsel %vm780, %v773, %v777
    %v782 = vand.u32 2147483647, %v772
    %vm783 = vcmp.eq.f32.partialorder %v782, 8.507059e+37
    %v784 = vand.u32 %v772, 2147483648
    %v785 = vor.u32 1.1754944e-38, %v784
    %v786 = vsel %vm783, %v785, %v781
    %v787 = vmul.f32 1.0, %v786
    %v788 = vadd.f32 %v745, %v595
    %v789 = vmul.f32 %v767, %v788
    %v790 = vadd.f32 %v707, %v789
    %v791 = vtanh.pop %v790
    %v792 = vsub.f32 1.0, %v787
    %v793 = vmul.f32 %v792, %v791
    %v794 = vmul.f32 %v787, %v699
    %v795 = vadd.f32 %v793, %v794
    %s796 = scalar_lea.vmem %s5, 16
    %797 = vst [vmem:[%s796] sm:$0xff] %v795
    %s798 = smul.u32 3, 3
    %s799 = smul.addr %s798, 8
    %s800 = scalar_lea.vmem [#allocation2], %s799
    %v801 = vld [vmem:[%s800] sm:$0xff]
    %v802 = vld [vmem:[%s800 + $0x8] sm:$0xff]
    %v803 = vld [vmem:[%s800 + $0x10] sm:$0xff]
    %v804 = vpack.c.bf16 %v795, %v795
    %805 = vmatpush.bf16.msra.mxu0 %v488
    %806 = vmatpush.bf16.msra.mxu0 %v485
    %807 = vmatpush.bf16.msra.mxu0 %v482
    %808 = vmatpush.bf16.msra.mxu0 %v479
    %809 = vmatpush.bf16.msra.mxu0 %v476
    %810 = vmatpush.bf16.msra.mxu0 %v473
    %811 = vmatpush.bf16.msra.mxu0 %v470
    %812 = vmatpush.bf16.msra.mxu0 %v467
    %813 = vmatmul.bf16.gmra.mxu0 %v804
    %v814 = vpop.f32.mrf.mxu0
    %v815 = vadd.f32 0.0, %v814
    %v816 = vpop.f32.mrf.mxu0
    %817 = vdwg.mxu0
    %818 = vmatpush.bf16.msra.mxu0 %v489
    %819 = vmatpush.bf16.msra.mxu0 %v486
    %820 = vmatpush.bf16.msra.mxu0 %v483
    %821 = vmatpush.bf16.msra.mxu0 %v480
    %822 = vmatpush.bf16.msra.mxu0 %v477
    %823 = vmatpush.bf16.msra.mxu0 %v474
    %824 = vmatpush.bf16.msra.mxu0 %v471
    %825 = vmatpush.bf16.msra.mxu0 %v468
    %826 = vmatmul.bf16.gmra.mxu0 %v804
    %v827 = vpop.f32.mrf.mxu0
    %v828 = vadd.f32 0.0, %v827
    %v829 = vpop.f32.mrf.mxu0
    %830 = vdwg.mxu0
    %831 = vmatpush.bf16.msra.mxu0 %v490
    %832 = vmatpush.bf16.msra.mxu0 %v487
    %833 = vmatpush.bf16.msra.mxu0 %v484
    %834 = vmatpush.bf16.msra.mxu0 %v481
    %835 = vmatpush.bf16.msra.mxu0 %v478
    %836 = vmatpush.bf16.msra.mxu0 %v475
    %837 = vmatpush.bf16.msra.mxu0 %v472
    %838 = vmatpush.bf16.msra.mxu0 %v469
    %839 = vmatmul.bf16.gmra.mxu0 %v804
    %v840 = vpop.f32.mrf.mxu0
    %v841 = vadd.f32 0.0, %v840
    %v842 = vpop.f32.mrf.mxu0
    %843 = vdwg.mxu0
    %v844 = vadd.f32 %v801, %v815
    %v845 = vxor.u32 %v844, 2147483648
    %v846 = vmul.f32 %v845, 1.442695
    %v847 = vpow.pop %v846
    %v848 = vadd.f32 %v847, 1.0
    %v849 = vrcp.pop %v848
    %v850 = vmul.f32 %v848, %v849
    %v851 = vsub.f32 1.0, %v850
    %v852 = vmul.f32 %v849, %v851
    %v853 = vadd.f32 %v849, %v852
    %vm854 = vweird.f32 %v848
    %vm855 = vweird.f32 %v849
    %vm856 = vmor %vm854, %vm855
    %v857 = vsel %vm856, %v849, %v853
    %v858 = vand.u32 2147483647, %v848
    %vm859 = vcmp.eq.f32.partialorder %v858, 8.507059e+37
    %v860 = vand.u32 %v848, 2147483648
    %v861 = vor.u32 1.1754944e-38, %v860
    %v862 = vsel %vm859, %v861, %v857
    %v863 = vmul.f32 1.0, %v862
    %v864 = vadd.f32 %v802, %v828
    %v865 = vxor.u32 %v864, 2147483648
    %v866 = vmul.f32 %v865, 1.442695
    %v867 = vpow.pop %v866
    %v868 = vadd.f32 %v867, 1.0
    %v869 = vrcp.pop %v868
    %v870 = vmul.f32 %v868, %v869
    %v871 = vsub.f32 1.0, %v870
    %v872 = vmul.f32 %v869, %v871
    %v873 = vadd.f32 %v869, %v872
    %vm874 = vweird.f32 %v868
    %vm875 = vweird.f32 %v869
    %vm876 = vmor %vm874, %vm875
    %v877 = vsel %vm876, %v869, %v873
    %v878 = vand.u32 2147483647, %v868
    %vm879 = vcmp.eq.f32.partialorder %v878, 8.507059e+37
    %v880 = vand.u32 %v868, 2147483648
    %v881 = vor.u32 1.1754944e-38, %v880
    %v882 = vsel %vm879, %v881, %v877
    %v883 = vmul.f32 1.0, %v882
    %v884 = vadd.f32 %v841, %v595
    %v885 = vmul.f32 %v863, %v884
    %v886 = vadd.f32 %v803, %v885
    %v887 = vtanh.pop %v886
    %v888 = vsub.f32 1.0, %v883
    %v889 = vmul.f32 %v888, %v887
    %v890 = vmul.f32 %v883, %v795
    %v891 = vadd.f32 %v889, %v890
    %s892 = scalar_lea.vmem %s5, 24
    %893 = vst [vmem:[%s892] sm:$0xff] %v891
    %s894 = smul.u32 4, 3
    %s895 = smul.addr %s894, 8
    %s896 = scalar_lea.vmem [#allocation2], %s895
    %v897 = vld [vmem:[%s896] sm:$0xff]
    %v898 = vld [vmem:[%s896 + $0x8] sm:$0xff]
    %v899 = vld [vmem:[%s896 + $0x10] sm:$0xff]
    %v900 = vpack.c.bf16 %v891, %v891
    %901 = vmatpush.bf16.msra.mxu0 %v488
    %902 = vmatpush.bf16.msra.mxu0 %v485
    %903 = vmatpush.bf16.msra.mxu0 %v482
    %904 = vmatpush.bf16.msra.mxu0 %v479
    %905 = vmatpush.bf16.msra.mxu0 %v476
    %906 = vmatpush.bf16.msra.mxu0 %v473
    %907 = vmatpush.bf16.msra.mxu0 %v470
    %908 = vmatpush.bf16.msra.mxu0 %v467
    %909 = vmatmul.bf16.gmra.mxu0 %v900
    %v910 = vpop.f32.mrf.mxu0
    %v911 = vadd.f32 0.0, %v910
    %v912 = vpop.f32.mrf.mxu0
    %913 = vdwg.mxu0
    %914 = vmatpush.bf16.msra.mxu0 %v489
    %915 = vmatpush.bf16.msra.mxu0 %v486
    %916 = vmatpush.bf16.msra.mxu0 %v483
    %917 = vmatpush.bf16.msra.mxu0 %v480
    %918 = vmatpush.bf16.msra.mxu0 %v477
    %919 = vmatpush.bf16.msra.mxu0 %v474
    %920 = vmatpush.bf16.msra.mxu0 %v471
    %921 = vmatpush.bf16.msra.mxu0 %v468
    %922 = vmatmul.bf16.gmra.mxu0 %v900
    %v923 = vpop.f32.mrf.mxu0
    %v924 = vadd.f32 0.0, %v923
    %v925 = vpop.f32.mrf.mxu0
    %926 = vdwg.mxu0
    %927 = vmatpush.bf16.msra.mxu0 %v490
    %928 = vmatpush.bf16.msra.mxu0 %v487
    %929 = vmatpush.bf16.msra.mxu0 %v484
    %930 = vmatpush.bf16.msra.mxu0 %v481
    %931 = vmatpush.bf16.msra.mxu0 %v478
    %932 = vmatpush.bf16.msra.mxu0 %v475
    %933 = vmatpush.bf16.msra.mxu0 %v472
    %934 = vmatpush.bf16.msra.mxu0 %v469
    %935 = vmatmul.bf16.gmra.mxu0 %v900
    %v936 = vpop.f32.mrf.mxu0
    %v937 = vadd.f32 0.0, %v936
    %v938 = vpop.f32.mrf.mxu0
    %939 = vdwg.mxu0
    %v940 = vadd.f32 %v897, %v911
    %v941 = vxor.u32 %v940, 2147483648
    %v942 = vmul.f32 %v941, 1.442695
    %v943 = vpow.pop %v942
    %v944 = vadd.f32 %v943, 1.0
    %v945 = vrcp.pop %v944
    %v946 = vmul.f32 %v944, %v945
    %v947 = vsub.f32 1.0, %v946
    %v948 = vmul.f32 %v945, %v947
    %v949 = vadd.f32 %v945, %v948
    %vm950 = vweird.f32 %v944
    %vm951 = vweird.f32 %v945
    %vm952 = vmor %vm950, %vm951
    %v953 = vsel %vm952, %v945, %v949
    %v954 = vand.u32 2147483647, %v944
    %vm955 = vcmp.eq.f32.partialorder %v954, 8.507059e+37
    %v956 = vand.u32 %v944, 2147483648
    %v957 = vor.u32 1.1754944e-38, %v956
    %v958 = vsel %vm955, %v957, %v953
    %v959 = vmul.f32 1.0, %v958
    %v960 = vadd.f32 %v898, %v924
    %v961 = vxor.u32 %v960, 2147483648
    %v962 = vmul.f32 %v961, 1.442695
    %v963 = vpow.pop %v962
    %v964 = vadd.f32 %v963, 1.0
    %v965 = vrcp.pop %v964
    %v966 = vmul.f32 %v964, %v965
    %v967 = vsub.f32 1.0, %v966
    %v968 = vmul.f32 %v965, %v967
    %v969 = vadd.f32 %v965, %v968
    %vm970 = vweird.f32 %v964
    %vm971 = vweird.f32 %v965
    %vm972 = vmor %vm970, %vm971
    %v973 = vsel %vm972, %v965, %v969
    %v974 = vand.u32 2147483647, %v964
    %vm975 = vcmp.eq.f32.partialorder %v974, 8.507059e+37
    %v976 = vand.u32 %v964, 2147483648
    %v977 = vor.u32 1.1754944e-38, %v976
    %v978 = vsel %vm975, %v977, %v973
    %v979 = vmul.f32 1.0, %v978
    %v980 = vadd.f32 %v937, %v595
    %v981 = vmul.f32 %v959, %v980
    %v982 = vadd.f32 %v899, %v981
    %v983 = vtanh.pop %v982
    %v984 = vsub.f32 1.0, %v979
    %v985 = vmul.f32 %v984, %v983
    %v986 = vmul.f32 %v979, %v891
    %v987 = vadd.f32 %v985, %v986
    %s988 = scalar_lea.vmem %s5, 32
    %989 = vst [vmem:[%s988] sm:$0xff] %v987
    %s990 = smul.u32 5, 3
    %s991 = smul.addr %s990, 8
    %s992 = scalar_lea.vmem [#allocation2], %s991
    %v993 = vld [vmem:[%s992] sm:$0xff]
    %v994 = vld [vmem:[%s992 + $0x8] sm:$0xff]
    %v995 = vld [vmem:[%s992 + $0x10] sm:$0xff]
    %v996 = vpack.c.bf16 %v987, %v987
    %997 = vmatpush.bf16.msra.mxu0 %v488
    %998 = vmatpush.bf16.msra.mxu0 %v485
    %999 = vmatpush.bf16.msra.mxu0 %v482
    %1000 = vmatpush.bf16.msra.mxu0 %v479
    %1001 = vmatpush.bf16.msra.mxu0 %v476
    %1002 = vmatpush.bf16.msra.mxu0 %v473
    %1003 = vmatpush.bf16.msra.mxu0 %v470
    %1004 = vmatpush.bf16.msra.mxu0 %v467
    %1005 = vmatmul.bf16.gmra.mxu0 %v996
    %v1006 = vpop.f32.mrf.mxu0
    %v1007 = vadd.f32 0.0, %v1006
    %v1008 = vpop.f32.mrf.mxu0
    %1009 = vdwg.mxu0
    %1010 = vmatpush.bf16.msra.mxu0 %v489
    %1011 = vmatpush.bf16.msra.mxu0 %v486
    %1012 = vmatpush.bf16.msra.mxu0 %v483
    %1013 = vmatpush.bf16.msra.mxu0 %v480
    %1014 = vmatpush.bf16.msra.mxu0 %v477
    %1015 = vmatpush.bf16.msra.mxu0 %v474
    %1016 = vmatpush.bf16.msra.mxu0 %v471
    %1017 = vmatpush.bf16.msra.mxu0 %v468
    %1018 = vmatmul.bf16.gmra.mxu0 %v996
    %v1019 = vpop.f32.mrf.mxu0
    %v1020 = vadd.f32 0.0, %v1019
    %v1021 = vpop.f32.mrf.mxu0
    %1022 = vdwg.mxu0
    %1023 = vmatpush.bf16.msra.mxu0 %v490
    %1024 = vmatpush.bf16.msra.mxu0 %v487
    %1025 = vmatpush.bf16.msra.mxu0 %v484
    %1026 = vmatpush.bf16.msra.mxu0 %v481
    %1027 = vmatpush.bf16.msra.mxu0 %v478
    %1028 = vmatpush.bf16.msra.mxu0 %v475
    %1029 = vmatpush.bf16.msra.mxu0 %v472
    %1030 = vmatpush.bf16.msra.mxu0 %v469
    %1031 = vmatmul.bf16.gmra.mxu0 %v996
    %v1032 = vpop.f32.mrf.mxu0
    %v1033 = vadd.f32 0.0, %v1032
    %v1034 = vpop.f32.mrf.mxu0
    %1035 = vdwg.mxu0
    %v1036 = vadd.f32 %v993, %v1007
    %v1037 = vxor.u32 %v1036, 2147483648
    %v1038 = vmul.f32 %v1037, 1.442695
    %v1039 = vpow.pop %v1038
    %v1040 = vadd.f32 %v1039, 1.0
    %v1041 = vrcp.pop %v1040
    %v1042 = vmul.f32 %v1040, %v1041
    %v1043 = vsub.f32 1.0, %v1042
    %v1044 = vmul.f32 %v1041, %v1043
    %v1045 = vadd.f32 %v1041, %v1044
    %vm1046 = vweird.f32 %v1040
    %vm1047 = vweird.f32 %v1041
    %vm1048 = vmor %vm1046, %vm1047
    %v1049 = vsel %vm1048, %v1041, %v1045
    %v1050 = vand.u32 2147483647, %v1040
    %vm1051 = vcmp.eq.f32.partialorder %v1050, 8.507059e+37
    %v1052 = vand.u32 %v1040, 2147483648
    %v1053 = vor.u32 1.1754944e-38, %v1052
    %v1054 = vsel %vm1051, %v1053, %v1049
    %v1055 = vmul.f32 1.0, %v1054
    %v1056 = vadd.f32 %v994, %v1020
    %v1057 = vxor.u32 %v1056, 2147483648
    %v1058 = vmul.f32 %v1057, 1.442695
    %v1059 = vpow.pop %v1058
    %v1060 = vadd.f32 %v1059, 1.0
    %v1061 = vrcp.pop %v1060
    %v1062 = vmul.f32 %v1060, %v1061
    %v1063 = vsub.f32 1.0, %v1062
    %v1064 = vmul.f32 %v1061, %v1063
    %v1065 = vadd.f32 %v1061, %v1064
    %vm1066 = vweird.f32 %v1060
    %vm1067 = vweird.f32 %v1061
    %vm1068 = vmor %vm1066, %vm1067
    %v1069 = vsel %vm1068, %v1061, %v1065
    %v1070 = vand.u32 2147483647, %v1060
    %vm1071 = vcmp.eq.f32.partialorder %v1070, 8.507059e+37
    %v1072 = vand.u32 %v1060, 2147483648
    %v1073 = vor.u32 1.1754944e-38, %v1072
    %v1074 = vsel %vm1071, %v1073, %v1069
    %v1075 = vmul.f32 1.0, %v1074
    %v1076 = vadd.f32 %v1033, %v595
    %v1077 = vmul.f32 %v1055, %v1076
    %v1078 = vadd.f32 %v995, %v1077
    %v1079 = vtanh.pop %v1078
    %v1080 = vsub.f32 1.0, %v1075
    %v1081 = vmul.f32 %v1080, %v1079
    %v1082 = vmul.f32 %v1075, %v987
    %v1083 = vadd.f32 %v1081, %v1082
    %s1084 = scalar_lea.vmem %s5, 40
    %1085 = vst [vmem:[%s1084] sm:$0xff] %v1083
    %s1086 = smul.u32 6, 3
    %s1087 = smul.addr %s1086, 8
    %s1088 = scalar_lea.vmem [#allocation2], %s1087
    %v1089 = vld [vmem:[%s1088] sm:$0xff]
    %v1090 = vld [vmem:[%s1088 + $0x8] sm:$0xff]
    %v1091 = vld [vmem:[%s1088 + $0x10] sm:$0xff]
    %v1092 = vpack.c.bf16 %v1083, %v1083
    %1093 = vmatpush.bf16.msra.mxu0 %v488
    %1094 = vmatpush.bf16.msra.mxu0 %v485
    %1095 = vmatpush.bf16.msra.mxu0 %v482
    %1096 = vmatpush.bf16.msra.mxu0 %v479
    %1097 = vmatpush.bf16.msra.mxu0 %v476
    %1098 = vmatpush.bf16.msra.mxu0 %v473
    %1099 = vmatpush.bf16.msra.mxu0 %v470
    %1100 = vmatpush.bf16.msra.mxu0 %v467
    %1101 = vmatmul.bf16.gmra.mxu0 %v1092
    %v1102 = vpop.f32.mrf.mxu0
    %v1103 = vadd.f32 0.0, %v1102
    %v1104 = vpop.f32.mrf.mxu0
    %1105 = vdwg.mxu0
    %1106 = vmatpush.bf16.msra.mxu0 %v489
    %1107 = vmatpush.bf16.msra.mxu0 %v486
    %1108 = vmatpush.bf16.msra.mxu0 %v483
    %1109 = vmatpush.bf16.msra.mxu0 %v480
    %1110 = vmatpush.bf16.msra.mxu0 %v477
    %1111 = vmatpush.bf16.msra.mxu0 %v474
    %1112 = vmatpush.bf16.msra.mxu0 %v471
    %1113 = vmatpush.bf16.msra.mxu0 %v468
    %1114 = vmatmul.bf16.gmra.mxu0 %v1092
    %v1115 = vpop.f32.mrf.mxu0
    %v1116 = vadd.f32 0.0, %v1115
    %v1117 = vpop.f32.mrf.mxu0
    %1118 = vdwg.mxu0
    %1119 = vmatpush.bf16.msra.mxu0 %v490
    %1120 = vmatpush.bf16.msra.mxu0 %v487
    %1121 = vmatpush.bf16.msra.mxu0 %v484
    %1122 = vmatpush.bf16.msra.mxu0 %v481
    %1123 = vmatpush.bf16.msra.mxu0 %v478
    %1124 = vmatpush.bf16.msra.mxu0 %v475
    %1125 = vmatpush.bf16.msra.mxu0 %v472
    %1126 = vmatpush.bf16.msra.mxu0 %v469
    %1127 = vmatmul.bf16.gmra.mxu0 %v1092
    %v1128 = vpop.f32.mrf.mxu0
    %v1129 = vadd.f32 0.0, %v1128
    %v1130 = vpop.f32.mrf.mxu0
    %1131 = vdwg.mxu0
    %v1132 = vadd.f32 %v1089, %v1103
    %v1133 = vxor.u32 %v1132, 2147483648
    %v1134 = vmul.f32 %v1133, 1.442695
    %v1135 = vpow.pop %v1134
    %v1136 = vadd.f32 %v1135, 1.0
    %v1137 = vrcp.pop %v1136
    %v1138 = vmul.f32 %v1136, %v1137
    %v1139 = vsub.f32 1.0, %v1138
    %v1140 = vmul.f32 %v1137, %v1139
    %v1141 = vadd.f32 %v1137, %v1140
    %vm1142 = vweird.f32 %v1136
    %vm1143 = vweird.f32 %v1137
    %vm1144 = vmor %vm1142, %vm1143
    %v1145 = vsel %vm1144, %v1137, %v1141
    %v1146 = vand.u32 2147483647, %v1136
    %vm1147 = vcmp.eq.f32.partialorder %v1146, 8.507059e+37
    %v1148 = vand.u32 %v1136, 2147483648
    %v1149 = vor.u32 1.1754944e-38, %v1148
    %v1150 = vsel %vm1147, %v1149, %v1145
    %v1151 = vmul.f32 1.0, %v1150
    %v1152 = vadd.f32 %v1090, %v1116
    %v1153 = vxor.u32 %v1152, 2147483648
    %v1154 = vmul.f32 %v1153, 1.442695
    %v1155 = vpow.pop %v1154
    %v1156 = vadd.f32 %v1155, 1.0
    %v1157 = vrcp.pop %v1156
    %v1158 = vmul.f32 %v1156, %v1157
    %v1159 = vsub.f32 1.0, %v1158
    %v1160 = vmul.f32 %v1157, %v1159
    %v1161 = vadd.f32 %v1157, %v1160
    %vm1162 = vweird.f32 %v1156
    %vm1163 = vweird.f32 %v1157
    %vm1164 = vmor %vm1162, %vm1163
    %v1165 = vsel %vm1164, %v1157, %v1161
    %v1166 = vand.u32 2147483647, %v1156
    %vm1167 = vcmp.eq.f32.partialorder %v1166, 8.507059e+37
    %v1168 = vand.u32 %v1156, 2147483648
    %v1169 = vor.u32 1.1754944e-38, %v1168
    %v1170 = vsel %vm1167, %v1169, %v1165
    %v1171 = vmul.f32 1.0, %v1170
    %v1172 = vadd.f32 %v1129, %v595
    %v1173 = vmul.f32 %v1151, %v1172
    %v1174 = vadd.f32 %v1091, %v1173
    %v1175 = vtanh.pop %v1174
    %v1176 = vsub.f32 1.0, %v1171
    %v1177 = vmul.f32 %v1176, %v1175
    %v1178 = vmul.f32 %v1171, %v1083
    %v1179 = vadd.f32 %v1177, %v1178
    %s1180 = scalar_lea.vmem %s5, 48
    %1181 = vst [vmem:[%s1180] sm:$0xff] %v1179
    %s1182 = smul.u32 7, 3
    %s1183 = smul.addr %s1182, 8
    %s1184 = scalar_lea.vmem [#allocation2], %s1183
    %v1185 = vld [vmem:[%s1184] sm:$0xff]
    %v1186 = vld [vmem:[%s1184 + $0x8] sm:$0xff]
    %v1187 = vld [vmem:[%s1184 + $0x10] sm:$0xff]
    %v1188 = vpack.c.bf16 %v1179, %v1179
    %1189 = vmatpush.bf16.msra.mxu0 %v488
    %1190 = vmatpush.bf16.msra.mxu0 %v485
    %1191 = vmatpush.bf16.msra.mxu0 %v482
    %1192 = vmatpush.bf16.msra.mxu0 %v479
    %1193 = vmatpush.bf16.msra.mxu0 %v476
    %1194 = vmatpush.bf16.msra.mxu0 %v473
    %1195 = vmatpush.bf16.msra.mxu0 %v470
    %1196 = vmatpush.bf16.msra.mxu0 %v467
    %1197 = vmatmul.bf16.gmra.mxu0 %v1188
    %v1198 = vpop.f32.mrf.mxu0
    %v1199 = vadd.f32 0.0, %v1198
    %v1200 = vpop.f32.mrf.mxu0
    %1201 = vdwg.mxu0
    %1202 = vmatpush.bf16.msra.mxu0 %v489
    %1203 = vmatpush.bf16.msra.mxu0 %v486
    %1204 = vmatpush.bf16.msra.mxu0 %v483
    %1205 = vmatpush.bf16.msra.mxu0 %v480
    %1206 = vmatpush.bf16.msra.mxu0 %v477
    %1207 = vmatpush.bf16.msra.mxu0 %v474
    %1208 = vmatpush.bf16.msra.mxu0 %v471
    %1209 = vmatpush.bf16.msra.mxu0 %v468
    %1210 = vmatmul.bf16.gmra.mxu0 %v1188
    %v1211 = vpop.f32.mrf.mxu0
    %v1212 = vadd.f32 0.0, %v1211
    %v1213 = vpop.f32.mrf.mxu0
    %1214 = vdwg.mxu0
    %1215 = vmatpush.bf16.msra.mxu0 %v490
    %1216 = vmatpush.bf16.msra.mxu0 %v487
    %1217 = vmatpush.bf16.msra.mxu0 %v484
    %1218 = vmatpush.bf16.msra.mxu0 %v481
    %1219 = vmatpush.bf16.msra.mxu0 %v478
    %1220 = vmatpush.bf16.msra.mxu0 %v475
    %1221 = vmatpush.bf16.msra.mxu0 %v472
    %1222 = vmatpush.bf16.msra.mxu0 %v469
    %1223 = vmatmul.bf16.gmra.mxu0 %v1188
    %v1224 = vpop.f32.mrf.mxu0
    %v1225 = vadd.f32 0.0, %v1224
    %v1226 = vpop.f32.mrf.mxu0
    %1227 = vdwg.mxu0
    %v1228 = vadd.f32 %v1185, %v1199
    %v1229 = vxor.u32 %v1228, 2147483648
    %v1230 = vmul.f32 %v1229, 1.442695
    %v1231 = vpow.pop %v1230
    %v1232 = vadd.f32 %v1231, 1.0
    %v1233 = vrcp.pop %v1232
    %v1234 = vmul.f32 %v1232, %v1233
    %v1235 = vsub.f32 1.0, %v1234
    %v1236 = vmul.f32 %v1233, %v1235
    %v1237 = vadd.f32 %v1233, %v1236
    %vm1238 = vweird.f32 %v1232
    %vm1239 = vweird.f32 %v1233
    %vm1240 = vmor %vm1238, %vm1239
    %v1241 = vsel %vm1240, %v1233, %v1237
    %v1242 = vand.u32 2147483647, %v1232
    %vm1243 = vcmp.eq.f32.partialorder %v1242, 8.507059e+37
    %v1244 = vand.u32 %v1232, 2147483648
    %v1245 = vor.u32 1.1754944e-38, %v1244
    %v1246 = vsel %vm1243, %v1245, %v1241
    %v1247 = vmul.f32 1.0, %v1246
    %v1248 = vadd.f32 %v1186, %v1212
    %v1249 = vxor.u32 %v1248, 2147483648
    %v1250 = vmul.f32 %v1249, 1.442695
    %v1251 = vpow.pop %v1250
    %v1252 = vadd.f32 %v1251, 1.0
    %v1253 = vrcp.pop %v1252
    %v1254 = vmul.f32 %v1252, %v1253
    %v1255 = vsub.f32 1.0, %v1254
    %v1256 = vmul.f32 %v1253, %v1255
    %v1257 = vadd.f32 %v1253, %v1256
    %vm1258 = vweird.f32 %v1252
    %vm1259 = vweird.f32 %v1253
    %vm1260 = vmor %vm1258, %vm1259
    %v1261 = vsel %vm1260, %v1253, %v1257
    %v1262 = vand.u32 2147483647, %v1252
    %vm1263 = vcmp.eq.f32.partialorder %v1262, 8.507059e+37
    %v1264 = vand.u32 %v1252, 2147483648
    %v1265 = vor.u32 1.1754944e-38, %v1264
    %v1266 = vsel %vm1263, %v1265, %v1261
    %v1267 = vmul.f32 1.0, %v1266
    %v1268 = vadd.f32 %v1225, %v595
    %v1269 = vmul.f32 %v1247, %v1268
    %v1270 = vadd.f32 %v1187, %v1269
    %v1271 = vtanh.pop %v1270
    %v1272 = vsub.f32 1.0, %v1267
    %v1273 = vmul.f32 %v1272, %v1271
    %v1274 = vmul.f32 %v1267, %v1179
    %v1275 = vadd.f32 %v1273, %v1274
    %s1276 = scalar_lea.vmem %s5, 56
    %1277 = vst [vmem:[%s1276] sm:$0xff] %v1275
    // Predicated region
    $region26: #{seq2seq_encoder_forward.3} parent=1 // pred_check
      _
    $region27: #{seq2seq_encoder_forward.3} parent=1 // pred_check_branch
      %1279 = sbr.rel (0) target = $region29
    $region28: #{seq2seq_encoder_forward.3} parent=1 // pred_region
      _
    $region29: #{seq2seq_encoder_forward.3} parent=1 // pred_fallthru
      _
    // Predicated region
    $region30: #{seq2seq_encoder_forward.3} parent=1 // pred_check
      _
    $region31: #{seq2seq_encoder_forward.3} parent=1 // pred_check_branch
      %1281 = sbr.rel (0) target = $region33
    $region32: #{seq2seq_encoder_forward.3} parent=1 // pred_region
      _
    $region33: #{seq2seq_encoder_forward.3} parent=1 // pred_fallthru
      _
    %1282 = vsyncpa [#allocation4], 1

</llo_original>
